<compile_context>
chip_gen: v6e
topology: v6e:2x2x1
jax: 0.10.0
libtpu: 0.0.40
codegen_flags: <defaults>
</compile_context>

<pallas_src>
import functools

import jax
import jax.numpy as jnp
from jax.experimental import pallas as pl
from jax.experimental.pallas import tpu as pltpu

# Scoped-VMEM budget: safe on v5e/v6e (128 MiB phys) and v7x (64 MiB phys);
# every block here is KBs, far below this.
_VMEM_LIMIT_BYTES = 32 * 1024 * 1024


def _vmem_spec():
    return pl.BlockSpec(memory_space=pltpu.MemorySpace.VMEM)


def _conv_grid_steps(n_frames):
    """2 grid steps on dual-TensorCore chips (v7x); 1 elsewhere (v5e/v6e)."""
    try:
        kind = jax.devices()[0].device_kind.lower()
    except Exception:
        return 1
    if "7" in kind and n_frames % 2 == 0:
        return 2
    return 1


# ----------------------------------------------------------------------------
# Kernels
# ----------------------------------------------------------------------------
def _conv_relu_maxpool_kernel(x_ref, w_ref, b_ref, o_ref, *, hw_out, f_tile):
    """Conv (as im2col matmul) + bias + ReLU + fused MaxPool2d(2).

    x_ref: (f_tile * 4 * hw_out, 9*Cin) im2col rows; per frame the rows are
    grouped as 4 contiguous pooling-quadrant blocks of hw_out rows each.
    o_ref: (f_tile * hw_out, Cout) pooled activations, rows ordered (n,h',w').
    """
    y = jnp.dot(x_ref[...], w_ref[...], preferred_element_type=jnp.float32)
    y = jnp.maximum(y + b_ref[...], 0.0)
    for f in range(f_tile):                       # static unrolled frame loop
        base = f * 4 * hw_out
        p0 = y[base:base + hw_out]
        p1 = y[base + hw_out:base + 2 * hw_out]
        p2 = y[base + 2 * hw_out:base + 3 * hw_out]
        p3 = y[base + 3 * hw_out:base + 4 * hw_out]
        o_ref[f * hw_out:(f + 1) * hw_out, :] = jnp.maximum(
            jnp.maximum(p0, p1), jnp.maximum(p2, p3))


def _conv_relu_avgpool_kernel(x_ref, w_ref, b_ref, o_ref, *, hw):
    """Conv (im2col matmul) + bias + ReLU + AdaptiveAvgPool2d((1,1))."""
    y = jnp.dot(x_ref[...], w_ref[...], preferred_element_type=jnp.float32)
    y = jnp.maximum(y + b_ref[...], 0.0)          # (f_tile*hw, Cout)
    f_tile = y.shape[0] // hw
    o_ref[...] = jnp.mean(y.reshape(f_tile, hw, y.shape[1]), axis=1)


def _make_lstm_stack_kernel(num_layers, hidden, num_frames):
    """Whole-sequence stacked LSTM + folded classifier in ONE invocation.

    args = emb_ref, [wxh, b] * num_layers, w_eff, b_eff, out_ref
    emb_ref: (T, B_pad, I); h/c are carried in vregs across a fully unrolled
    static time loop, so there is zero per-step launch/DMA overhead.
    """
    def kernel(*args):
        emb_ref = args[0]
        layer_refs = []
        idx = 1
        for _ in range(num_layers):
            layer_refs.append((args[idx], args[idx + 1]))
            idx += 2
        w_eff_ref, b_eff_ref = args[idx], args[idx + 1]
        out_ref = args[idx + 2]

        b_pad = out_ref.shape[0]
        hs = [jnp.zeros((b_pad, hidden), jnp.float32) for _ in range(num_layers)]
        cs = [jnp.zeros((b_pad, hidden), jnp.float32) for _ in range(num_layers)]

        for t in range(num_frames):               # fully unrolled (T static)
            x = emb_ref[t]                        # (B_pad, I)
            for j in range(num_layers):
                wxh_ref, bias_ref = layer_refs[j]
                # Single fused gate matmul on cat([x, h]) -> (B_pad, 4H=128).
                xh = jnp.concatenate([x, hs[j]], axis=1)
                gates = (jnp.dot(xh, wxh_ref[...],
                                 preferred_element_type=jnp.float32)
                         + bias_ref[...])
                # One full-vreg sigmoid, slice f/i/o; tanh only on the g slice.
                sig = jax.nn.sigmoid(gates)
                f_t = sig[:, 0 * hidden:1 * hidden]
                i_t = sig[:, 1 * hidden:2 * hidden]
                g_t = jnp.tanh(gates[:, 2 * hidden:3 * hidden])
                o_t = sig[:, 3 * hidden:4 * hidden]
                c_next = f_t * cs[j] + i_t * g_t
                h_next = o_t * jnp.tanh(c_next)
                hs[j] = h_next
                cs[j] = c_next
                x = h_next

        # Folded classifier: applied exactly once, on the last hidden state.
        y = (jnp.dot(hs[-1], w_eff_ref[...],
                     preferred_element_type=jnp.float32) + b_eff_ref[...])
        out_ref[...] = y

    return kernel


# ----------------------------------------------------------------------------
# Pallas wrappers
# ----------------------------------------------------------------------------
def _im2col_3x3(x_nhwc):
    # TODO(synk): build patches inside the conv kernel from a padded NHWC
    #             block to avoid this 9x HBM expansion.
    n, h, w, c = x_nhwc.shape
    xp = jnp.pad(x_nhwc, ((0, 0), (1, 1), (1, 1), (0, 0)))
    # (kh, kw, ci) ordering matches w.reshape(9*Cin, Cout).
    return jnp.concatenate(
        [xp[:, kh:kh + h, kw:kw + w, :] for kh in range(3) for kw in range(3)],
        axis=-1)                                            # (n, h, w, 9c)


def _im2col_3x3_pool_grouped(x_nhwc):
    """im2col rows reordered so each frame is 4 contiguous pooling quadrants."""
    n, h, w, c = x_nhwc.shape
    k = 9 * c
    p = _im2col_3x3(x_nhwc)                                 # (n, h, w, 9c)
    p = p.reshape(n, h // 2, 2, w // 2, 2, k)               # (n,h',ph,w',pw,k)
    p = jnp.transpose(p, (0, 2, 4, 1, 3, 5))                # (n,ph,pw,h',w',k)
    return p.reshape(n * 4 * (h // 2) * (w // 2), k)


def conv2d_3x3_relu_maxpool(x_nhwc, w, b, grid_steps):
    """Conv2d(k=3,s=1,p=1) + ReLU + MaxPool2d(2), pool fused in the kernel."""
    n, h, wd, cin = x_nhwc.shape
    cout = w.shape[-1]
    h_o, w_o = h // 2, wd // 2
    hw_out = h_o * w_o
    patches = _im2col_3x3_pool_grouped(x_nhwc)              # (n*4*hw_out, 9cin)
    if grid_steps < 1 or n % grid_steps != 0:
        grid_steps = 1
    f_tile = n // grid_steps
    out = pl.pallas_call(
        functools.partial(_conv_relu_maxpool_kernel, hw_out=hw_out,
                          f_tile=f_tile),
        out_shape=jax.ShapeDtypeStruct((n * hw_out, cout), jnp.float32),
        grid=(grid_steps,),
        in_specs=[pl.BlockSpec((f_tile * 4 * hw_out, 9 * cin),
                               lambda i: (i, 0)),
                  pl.BlockSpec((9 * cin, cout), lambda i: (0, 0)),
                  pl.BlockSpec((1, cout), lambda i: (0, 0))],
        out_specs=pl.BlockSpec((f_tile * hw_out, cout), lambda i: (i, 0)),
        compiler_params=pltpu.CompilerParams(
            dimension_semantics=("parallel",),
            vmem_limit_bytes=_VMEM_LIMIT_BYTES),
    )(patches, w.reshape(9 * cin, cout), b.reshape(1, -1))
    return out.reshape(n, h_o, w_o, cout)


def conv2d_3x3_relu_avgpool(x_nhwc, w, b):
    """Conv2d(k=3,s=1,p=1) + ReLU + AdaptiveAvgPool2d((1,1)), fused epilogue."""
    n, h, wd, cin = x_nhwc.shape
    cout = w.shape[-1]
    hw = h * wd
    patches = _im2col_3x3(x_nhwc).reshape(n * hw, 9 * cin)
    return pl.pallas_call(
        functools.partial(_conv_relu_avgpool_kernel, hw=hw),
        out_shape=jax.ShapeDtypeStruct((n, cout), jnp.float32),
        grid=(1,),
        in_specs=[pl.BlockSpec((n * hw, 9 * cin), lambda i: (0, 0)),
                  pl.BlockSpec((9 * cin, cout), lambda i: (0, 0)),
                  pl.BlockSpec((1, cout), lambda i: (0, 0))],
        out_specs=pl.BlockSpec((n, cout), lambda i: (0, 0)),
        compiler_params=pltpu.CompilerParams(
            vmem_limit_bytes=_VMEM_LIMIT_BYTES),
    )(patches, w.reshape(9 * cin, cout), b.reshape(1, -1))


def lstm_stack_classify(emb_tbi, lstm_params, cls_params, hidden_dim):
    """One pallas_call for the whole LSTM recurrence + folded classifier.

    emb_tbi: (T, B_pad, I) float32 with B_pad a multiple of 8.
    Returns (B_pad, num_classes) logits of the last time step.
    """
    num_frames, b_pad, _ = emb_tbi.shape
    num_layers = len(lstm_params)

    inputs = [emb_tbi]
    for p in lstm_params:
        wxh = jnp.concatenate([p["wx"], p["wh"]], axis=0)   # (in+H, 4H)
        inputs += [wxh, p["b"].reshape(1, -1)]

    cp = cls_params
    with jax.default_matmul_precision("float32"):
        w_eff = cp["w1"] @ cp["w2"] @ cp["w3"]               # (H, 6)
        b_eff = (cp["b1"] @ cp["w2"] + cp["b2"]) @ cp["w3"] + cp["b3"]
    inputs += [w_eff, b_eff.reshape(1, -1)]

    num_classes = cp["w3"].shape[1]
    kernel = _make_lstm_stack_kernel(num_layers, hidden_dim, num_frames)
    return pl.pallas_call(
        kernel,
        out_shape=jax.ShapeDtypeStruct((b_pad, num_classes), jnp.float32),
        in_specs=[_vmem_spec() for _ in inputs],
        out_specs=_vmem_spec(),
        compiler_params=pltpu.CompilerParams(
            vmem_limit_bytes=_VMEM_LIMIT_BYTES),
    )(*inputs)


# ----------------------------------------------------------------------------
# Model: parameters + forward
# ----------------------------------------------------------------------------
def init_params(key, input_dim, hidden_dim, num_layers):
    keys = iter(jax.random.split(key, 64))

    def rnd(shape, scale=0.1):
        return jax.random.normal(next(keys), shape, jnp.float32) * scale

    params = {
        "hidden_dim": hidden_dim,
        "conv1_w": rnd((3, 3, 1, 16)),  "conv1_b": rnd((16,)),
        "conv2_w": rnd((3, 3, 16, 32)), "conv2_b": rnd((32,)),
        "conv3_w": rnd((3, 3, 32, input_dim)), "conv3_b": rnd((input_dim,)),
        "lstm": [],
        "cls": {
            "w1": rnd((hidden_dim, 30)), "b1": rnd((30,)),
            "w2": rnd((30, 15)),         "b2": rnd((15,)),
            "w3": rnd((15, 6)),          "b3": rnd((6,)),
        },
    }
    for layer in range(num_layers):
        in_size = input_dim if layer == 0 else hidden_dim
        # Fused gate weights, gate order [forget, input, cell, output];
        # split into x-part and h-part (replaces torch.cat([x, h]) @ W.T).
        params["lstm"].append({
            "wx": rnd((in_size, 4 * hidden_dim)),
            "wh": rnd((hidden_dim, 4 * hidden_dim)),
            "b":  rnd((4 * hidden_dim,)),
        })
    return params


def lstm_scratch_forward(x, params):
    """x: (B, T, 1, H, W) float32 (same convention as the PyTorch module)."""
    b_size, num_frames, n_ch, n_rows, n_cols = x.shape
    hidden_dim = params["hidden_dim"]

    # ---- encoder (all B*T frames at once, frame-parallel) ----
    xf = x.reshape(b_size * num_frames, n_ch, n_rows, n_cols)
    xf = jnp.transpose(xf, (0, 2, 3, 1))                     # NCHW -> NHWC
    steps = _conv_grid_steps(b_size * num_frames)
    y = conv2d_3x3_relu_maxpool(xf, params["conv1_w"], params["conv1_b"], steps)
    y = conv2d_3x3_relu_maxpool(y, params["conv2_w"], params["conv2_b"], steps)
    emb = conv2d_3x3_relu_avgpool(y, params["conv3_w"], params["conv3_b"])

    # ---- fused whole-sequence stacked LSTM + folded classifier ----
    emb = emb.reshape(b_size, num_frames, -1)
    emb = jnp.transpose(emb, (1, 0, 2))                      # (T, B, I)
    b_pad = max(8, ((b_size + 7) // 8) * 8)                  # pad sublanes
    emb = jnp.pad(emb, ((0, 0), (0, b_pad - b_size), (0, 0)))
    logits = lstm_stack_classify(emb, params["lstm"], params["cls"], hidden_dim)
    return logits[:b_size]


# ----------------------------------------------------------------------------
# Pure-JAX reference (same parameterization) for a correctness check
# ----------------------------------------------------------------------------
def _reference_forward(x, params):
    b, t, ch, hh, ww = x.shape
    hidden = params["hidden_dim"]
    num_layers = len(params["lstm"])
    xf = jnp.transpose(x.reshape(b * t, ch, hh, ww), (0, 2, 3, 1))

    def conv(xn, w, bb):
        yn = jax.lax.conv_general_dilated(
            xn, w, (1, 1), "SAME",
            dimension_numbers=("NHWC", "HWIO", "NHWC"))
        return jax.nn.relu(yn + bb)

    def pool(xn):
        return jax.lax.reduce_window(xn, -jnp.inf, jax.lax.max,
                                     (1, 2, 2, 1), (1, 2, 2, 1), "VALID")

    y = pool(conv(xf, params["conv1_w"], params["conv1_b"]))
    y = pool(conv(y, params["conv2_w"], params["conv2_b"]))
    y = conv(y, params["conv3_w"], params["conv3_b"])
    emb = y.mean(axis=(1, 2)).reshape(b, t, -1)

    h = [jnp.zeros((b, hidden), jnp.float32) for _ in range(num_layers)]
    c = [jnp.zeros((b, hidden), jnp.float32) for _ in range(num_layers)]
    xi = None
    for i in range(t):
        xi = emb[:, i, :]
        for j in range(num_layers):
            p = params["lstm"][j]
            g = xi @ p["wx"] + h[j] @ p["wh"] + p["b"]
            f_t = jax.nn.sigmoid(g[:, :hidden])
            i_t = jax.nn.sigmoid(g[:, hidden:2 * hidden])
            g_t = jnp.tanh(g[:, 2 * hidden:3 * hidden])
            o_t = jax.nn.sigmoid(g[:, 3 * hidden:])
            c[j] = f_t * c[j] + i_t * g_t
            h[j] = o_t * jnp.tanh(c[j])
            xi = h[j]
    cp = params["cls"]
    yy = xi @ cp["w1"] + cp["b1"]
    yy = yy @ cp["w2"] + cp["b2"]
    return yy @ cp["w3"] + cp["b3"]


if __name__ == "__main__":
    B, T, C, H, W = 2, 4, 1, 16, 16
    INPUT_DIM, HIDDEN_DIM, NUM_LAYERS = 32, 32, 2

    key = jax.random.PRNGKey(0)
    k_param, k_data = jax.random.split(key)
    params = init_params(k_param, INPUT_DIM, HIDDEN_DIM, NUM_LAYERS)
    x = jax.random.normal(k_data, (B, T, C, H, W), jnp.float32)

    fwd = jax.jit(functools.partial(lstm_scratch_forward, params=params))
    out = fwd(x)
    jax.block_until_ready(out)
    assert out.shape == (B, 6), out.shape

    with jax.default_matmul_precision("float32"):
        ref = _reference_forward(x, params)
    assert bool(jnp.allclose(out, ref, rtol=2e-2, atol=2e-3)), (
        "Pallas forward does not match JAX reference")

    print("KERNEL_OK")
</pallas_src>

<mosaic_0001>
module attributes {stable_mosaic.version = 11 : i64} {
  func.func @_conv_relu_maxpool_kernel(%arg0: i32, %arg1: memref<2048x9xf32, #tpu.memory_space<vmem>>, %arg2: memref<9x16xf32, #tpu.memory_space<vmem>>, %arg3: memref<1x16xf32, #tpu.memory_space<vmem>>, %arg4: memref<512x16xf32, #tpu.memory_space<vmem>>) attributes {dimension_semantics = [#tpu.dimension_semantics<parallel>], iteration_bounds = array<i64: 1>, scalar_prefetch = 0 : i64, scratch_operands = 0 : i64, tpu.core_type = #tpu.core_type<tc>, window_params = [{transform_indices = @transform_0, window_bounds = array<i64: 2048, 9>}, {pipeline_mode = #tpu.pipeline_mode<synchronous>, transform_indices = @transform_1, window_bounds = array<i64: 9, 16>}, {pipeline_mode = #tpu.pipeline_mode<synchronous>, transform_indices = @transform_2, window_bounds = array<i64: 1, 16>}, {transform_indices = @transform_3, window_bounds = array<i64: 512, 16>}]} {
    %c0 = arith.constant 0 : index
    %c0_0 = arith.constant 0 : index
    %0 = vector.load %arg1[%c0, %c0_0] : memref<2048x9xf32, #tpu.memory_space<vmem>>, vector<2048x9xf32>
    %c0_1 = arith.constant 0 : index
    %c0_2 = arith.constant 0 : index
    %1 = vector.load %arg2[%c0_1, %c0_2] : memref<9x16xf32, #tpu.memory_space<vmem>>, vector<9x16xf32>
    %cst = arith.constant dense<0.000000e+00> : vector<2048x16xf32>
    %2 = tpu.matmul %0, %1, %cst {dimension_numbers = #tpu.dot_dimension_numbers<[1], [0], [0], [1], [0, 0, 1, 1], [], []>} : vector<2048x9xf32>, vector<9x16xf32>, vector<2048x16xf32> -> vector<2048x16xf32>
    %c0_3 = arith.constant 0 : index
    %c0_4 = arith.constant 0 : index
    %3 = vector.load %arg3[%c0_3, %c0_4] : memref<1x16xf32, #tpu.memory_space<vmem>>, vector<1x16xf32>
    %4 = vector.broadcast %3 : vector<1x16xf32> to vector<2048x16xf32>
    %5 = arith.addf %2, %4 : vector<2048x16xf32>
    %cst_5 = arith.constant 0.000000e+00 : f32
    %6 = vector.broadcast %cst_5 : f32 to vector<2048x16xf32>
    %7 = arith.maximumf %5, %6 : vector<2048x16xf32>
    %8 = vector.extract_strided_slice %7 {offsets = [0, 0], sizes = [64, 16], strides = [1, 1]} : vector<2048x16xf32> to vector<64x16xf32>
    %9 = vector.extract_strided_slice %7 {offsets = [64, 0], sizes = [64, 16], strides = [1, 1]} : vector<2048x16xf32> to vector<64x16xf32>
    %10 = vector.extract_strided_slice %7 {offsets = [128, 0], sizes = [64, 16], strides = [1, 1]} : vector<2048x16xf32> to vector<64x16xf32>
    %11 = vector.extract_strided_slice %7 {offsets = [192, 0], sizes = [64, 16], strides = [1, 1]} : vector<2048x16xf32> to vector<64x16xf32>
    %12 = arith.maximumf %8, %9 : vector<64x16xf32>
    %13 = arith.maximumf %10, %11 : vector<64x16xf32>
    %14 = arith.maximumf %12, %13 : vector<64x16xf32>
    %c0_6 = arith.constant 0 : index
    %c0_7 = arith.constant 0 : index
    %15 = vector.load %arg4[%c0_6, %c0_7] : memref<512x16xf32, #tpu.memory_space<vmem>>, vector<64x16xf32>
    tpu.vector_store %arg4[%c0_6, %c0_7], %14 {strides = array<i32>} : memref<512x16xf32, #tpu.memory_space<vmem>>, vector<64x16xf32>,
    %16 = vector.extract_strided_slice %7 {offsets = [256, 0], sizes = [64, 16], strides = [1, 1]} : vector<2048x16xf32> to vector<64x16xf32>
    %17 = vector.extract_strided_slice %7 {offsets = [320, 0], sizes = [64, 16], strides = [1, 1]} : vector<2048x16xf32> to vector<64x16xf32>
    %18 = vector.extract_strided_slice %7 {offsets = [384, 0], sizes = [64, 16], strides = [1, 1]} : vector<2048x16xf32> to vector<64x16xf32>
    %19 = vector.extract_strided_slice %7 {offsets = [448, 0], sizes = [64, 16], strides = [1, 1]} : vector<2048x16xf32> to vector<64x16xf32>
    %20 = arith.maximumf %16, %17 : vector<64x16xf32>
    %21 = arith.maximumf %18, %19 : vector<64x16xf32>
    %22 = arith.maximumf %20, %21 : vector<64x16xf32>
    %c64 = arith.constant 64 : index
    %c0_8 = arith.constant 0 : index
    %23 = vector.load %arg4[%c64, %c0_8] : memref<512x16xf32, #tpu.memory_space<vmem>>, vector<64x16xf32>
    tpu.vector_store %arg4[%c64, %c0_8], %22 {strides = array<i32>} : memref<512x16xf32, #tpu.memory_space<vmem>>, vector<64x16xf32>,
    %24 = vector.extract_strided_slice %7 {offsets = [512, 0], sizes = [64, 16], strides = [1, 1]} : vector<2048x16xf32> to vector<64x16xf32>
    %25 = vector.extract_strided_slice %7 {offsets = [576, 0], sizes = [64, 16], strides = [1, 1]} : vector<2048x16xf32> to vector<64x16xf32>
    %26 = vector.extract_strided_slice %7 {offsets = [640, 0], sizes = [64, 16], strides = [1, 1]} : vector<2048x16xf32> to vector<64x16xf32>
    %27 = vector.extract_strided_slice %7 {offsets = [704, 0], sizes = [64, 16], strides = [1, 1]} : vector<2048x16xf32> to vector<64x16xf32>
    %28 = arith.maximumf %24, %25 : vector<64x16xf32>
    %29 = arith.maximumf %26, %27 : vector<64x16xf32>
    %30 = arith.maximumf %28, %29 : vector<64x16xf32>
    %c128 = arith.constant 128 : index
    %c0_9 = arith.constant 0 : index
    %31 = vector.load %arg4[%c128, %c0_9] : memref<512x16xf32, #tpu.memory_space<vmem>>, vector<64x16xf32>
    tpu.vector_store %arg4[%c128, %c0_9], %30 {strides = array<i32>} : memref<512x16xf32, #tpu.memory_space<vmem>>, vector<64x16xf32>,
    %32 = vector.extract_strided_slice %7 {offsets = [768, 0], sizes = [64, 16], strides = [1, 1]} : vector<2048x16xf32> to vector<64x16xf32>
    %33 = vector.extract_strided_slice %7 {offsets = [832, 0], sizes = [64, 16], strides = [1, 1]} : vector<2048x16xf32> to vector<64x16xf32>
    %34 = vector.extract_strided_slice %7 {offsets = [896, 0], sizes = [64, 16], strides = [1, 1]} : vector<2048x16xf32> to vector<64x16xf32>
    %35 = vector.extract_strided_slice %7 {offsets = [960, 0], sizes = [64, 16], strides = [1, 1]} : vector<2048x16xf32> to vector<64x16xf32>
    %36 = arith.maximumf %32, %33 : vector<64x16xf32>
    %37 = arith.maximumf %34, %35 : vector<64x16xf32>
    %38 = arith.maximumf %36, %37 : vector<64x16xf32>
    %c192 = arith.constant 192 : index
    %c0_10 = arith.constant 0 : index
    %39 = vector.load %arg4[%c192, %c0_10] : memref<512x16xf32, #tpu.memory_space<vmem>>, vector<64x16xf32>
    tpu.vector_store %arg4[%c192, %c0_10], %38 {strides = array<i32>} : memref<512x16xf32, #tpu.memory_space<vmem>>, vector<64x16xf32>,
    %40 = vector.extract_strided_slice %7 {offsets = [1024, 0], sizes = [64, 16], strides = [1, 1]} : vector<2048x16xf32> to vector<64x16xf32>
    %41 = vector.extract_strided_slice %7 {offsets = [1088, 0], sizes = [64, 16], strides = [1, 1]} : vector<2048x16xf32> to vector<64x16xf32>
    %42 = vector.extract_strided_slice %7 {offsets = [1152, 0], sizes = [64, 16], strides = [1, 1]} : vector<2048x16xf32> to vector<64x16xf32>
    %43 = vector.extract_strided_slice %7 {offsets = [1216, 0], sizes = [64, 16], strides = [1, 1]} : vector<2048x16xf32> to vector<64x16xf32>
    %44 = arith.maximumf %40, %41 : vector<64x16xf32>
    %45 = arith.maximumf %42, %43 : vector<64x16xf32>
    %46 = arith.maximumf %44, %45 : vector<64x16xf32>
    %c256 = arith.constant 256 : index
    %c0_11 = arith.constant 0 : index
    %47 = vector.load %arg4[%c256, %c0_11] : memref<512x16xf32, #tpu.memory_space<vmem>>, vector<64x16xf32>
    tpu.vector_store %arg4[%c256, %c0_11], %46 {strides = array<i32>} : memref<512x16xf32, #tpu.memory_space<vmem>>, vector<64x16xf32>,
    %48 = vector.extract_strided_slice %7 {offsets = [1280, 0], sizes = [64, 16], strides = [1, 1]} : vector<2048x16xf32> to vector<64x16xf32>
    %49 = vector.extract_strided_slice %7 {offsets = [1344, 0], sizes = [64, 16], strides = [1, 1]} : vector<2048x16xf32> to vector<64x16xf32>
    %50 = vector.extract_strided_slice %7 {offsets = [1408, 0], sizes = [64, 16], strides = [1, 1]} : vector<2048x16xf32> to vector<64x16xf32>
    %51 = vector.extract_strided_slice %7 {offsets = [1472, 0], sizes = [64, 16], strides = [1, 1]} : vector<2048x16xf32> to vector<64x16xf32>
    %52 = arith.maximumf %48, %49 : vector<64x16xf32>
    %53 = arith.maximumf %50, %51 : vector<64x16xf32>
    %54 = arith.maximumf %52, %53 : vector<64x16xf32>
    %c320 = arith.constant 320 : index
    %c0_12 = arith.constant 0 : index
    %55 = vector.load %arg4[%c320, %c0_12] : memref<512x16xf32, #tpu.memory_space<vmem>>, vector<64x16xf32>
    tpu.vector_store %arg4[%c320, %c0_12], %54 {strides = array<i32>} : memref<512x16xf32, #tpu.memory_space<vmem>>, vector<64x16xf32>,
    %56 = vector.extract_strided_slice %7 {offsets = [1536, 0], sizes = [64, 16], strides = [1, 1]} : vector<2048x16xf32> to vector<64x16xf32>
    %57 = vector.extract_strided_slice %7 {offsets = [1600, 0], sizes = [64, 16], strides = [1, 1]} : vector<2048x16xf32> to vector<64x16xf32>
    %58 = vector.extract_strided_slice %7 {offsets = [1664, 0], sizes = [64, 16], strides = [1, 1]} : vector<2048x16xf32> to vector<64x16xf32>
    %59 = vector.extract_strided_slice %7 {offsets = [1728, 0], sizes = [64, 16], strides = [1, 1]} : vector<2048x16xf32> to vector<64x16xf32>
    %60 = arith.maximumf %56, %57 : vector<64x16xf32>
    %61 = arith.maximumf %58, %59 : vector<64x16xf32>
    %62 = arith.maximumf %60, %61 : vector<64x16xf32>
    %c384 = arith.constant 384 : index
    %c0_13 = arith.constant 0 : index
    %63 = vector.load %arg4[%c384, %c0_13] : memref<512x16xf32, #tpu.memory_space<vmem>>, vector<64x16xf32>
    tpu.vector_store %arg4[%c384, %c0_13], %62 {strides = array<i32>} : memref<512x16xf32, #tpu.memory_space<vmem>>, vector<64x16xf32>,
    %64 = vector.extract_strided_slice %7 {offsets = [1792, 0], sizes = [64, 16], strides = [1, 1]} : vector<2048x16xf32> to vector<64x16xf32>
    %65 = vector.extract_strided_slice %7 {offsets = [1856, 0], sizes = [64, 16], strides = [1, 1]} : vector<2048x16xf32> to vector<64x16xf32>
    %66 = vector.extract_strided_slice %7 {offsets = [1920, 0], sizes = [64, 16], strides = [1, 1]} : vector<2048x16xf32> to vector<64x16xf32>
    %67 = vector.extract_strided_slice %7 {offsets = [1984, 0], sizes = [64, 16], strides = [1, 1]} : vector<2048x16xf32> to vector<64x16xf32>
    %68 = arith.maximumf %64, %65 : vector<64x16xf32>
    %69 = arith.maximumf %66, %67 : vector<64x16xf32>
    %70 = arith.maximumf %68, %69 : vector<64x16xf32>
    %c448 = arith.constant 448 : index
    %c0_14 = arith.constant 0 : index
    %71 = vector.load %arg4[%c448, %c0_14] : memref<512x16xf32, #tpu.memory_space<vmem>>, vector<64x16xf32>
    tpu.vector_store %arg4[%c448, %c0_14], %70 {strides = array<i32>} : memref<512x16xf32, #tpu.memory_space<vmem>>, vector<64x16xf32>,
    return
  }
  func.func @transform_0(%arg0: i32) -> (i32, i32) {
    %c0_i32 = arith.constant 0 : i32
    %c0_i32_0 = arith.constant 0 : i32
    return %arg0, %c0_i32 : i32, i32
  }
  func.func @transform_1(%arg0: i32) -> (i32, i32) {
    %c0_i32 = arith.constant 0 : i32
    %c0_i32_0 = arith.constant 0 : i32
    %c0_i32_1 = arith.constant 0 : i32
    return %c0_i32, %c0_i32_0 : i32, i32
  }
  func.func @transform_2(%arg0: i32) -> (i32, i32) {
    %c0_i32 = arith.constant 0 : i32
    %c0_i32_0 = arith.constant 0 : i32
    %c0_i32_1 = arith.constant 0 : i32
    return %c0_i32, %c0_i32_0 : i32, i32
  }
  func.func @transform_3(%arg0: i32) -> (i32, i32) {
    %c0_i32 = arith.constant 0 : i32
    %c0_i32_0 = arith.constant 0 : i32
    return %arg0, %c0_i32 : i32, i32
  }
}

module attributes {stable_mosaic.version = 11 : i64} {
  func.func @_conv_relu_maxpool_kernel(%arg0: i32, %arg1: memref<512x144xf32, #tpu.memory_space<vmem>>, %arg2: memref<144x32xf32, #tpu.memory_space<vmem>>, %arg3: memref<1x32xf32, #tpu.memory_space<vmem>>, %arg4: memref<128x32xf32, #tpu.memory_space<vmem>>) attributes {dimension_semantics = [#tpu.dimension_semantics<parallel>], iteration_bounds = array<i64: 1>, scalar_prefetch = 0 : i64, scratch_operands = 0 : i64, tpu.core_type = #tpu.core_type<tc>, window_params = [{transform_indices = @transform_0, window_bounds = array<i64: 512, 144>}, {pipeline_mode = #tpu.pipeline_mode<synchronous>, transform_indices = @transform_1, window_bounds = array<i64: 144, 32>}, {pipeline_mode = #tpu.pipeline_mode<synchronous>, transform_indices = @transform_2, window_bounds = array<i64: 1, 32>}, {transform_indices = @transform_3, window_bounds = array<i64: 128, 32>}]} {
    %c0 = arith.constant 0 : index
    %c0_0 = arith.constant 0 : index
    %0 = vector.load %arg1[%c0, %c0_0] : memref<512x144xf32, #tpu.memory_space<vmem>>, vector<512x144xf32>
    %c0_1 = arith.constant 0 : index
    %c0_2 = arith.constant 0 : index
    %1 = vector.load %arg2[%c0_1, %c0_2] : memref<144x32xf32, #tpu.memory_space<vmem>>, vector<144x32xf32>
    %cst = arith.constant dense<0.000000e+00> : vector<512x32xf32>
    %2 = tpu.matmul %0, %1, %cst {dimension_numbers = #tpu.dot_dimension_numbers<[1], [0], [0], [1], [0, 0, 1, 1], [], []>} : vector<512x144xf32>, vector<144x32xf32>, vector<512x32xf32> -> vector<512x32xf32>
    %c0_3 = arith.constant 0 : index
    %c0_4 = arith.constant 0 : index
    %3 = vector.load %arg3[%c0_3, %c0_4] : memref<1x32xf32, #tpu.memory_space<vmem>>, vector<1x32xf32>
    %4 = vector.broadcast %3 : vector<1x32xf32> to vector<512x32xf32>
    %5 = arith.addf %2, %4 : vector<512x32xf32>
    %cst_5 = arith.constant 0.000000e+00 : f32
    %6 = vector.broadcast %cst_5 : f32 to vector<512x32xf32>
    %7 = arith.maximumf %5, %6 : vector<512x32xf32>
    %8 = vector.extract_strided_slice %7 {offsets = [0, 0], sizes = [16, 32], strides = [1, 1]} : vector<512x32xf32> to vector<16x32xf32>
    %9 = vector.extract_strided_slice %7 {offsets = [16, 0], sizes = [16, 32], strides = [1, 1]} : vector<512x32xf32> to vector<16x32xf32>
    %10 = vector.extract_strided_slice %7 {offsets = [32, 0], sizes = [16, 32], strides = [1, 1]} : vector<512x32xf32> to vector<16x32xf32>
    %11 = vector.extract_strided_slice %7 {offsets = [48, 0], sizes = [16, 32], strides = [1, 1]} : vector<512x32xf32> to vector<16x32xf32>
    %12 = arith.maximumf %8, %9 : vector<16x32xf32>
    %13 = arith.maximumf %10, %11 : vector<16x32xf32>
    %14 = arith.maximumf %12, %13 : vector<16x32xf32>
    %c0_6 = arith.constant 0 : index
    %c0_7 = arith.constant 0 : index
    %15 = vector.load %arg4[%c0_6, %c0_7] : memref<128x32xf32, #tpu.memory_space<vmem>>, vector<16x32xf32>
    tpu.vector_store %arg4[%c0_6, %c0_7], %14 {strides = array<i32>} : memref<128x32xf32, #tpu.memory_space<vmem>>, vector<16x32xf32>,
    %16 = vector.extract_strided_slice %7 {offsets = [64, 0], sizes = [16, 32], strides = [1, 1]} : vector<512x32xf32> to vector<16x32xf32>
    %17 = vector.extract_strided_slice %7 {offsets = [80, 0], sizes = [16, 32], strides = [1, 1]} : vector<512x32xf32> to vector<16x32xf32>
    %18 = vector.extract_strided_slice %7 {offsets = [96, 0], sizes = [16, 32], strides = [1, 1]} : vector<512x32xf32> to vector<16x32xf32>
    %19 = vector.extract_strided_slice %7 {offsets = [112, 0], sizes = [16, 32], strides = [1, 1]} : vector<512x32xf32> to vector<16x32xf32>
    %20 = arith.maximumf %16, %17 : vector<16x32xf32>
    %21 = arith.maximumf %18, %19 : vector<16x32xf32>
    %22 = arith.maximumf %20, %21 : vector<16x32xf32>
    %c16 = arith.constant 16 : index
    %c0_8 = arith.constant 0 : index
    %23 = vector.load %arg4[%c16, %c0_8] : memref<128x32xf32, #tpu.memory_space<vmem>>, vector<16x32xf32>
    tpu.vector_store %arg4[%c16, %c0_8], %22 {strides = array<i32>} : memref<128x32xf32, #tpu.memory_space<vmem>>, vector<16x32xf32>,
    %24 = vector.extract_strided_slice %7 {offsets = [128, 0], sizes = [16, 32], strides = [1, 1]} : vector<512x32xf32> to vector<16x32xf32>
    %25 = vector.extract_strided_slice %7 {offsets = [144, 0], sizes = [16, 32], strides = [1, 1]} : vector<512x32xf32> to vector<16x32xf32>
    %26 = vector.extract_strided_slice %7 {offsets = [160, 0], sizes = [16, 32], strides = [1, 1]} : vector<512x32xf32> to vector<16x32xf32>
    %27 = vector.extract_strided_slice %7 {offsets = [176, 0], sizes = [16, 32], strides = [1, 1]} : vector<512x32xf32> to vector<16x32xf32>
    %28 = arith.maximumf %24, %25 : vector<16x32xf32>
    %29 = arith.maximumf %26, %27 : vector<16x32xf32>
    %30 = arith.maximumf %28, %29 : vector<16x32xf32>
    %c32 = arith.constant 32 : index
    %c0_9 = arith.constant 0 : index
    %31 = vector.load %arg4[%c32, %c0_9] : memref<128x32xf32, #tpu.memory_space<vmem>>, vector<16x32xf32>
    tpu.vector_store %arg4[%c32, %c0_9], %30 {strides = array<i32>} : memref<128x32xf32, #tpu.memory_space<vmem>>, vector<16x32xf32>,
    %32 = vector.extract_strided_slice %7 {offsets = [192, 0], sizes = [16, 32], strides = [1, 1]} : vector<512x32xf32> to vector<16x32xf32>
    %33 = vector.extract_strided_slice %7 {offsets = [208, 0], sizes = [16, 32], strides = [1, 1]} : vector<512x32xf32> to vector<16x32xf32>
    %34 = vector.extract_strided_slice %7 {offsets = [224, 0], sizes = [16, 32], strides = [1, 1]} : vector<512x32xf32> to vector<16x32xf32>
    %35 = vector.extract_strided_slice %7 {offsets = [240, 0], sizes = [16, 32], strides = [1, 1]} : vector<512x32xf32> to vector<16x32xf32>
    %36 = arith.maximumf %32, %33 : vector<16x32xf32>
    %37 = arith.maximumf %34, %35 : vector<16x32xf32>
    %38 = arith.maximumf %36, %37 : vector<16x32xf32>
    %c48 = arith.constant 48 : index
    %c0_10 = arith.constant 0 : index
    %39 = vector.load %arg4[%c48, %c0_10] : memref<128x32xf32, #tpu.memory_space<vmem>>, vector<16x32xf32>
    tpu.vector_store %arg4[%c48, %c0_10], %38 {strides = array<i32>} : memref<128x32xf32, #tpu.memory_space<vmem>>, vector<16x32xf32>,
    %40 = vector.extract_strided_slice %7 {offsets = [256, 0], sizes = [16, 32], strides = [1, 1]} : vector<512x32xf32> to vector<16x32xf32>
    %41 = vector.extract_strided_slice %7 {offsets = [272, 0], sizes = [16, 32], strides = [1, 1]} : vector<512x32xf32> to vector<16x32xf32>
    %42 = vector.extract_strided_slice %7 {offsets = [288, 0], sizes = [16, 32], strides = [1, 1]} : vector<512x32xf32> to vector<16x32xf32>
    %43 = vector.extract_strided_slice %7 {offsets = [304, 0], sizes = [16, 32], strides = [1, 1]} : vector<512x32xf32> to vector<16x32xf32>
    %44 = arith.maximumf %40, %41 : vector<16x32xf32>
    %45 = arith.maximumf %42, %43 : vector<16x32xf32>
    %46 = arith.maximumf %44, %45 : vector<16x32xf32>
    %c64 = arith.constant 64 : index
    %c0_11 = arith.constant 0 : index
    %47 = vector.load %arg4[%c64, %c0_11] : memref<128x32xf32, #tpu.memory_space<vmem>>, vector<16x32xf32>
    tpu.vector_store %arg4[%c64, %c0_11], %46 {strides = array<i32>} : memref<128x32xf32, #tpu.memory_space<vmem>>, vector<16x32xf32>,
    %48 = vector.extract_strided_slice %7 {offsets = [320, 0], sizes = [16, 32], strides = [1, 1]} : vector<512x32xf32> to vector<16x32xf32>
    %49 = vector.extract_strided_slice %7 {offsets = [336, 0], sizes = [16, 32], strides = [1, 1]} : vector<512x32xf32> to vector<16x32xf32>
    %50 = vector.extract_strided_slice %7 {offsets = [352, 0], sizes = [16, 32], strides = [1, 1]} : vector<512x32xf32> to vector<16x32xf32>
    %51 = vector.extract_strided_slice %7 {offsets = [368, 0], sizes = [16, 32], strides = [1, 1]} : vector<512x32xf32> to vector<16x32xf32>
    %52 = arith.maximumf %48, %49 : vector<16x32xf32>
    %53 = arith.maximumf %50, %51 : vector<16x32xf32>
    %54 = arith.maximumf %52, %53 : vector<16x32xf32>
    %c80 = arith.constant 80 : index
    %c0_12 = arith.constant 0 : index
    %55 = vector.load %arg4[%c80, %c0_12] : memref<128x32xf32, #tpu.memory_space<vmem>>, vector<16x32xf32>
    tpu.vector_store %arg4[%c80, %c0_12], %54 {strides = array<i32>} : memref<128x32xf32, #tpu.memory_space<vmem>>, vector<16x32xf32>,
    %56 = vector.extract_strided_slice %7 {offsets = [384, 0], sizes = [16, 32], strides = [1, 1]} : vector<512x32xf32> to vector<16x32xf32>
    %57 = vector.extract_strided_slice %7 {offsets = [400, 0], sizes = [16, 32], strides = [1, 1]} : vector<512x32xf32> to vector<16x32xf32>
    %58 = vector.extract_strided_slice %7 {offsets = [416, 0], sizes = [16, 32], strides = [1, 1]} : vector<512x32xf32> to vector<16x32xf32>
    %59 = vector.extract_strided_slice %7 {offsets = [432, 0], sizes = [16, 32], strides = [1, 1]} : vector<512x32xf32> to vector<16x32xf32>
    %60 = arith.maximumf %56, %57 : vector<16x32xf32>
    %61 = arith.maximumf %58, %59 : vector<16x32xf32>
    %62 = arith.maximumf %60, %61 : vector<16x32xf32>
    %c96 = arith.constant 96 : index
    %c0_13 = arith.constant 0 : index
    %63 = vector.load %arg4[%c96, %c0_13] : memref<128x32xf32, #tpu.memory_space<vmem>>, vector<16x32xf32>
    tpu.vector_store %arg4[%c96, %c0_13], %62 {strides = array<i32>} : memref<128x32xf32, #tpu.memory_space<vmem>>, vector<16x32xf32>,
    %64 = vector.extract_strided_slice %7 {offsets = [448, 0], sizes = [16, 32], strides = [1, 1]} : vector<512x32xf32> to vector<16x32xf32>
    %65 = vector.extract_strided_slice %7 {offsets = [464, 0], sizes = [16, 32], strides = [1, 1]} : vector<512x32xf32> to vector<16x32xf32>
    %66 = vector.extract_strided_slice %7 {offsets = [480, 0], sizes = [16, 32], strides = [1, 1]} : vector<512x32xf32> to vector<16x32xf32>
    %67 = vector.extract_strided_slice %7 {offsets = [496, 0], sizes = [16, 32], strides = [1, 1]} : vector<512x32xf32> to vector<16x32xf32>
    %68 = arith.maximumf %64, %65 : vector<16x32xf32>
    %69 = arith.maximumf %66, %67 : vector<16x32xf32>
    %70 = arith.maximumf %68, %69 : vector<16x32xf32>
    %c112 = arith.constant 112 : index
    %c0_14 = arith.constant 0 : index
    %71 = vector.load %arg4[%c112, %c0_14] : memref<128x32xf32, #tpu.memory_space<vmem>>, vector<16x32xf32>
    tpu.vector_store %arg4[%c112, %c0_14], %70 {strides = array<i32>} : memref<128x32xf32, #tpu.memory_space<vmem>>, vector<16x32xf32>,
    return
  }
  func.func @transform_0(%arg0: i32) -> (i32, i32) {
    %c0_i32 = arith.constant 0 : i32
    %c0_i32_0 = arith.constant 0 : i32
    return %arg0, %c0_i32 : i32, i32
  }
  func.func @transform_1(%arg0: i32) -> (i32, i32) {
    %c0_i32 = arith.constant 0 : i32
    %c0_i32_0 = arith.constant 0 : i32
    %c0_i32_1 = arith.constant 0 : i32
    return %c0_i32, %c0_i32_0 : i32, i32
  }
  func.func @transform_2(%arg0: i32) -> (i32, i32) {
    %c0_i32 = arith.constant 0 : i32
    %c0_i32_0 = arith.constant 0 : i32
    %c0_i32_1 = arith.constant 0 : i32
    return %c0_i32, %c0_i32_0 : i32, i32
  }
  func.func @transform_3(%arg0: i32) -> (i32, i32) {
    %c0_i32 = arith.constant 0 : i32
    %c0_i32_0 = arith.constant 0 : i32
    return %arg0, %c0_i32 : i32, i32
  }
}

module attributes {stable_mosaic.version = 11 : i64} {
  func.func @_conv_relu_avgpool_kernel(%arg0: i32, %arg1: memref<128x288xf32, #tpu.memory_space<vmem>>, %arg2: memref<288x32xf32, #tpu.memory_space<vmem>>, %arg3: memref<1x32xf32, #tpu.memory_space<vmem>>, %arg4: memref<8x32xf32, #tpu.memory_space<vmem>>) attributes {dimension_semantics = [#tpu.dimension_semantics<arbitrary>], iteration_bounds = array<i64: 1>, scalar_prefetch = 0 : i64, scratch_operands = 0 : i64, tpu.core_type = #tpu.core_type<tc>, window_params = [{pipeline_mode = #tpu.pipeline_mode<synchronous>, transform_indices = @transform_0, window_bounds = array<i64: 128, 288>}, {pipeline_mode = #tpu.pipeline_mode<synchronous>, transform_indices = @transform_1, window_bounds = array<i64: 288, 32>}, {pipeline_mode = #tpu.pipeline_mode<synchronous>, transform_indices = @transform_2, window_bounds = array<i64: 1, 32>}, {pipeline_mode = #tpu.pipeline_mode<synchronous>, transform_indices = @transform_3, window_bounds = array<i64: 8, 32>}]} {
    %c0 = arith.constant 0 : index
    %c0_0 = arith.constant 0 : index
    %0 = vector.load %arg1[%c0, %c0_0] : memref<128x288xf32, #tpu.memory_space<vmem>>, vector<128x288xf32>
    %c0_1 = arith.constant 0 : index
    %c0_2 = arith.constant 0 : index
    %1 = vector.load %arg2[%c0_1, %c0_2] : memref<288x32xf32, #tpu.memory_space<vmem>>, vector<288x32xf32>
    %cst = arith.constant dense<0.000000e+00> : vector<128x32xf32>
    %2 = tpu.matmul %0, %1, %cst {dimension_numbers = #tpu.dot_dimension_numbers<[1], [0], [0], [1], [0, 0, 1, 1], [], []>} : vector<128x288xf32>, vector<288x32xf32>, vector<128x32xf32> -> vector<128x32xf32>
    %c0_3 = arith.constant 0 : index
    %c0_4 = arith.constant 0 : index
    %3 = vector.load %arg3[%c0_3, %c0_4] : memref<1x32xf32, #tpu.memory_space<vmem>>, vector<1x32xf32>
    %4 = vector.broadcast %3 : vector<1x32xf32> to vector<128x32xf32>
    %5 = arith.addf %2, %4 : vector<128x32xf32>
    %cst_5 = arith.constant 0.000000e+00 : f32
    %6 = vector.broadcast %cst_5 : f32 to vector<128x32xf32>
    %7 = arith.maximumf %5, %6 : vector<128x32xf32>
    %8 = vector.shape_cast %7 : vector<128x32xf32> to vector<8x16x32xf32>
    %cst_6 = arith.constant dense<0.000000e+00> : vector<8x32xf32>
    %9 = vector.multi_reduction <add>, %8, %cst_6 [1] : vector<8x16x32xf32> to vector<8x32xf32>
    %cst_7 = arith.constant 1.600000e+01 : f32
    %10 = vector.broadcast %cst_7 : f32 to vector<8x32xf32>
    %11 = arith.divf %9, %10 : vector<8x32xf32>
    %c0_8 = arith.constant 0 : index
    %c0_9 = arith.constant 0 : index
    %12 = vector.load %arg4[%c0_8, %c0_9] : memref<8x32xf32, #tpu.memory_space<vmem>>, vector<8x32xf32>
    tpu.vector_store %arg4[%c0_8, %c0_9], %11 {strides = array<i32>} : memref<8x32xf32, #tpu.memory_space<vmem>>, vector<8x32xf32>,
    return
  }
  func.func @transform_0(%arg0: i32) -> (i32, i32) {
    %c0_i32 = arith.constant 0 : i32
    %c0_i32_0 = arith.constant 0 : i32
    %c0_i32_1 = arith.constant 0 : i32
    return %c0_i32, %c0_i32_0 : i32, i32
  }
  func.func @transform_1(%arg0: i32) -> (i32, i32) {
    %c0_i32 = arith.constant 0 : i32
    %c0_i32_0 = arith.constant 0 : i32
    %c0_i32_1 = arith.constant 0 : i32
    return %c0_i32, %c0_i32_0 : i32, i32
  }
  func.func @transform_2(%arg0: i32) -> (i32, i32) {
    %c0_i32 = arith.constant 0 : i32
    %c0_i32_0 = arith.constant 0 : i32
    %c0_i32_1 = arith.constant 0 : i32
    return %c0_i32, %c0_i32_0 : i32, i32
  }
  func.func @transform_3(%arg0: i32) -> (i32, i32) {
    %c0_i32 = arith.constant 0 : i32
    %c0_i32_0 = arith.constant 0 : i32
    %c0_i32_1 = arith.constant 0 : i32
    return %c0_i32, %c0_i32_0 : i32, i32
  }
}

module attributes {stable_mosaic.version = 11 : i64} {
  func.func @kernel(%arg0: memref<4x8x32xf32, #tpu.memory_space<vmem>>, %arg1: memref<64x128xf32, #tpu.memory_space<vmem>>, %arg2: memref<1x128xf32, #tpu.memory_space<vmem>>, %arg3: memref<64x128xf32, #tpu.memory_space<vmem>>, %arg4: memref<1x128xf32, #tpu.memory_space<vmem>>, %arg5: memref<32x6xf32, #tpu.memory_space<vmem>>, %arg6: memref<1x6xf32, #tpu.memory_space<vmem>>, %arg7: memref<8x6xf32, #tpu.memory_space<vmem>>) attributes {dimension_semantics = [], scalar_prefetch = 0 : i64, scratch_operands = 0 : i64, tpu.core_type = #tpu.core_type<tc>} {
    %cst = arith.constant 0.000000e+00 : f32
    %0 = vector.broadcast %cst : f32 to vector<8x32xf32>
    %cst_0 = arith.constant 0.000000e+00 : f32
    %1 = vector.broadcast %cst_0 : f32 to vector<8x32xf32>
    %cst_1 = arith.constant 0.000000e+00 : f32
    %2 = vector.broadcast %cst_1 : f32 to vector<8x32xf32>
    %cst_2 = arith.constant 0.000000e+00 : f32
    %3 = vector.broadcast %cst_2 : f32 to vector<8x32xf32>
    %c0 = arith.constant 0 : index
    %c0_3 = arith.constant 0 : index
    %c0_4 = arith.constant 0 : index
    %4 = vector.load %arg0[%c0, %c0_3, %c0_4] : memref<4x8x32xf32, #tpu.memory_space<vmem>>, vector<1x8x32xf32>
    %5 = vector.shape_cast %4 : vector<1x8x32xf32> to vector<8x32xf32>
    %6 = tpu.concatenate %5, %0 in 1 : vector<8x32xf32>, vector<8x32xf32> -> vector<8x64xf32>
    %c0_5 = arith.constant 0 : index
    %c0_6 = arith.constant 0 : index
    %7 = vector.load %arg1[%c0_5, %c0_6] : memref<64x128xf32, #tpu.memory_space<vmem>>, vector<64x128xf32>
    %cst_7 = arith.constant dense<0.000000e+00> : vector<8x128xf32>
    %8 = tpu.matmul %6, %7, %cst_7 {dimension_numbers = #tpu.dot_dimension_numbers<[1], [0], [0], [1], [0, 0, 1, 1], [], []>} : vector<8x64xf32>, vector<64x128xf32>, vector<8x128xf32> -> vector<8x128xf32>
    %c0_8 = arith.constant 0 : index
    %c0_9 = arith.constant 0 : index
    %9 = vector.load %arg2[%c0_8, %c0_9] : memref<1x128xf32, #tpu.memory_space<vmem>>, vector<1x128xf32>
    %10 = vector.broadcast %9 : vector<1x128xf32> to vector<8x128xf32>
    %11 = arith.addf %8, %10 : vector<8x128xf32>
    %12 = arith.negf %11 : vector<8x128xf32>
    %13 = math.exp %12 : vector<8x128xf32>
    %cst_10 = arith.constant 1.000000e+00 : f32
    %14 = vector.broadcast %cst_10 : f32 to vector<8x128xf32>
    %15 = arith.addf %14, %13 : vector<8x128xf32>
    %16 = arith.divf %14, %15 : vector<8x128xf32>
    %17 = vector.extract_strided_slice %16 {offsets = [0, 0], sizes = [8, 32], strides = [1, 1]} : vector<8x128xf32> to vector<8x32xf32>
    %18 = vector.extract_strided_slice %16 {offsets = [0, 32], sizes = [8, 32], strides = [1, 1]} : vector<8x128xf32> to vector<8x32xf32>
    %19 = vector.extract_strided_slice %11 {offsets = [0, 64], sizes = [8, 32], strides = [1, 1]} : vector<8x128xf32> to vector<8x32xf32>
    %20 = math.tanh %19 : vector<8x32xf32>
    %21 = vector.extract_strided_slice %16 {offsets = [0, 96], sizes = [8, 32], strides = [1, 1]} : vector<8x128xf32> to vector<8x32xf32>
    %22 = arith.mulf %17, %2 : vector<8x32xf32>
    %23 = arith.mulf %18, %20 : vector<8x32xf32>
    %24 = arith.addf %22, %23 : vector<8x32xf32>
    %25 = math.tanh %24 : vector<8x32xf32>
    %26 = arith.mulf %21, %25 : vector<8x32xf32>
    %27 = tpu.concatenate %26, %1 in 1 : vector<8x32xf32>, vector<8x32xf32> -> vector<8x64xf32>
    %c0_11 = arith.constant 0 : index
    %c0_12 = arith.constant 0 : index
    %28 = vector.load %arg3[%c0_11, %c0_12] : memref<64x128xf32, #tpu.memory_space<vmem>>, vector<64x128xf32>
    %cst_13 = arith.constant dense<0.000000e+00> : vector<8x128xf32>
    %29 = tpu.matmul %27, %28, %cst_13 {dimension_numbers = #tpu.dot_dimension_numbers<[1], [0], [0], [1], [0, 0, 1, 1], [], []>} : vector<8x64xf32>, vector<64x128xf32>, vector<8x128xf32> -> vector<8x128xf32>
    %c0_14 = arith.constant 0 : index
    %c0_15 = arith.constant 0 : index
    %30 = vector.load %arg4[%c0_14, %c0_15] : memref<1x128xf32, #tpu.memory_space<vmem>>, vector<1x128xf32>
    %31 = vector.broadcast %30 : vector<1x128xf32> to vector<8x128xf32>
    %32 = arith.addf %29, %31 : vector<8x128xf32>
    %33 = arith.negf %32 : vector<8x128xf32>
    %34 = math.exp %33 : vector<8x128xf32>
    %cst_16 = arith.constant 1.000000e+00 : f32
    %35 = vector.broadcast %cst_16 : f32 to vector<8x128xf32>
    %36 = arith.addf %35, %34 : vector<8x128xf32>
    %37 = arith.divf %35, %36 : vector<8x128xf32>
    %38 = vector.extract_strided_slice %37 {offsets = [0, 0], sizes = [8, 32], strides = [1, 1]} : vector<8x128xf32> to vector<8x32xf32>
    %39 = vector.extract_strided_slice %37 {offsets = [0, 32], sizes = [8, 32], strides = [1, 1]} : vector<8x128xf32> to vector<8x32xf32>
    %40 = vector.extract_strided_slice %32 {offsets = [0, 64], sizes = [8, 32], strides = [1, 1]} : vector<8x128xf32> to vector<8x32xf32>
    %41 = math.tanh %40 : vector<8x32xf32>
    %42 = vector.extract_strided_slice %37 {offsets = [0, 96], sizes = [8, 32], strides = [1, 1]} : vector<8x128xf32> to vector<8x32xf32>
    %43 = arith.mulf %38, %3 : vector<8x32xf32>
    %44 = arith.mulf %39, %41 : vector<8x32xf32>
    %45 = arith.addf %43, %44 : vector<8x32xf32>
    %46 = math.tanh %45 : vector<8x32xf32>
    %47 = arith.mulf %42, %46 : vector<8x32xf32>
    %c1 = arith.constant 1 : index
    %c0_17 = arith.constant 0 : index
    %c0_18 = arith.constant 0 : index
    %48 = vector.load %arg0[%c1, %c0_17, %c0_18] : memref<4x8x32xf32, #tpu.memory_space<vmem>>, vector<1x8x32xf32>
    %49 = vector.shape_cast %48 : vector<1x8x32xf32> to vector<8x32xf32>
    %50 = tpu.concatenate %49, %26 in 1 : vector<8x32xf32>, vector<8x32xf32> -> vector<8x64xf32>
    %c0_19 = arith.constant 0 : index
    %c0_20 = arith.constant 0 : index
    %51 = vector.load %arg1[%c0_19, %c0_20] : memref<64x128xf32, #tpu.memory_space<vmem>>, vector<64x128xf32>
    %cst_21 = arith.constant dense<0.000000e+00> : vector<8x128xf32>
    %52 = tpu.matmul %50, %51, %cst_21 {dimension_numbers = #tpu.dot_dimension_numbers<[1], [0], [0], [1], [0, 0, 1, 1], [], []>} : vector<8x64xf32>, vector<64x128xf32>, vector<8x128xf32> -> vector<8x128xf32>
    %c0_22 = arith.constant 0 : index
    %c0_23 = arith.constant 0 : index
    %53 = vector.load %arg2[%c0_22, %c0_23] : memref<1x128xf32, #tpu.memory_space<vmem>>, vector<1x128xf32>
    %54 = vector.broadcast %53 : vector<1x128xf32> to vector<8x128xf32>
    %55 = arith.addf %52, %54 : vector<8x128xf32>
    %56 = arith.negf %55 : vector<8x128xf32>
    %57 = math.exp %56 : vector<8x128xf32>
    %cst_24 = arith.constant 1.000000e+00 : f32
    %58 = vector.broadcast %cst_24 : f32 to vector<8x128xf32>
    %59 = arith.addf %58, %57 : vector<8x128xf32>
    %60 = arith.divf %58, %59 : vector<8x128xf32>
    %61 = vector.extract_strided_slice %60 {offsets = [0, 0], sizes = [8, 32], strides = [1, 1]} : vector<8x128xf32> to vector<8x32xf32>
    %62 = vector.extract_strided_slice %60 {offsets = [0, 32], sizes = [8, 32], strides = [1, 1]} : vector<8x128xf32> to vector<8x32xf32>
    %63 = vector.extract_strided_slice %55 {offsets = [0, 64], sizes = [8, 32], strides = [1, 1]} : vector<8x128xf32> to vector<8x32xf32>
    %64 = math.tanh %63 : vector<8x32xf32>
    %65 = vector.extract_strided_slice %60 {offsets = [0, 96], sizes = [8, 32], strides = [1, 1]} : vector<8x128xf32> to vector<8x32xf32>
    %66 = arith.mulf %61, %24 : vector<8x32xf32>
    %67 = arith.mulf %62, %64 : vector<8x32xf32>
    %68 = arith.addf %66, %67 : vector<8x32xf32>
    %69 = math.tanh %68 : vector<8x32xf32>
    %70 = arith.mulf %65, %69 : vector<8x32xf32>
    %71 = tpu.concatenate %70, %47 in 1 : vector<8x32xf32>, vector<8x32xf32> -> vector<8x64xf32>
    %c0_25 = arith.constant 0 : index
    %c0_26 = arith.constant 0 : index
    %72 = vector.load %arg3[%c0_25, %c0_26] : memref<64x128xf32, #tpu.memory_space<vmem>>, vector<64x128xf32>
    %cst_27 = arith.constant dense<0.000000e+00> : vector<8x128xf32>
    %73 = tpu.matmul %71, %72, %cst_27 {dimension_numbers = #tpu.dot_dimension_numbers<[1], [0], [0], [1], [0, 0, 1, 1], [], []>} : vector<8x64xf32>, vector<64x128xf32>, vector<8x128xf32> -> vector<8x128xf32>
    %c0_28 = arith.constant 0 : index
    %c0_29 = arith.constant 0 : index
    %74 = vector.load %arg4[%c0_28, %c0_29] : memref<1x128xf32, #tpu.memory_space<vmem>>, vector<1x128xf32>
    %75 = vector.broadcast %74 : vector<1x128xf32> to vector<8x128xf32>
    %76 = arith.addf %73, %75 : vector<8x128xf32>
    %77 = arith.negf %76 : vector<8x128xf32>
    %78 = math.exp %77 : vector<8x128xf32>
    %cst_30 = arith.constant 1.000000e+00 : f32
    %79 = vector.broadcast %cst_30 : f32 to vector<8x128xf32>
    %80 = arith.addf %79, %78 : vector<8x128xf32>
    %81 = arith.divf %79, %80 : vector<8x128xf32>
    %82 = vector.extract_strided_slice %81 {offsets = [0, 0], sizes = [8, 32], strides = [1, 1]} : vector<8x128xf32> to vector<8x32xf32>
    %83 = vector.extract_strided_slice %81 {offsets = [0, 32], sizes = [8, 32], strides = [1, 1]} : vector<8x128xf32> to vector<8x32xf32>
    %84 = vector.extract_strided_slice %76 {offsets = [0, 64], sizes = [8, 32], strides = [1, 1]} : vector<8x128xf32> to vector<8x32xf32>
    %85 = math.tanh %84 : vector<8x32xf32>
    %86 = vector.extract_strided_slice %81 {offsets = [0, 96], sizes = [8, 32], strides = [1, 1]} : vector<8x128xf32> to vector<8x32xf32>
    %87 = arith.mulf %82, %45 : vector<8x32xf32>
    %88 = arith.mulf %83, %85 : vector<8x32xf32>
    %89 = arith.addf %87, %88 : vector<8x32xf32>
    %90 = math.tanh %89 : vector<8x32xf32>
    %91 = arith.mulf %86, %90 : vector<8x32xf32>
    %c2 = arith.constant 2 : index
    %c0_31 = arith.constant 0 : index
    %c0_32 = arith.constant 0 : index
    %92 = vector.load %arg0[%c2, %c0_31, %c0_32] : memref<4x8x32xf32, #tpu.memory_space<vmem>>, vector<1x8x32xf32>
    %93 = vector.shape_cast %92 : vector<1x8x32xf32> to vector<8x32xf32>
    %94 = tpu.concatenate %93, %70 in 1 : vector<8x32xf32>, vector<8x32xf32> -> vector<8x64xf32>
    %c0_33 = arith.constant 0 : index
    %c0_34 = arith.constant 0 : index
    %95 = vector.load %arg1[%c0_33, %c0_34] : memref<64x128xf32, #tpu.memory_space<vmem>>, vector<64x128xf32>
    %cst_35 = arith.constant dense<0.000000e+00> : vector<8x128xf32>
    %96 = tpu.matmul %94, %95, %cst_35 {dimension_numbers = #tpu.dot_dimension_numbers<[1], [0], [0], [1], [0, 0, 1, 1], [], []>} : vector<8x64xf32>, vector<64x128xf32>, vector<8x128xf32> -> vector<8x128xf32>
    %c0_36 = arith.constant 0 : index
    %c0_37 = arith.constant 0 : index
    %97 = vector.load %arg2[%c0_36, %c0_37] : memref<1x128xf32, #tpu.memory_space<vmem>>, vector<1x128xf32>
    %98 = vector.broadcast %97 : vector<1x128xf32> to vector<8x128xf32>
    %99 = arith.addf %96, %98 : vector<8x128xf32>
    %100 = arith.negf %99 : vector<8x128xf32>
    %101 = math.exp %100 : vector<8x128xf32>
    %cst_38 = arith.constant 1.000000e+00 : f32
    %102 = vector.broadcast %cst_38 : f32 to vector<8x128xf32>
    %103 = arith.addf %102, %101 : vector<8x128xf32>
    %104 = arith.divf %102, %103 : vector<8x128xf32>
    %105 = vector.extract_strided_slice %104 {offsets = [0, 0], sizes = [8, 32], strides = [1, 1]} : vector<8x128xf32> to vector<8x32xf32>
    %106 = vector.extract_strided_slice %104 {offsets = [0, 32], sizes = [8, 32], strides = [1, 1]} : vector<8x128xf32> to vector<8x32xf32>
    %107 = vector.extract_strided_slice %99 {offsets = [0, 64], sizes = [8, 32], strides = [1, 1]} : vector<8x128xf32> to vector<8x32xf32>
    %108 = math.tanh %107 : vector<8x32xf32>
    %109 = vector.extract_strided_slice %104 {offsets = [0, 96], sizes = [8, 32], strides = [1, 1]} : vector<8x128xf32> to vector<8x32xf32>
    %110 = arith.mulf %105, %68 : vector<8x32xf32>
    %111 = arith.mulf %106, %108 : vector<8x32xf32>
    %112 = arith.addf %110, %111 : vector<8x32xf32>
    %113 = math.tanh %112 : vector<8x32xf32>
    %114 = arith.mulf %109, %113 : vector<8x32xf32>
    %115 = tpu.concatenate %114, %91 in 1 : vector<8x32xf32>, vector<8x32xf32> -> vector<8x64xf32>
    %c0_39 = arith.constant 0 : index
    %c0_40 = arith.constant 0 : index
    %116 = vector.load %arg3[%c0_39, %c0_40] : memref<64x128xf32, #tpu.memory_space<vmem>>, vector<64x128xf32>
    %cst_41 = arith.constant dense<0.000000e+00> : vector<8x128xf32>
    %117 = tpu.matmul %115, %116, %cst_41 {dimension_numbers = #tpu.dot_dimension_numbers<[1], [0], [0], [1], [0, 0, 1, 1], [], []>} : vector<8x64xf32>, vector<64x128xf32>, vector<8x128xf32> -> vector<8x128xf32>
    %c0_42 = arith.constant 0 : index
    %c0_43 = arith.constant 0 : index
    %118 = vector.load %arg4[%c0_42, %c0_43] : memref<1x128xf32, #tpu.memory_space<vmem>>, vector<1x128xf32>
    %119 = vector.broadcast %118 : vector<1x128xf32> to vector<8x128xf32>
    %120 = arith.addf %117, %119 : vector<8x128xf32>
    %121 = arith.negf %120 : vector<8x128xf32>
    %122 = math.exp %121 : vector<8x128xf32>
    %cst_44 = arith.constant 1.000000e+00 : f32
    %123 = vector.broadcast %cst_44 : f32 to vector<8x128xf32>
    %124 = arith.addf %123, %122 : vector<8x128xf32>
    %125 = arith.divf %123, %124 : vector<8x128xf32>
    %126 = vector.extract_strided_slice %125 {offsets = [0, 0], sizes = [8, 32], strides = [1, 1]} : vector<8x128xf32> to vector<8x32xf32>
    %127 = vector.extract_strided_slice %125 {offsets = [0, 32], sizes = [8, 32], strides = [1, 1]} : vector<8x128xf32> to vector<8x32xf32>
    %128 = vector.extract_strided_slice %120 {offsets = [0, 64], sizes = [8, 32], strides = [1, 1]} : vector<8x128xf32> to vector<8x32xf32>
    %129 = math.tanh %128 : vector<8x32xf32>
    %130 = vector.extract_strided_slice %125 {offsets = [0, 96], sizes = [8, 32], strides = [1, 1]} : vector<8x128xf32> to vector<8x32xf32>
    %131 = arith.mulf %126, %89 : vector<8x32xf32>
    %132 = arith.mulf %127, %129 : vector<8x32xf32>
    %133 = arith.addf %131, %132 : vector<8x32xf32>
    %134 = math.tanh %133 : vector<8x32xf32>
    %135 = arith.mulf %130, %134 : vector<8x32xf32>
    %c3 = arith.constant 3 : index
    %c0_45 = arith.constant 0 : index
    %c0_46 = arith.constant 0 : index
    %136 = vector.load %arg0[%c3, %c0_45, %c0_46] : memref<4x8x32xf32, #tpu.memory_space<vmem>>, vector<1x8x32xf32>
    %137 = vector.shape_cast %136 : vector<1x8x32xf32> to vector<8x32xf32>
    %138 = tpu.concatenate %137, %114 in 1 : vector<8x32xf32>, vector<8x32xf32> -> vector<8x64xf32>
    %c0_47 = arith.constant 0 : index
    %c0_48 = arith.constant 0 : index
    %139 = vector.load %arg1[%c0_47, %c0_48] : memref<64x128xf32, #tpu.memory_space<vmem>>, vector<64x128xf32>
    %cst_49 = arith.constant dense<0.000000e+00> : vector<8x128xf32>
    %140 = tpu.matmul %138, %139, %cst_49 {dimension_numbers = #tpu.dot_dimension_numbers<[1], [0], [0], [1], [0, 0, 1, 1], [], []>} : vector<8x64xf32>, vector<64x128xf32>, vector<8x128xf32> -> vector<8x128xf32>
    %c0_50 = arith.constant 0 : index
    %c0_51 = arith.constant 0 : index
    %141 = vector.load %arg2[%c0_50, %c0_51] : memref<1x128xf32, #tpu.memory_space<vmem>>, vector<1x128xf32>
    %142 = vector.broadcast %141 : vector<1x128xf32> to vector<8x128xf32>
    %143 = arith.addf %140, %142 : vector<8x128xf32>
    %144 = arith.negf %143 : vector<8x128xf32>
    %145 = math.exp %144 : vector<8x128xf32>
    %cst_52 = arith.constant 1.000000e+00 : f32
    %146 = vector.broadcast %cst_52 : f32 to vector<8x128xf32>
    %147 = arith.addf %146, %145 : vector<8x128xf32>
    %148 = arith.divf %146, %147 : vector<8x128xf32>
    %149 = vector.extract_strided_slice %148 {offsets = [0, 0], sizes = [8, 32], strides = [1, 1]} : vector<8x128xf32> to vector<8x32xf32>
    %150 = vector.extract_strided_slice %148 {offsets = [0, 32], sizes = [8, 32], strides = [1, 1]} : vector<8x128xf32> to vector<8x32xf32>
    %151 = vector.extract_strided_slice %143 {offsets = [0, 64], sizes = [8, 32], strides = [1, 1]} : vector<8x128xf32> to vector<8x32xf32>
    %152 = math.tanh %151 : vector<8x32xf32>
    %153 = vector.extract_strided_slice %148 {offsets = [0, 96], sizes = [8, 32], strides = [1, 1]} : vector<8x128xf32> to vector<8x32xf32>
    %154 = arith.mulf %149, %112 : vector<8x32xf32>
    %155 = arith.mulf %150, %152 : vector<8x32xf32>
    %156 = arith.addf %154, %155 : vector<8x32xf32>
    %157 = math.tanh %156 : vector<8x32xf32>
    %158 = arith.mulf %153, %157 : vector<8x32xf32>
    %159 = tpu.concatenate %158, %135 in 1 : vector<8x32xf32>, vector<8x32xf32> -> vector<8x64xf32>
    %c0_53 = arith.constant 0 : index
    %c0_54 = arith.constant 0 : index
    %160 = vector.load %arg3[%c0_53, %c0_54] : memref<64x128xf32, #tpu.memory_space<vmem>>, vector<64x128xf32>
    %cst_55 = arith.constant dense<0.000000e+00> : vector<8x128xf32>
    %161 = tpu.matmul %159, %160, %cst_55 {dimension_numbers = #tpu.dot_dimension_numbers<[1], [0], [0], [1], [0, 0, 1, 1], [], []>} : vector<8x64xf32>, vector<64x128xf32>, vector<8x128xf32> -> vector<8x128xf32>
    %c0_56 = arith.constant 0 : index
    %c0_57 = arith.constant 0 : index
    %162 = vector.load %arg4[%c0_56, %c0_57] : memref<1x128xf32, #tpu.memory_space<vmem>>, vector<1x128xf32>
    %163 = vector.broadcast %162 : vector<1x128xf32> to vector<8x128xf32>
    %164 = arith.addf %161, %163 : vector<8x128xf32>
    %165 = arith.negf %164 : vector<8x128xf32>
    %166 = math.exp %165 : vector<8x128xf32>
    %cst_58 = arith.constant 1.000000e+00 : f32
    %167 = vector.broadcast %cst_58 : f32 to vector<8x128xf32>
    %168 = arith.addf %167, %166 : vector<8x128xf32>
    %169 = arith.divf %167, %168 : vector<8x128xf32>
    %170 = vector.extract_strided_slice %169 {offsets = [0, 0], sizes = [8, 32], strides = [1, 1]} : vector<8x128xf32> to vector<8x32xf32>
    %171 = vector.extract_strided_slice %169 {offsets = [0, 32], sizes = [8, 32], strides = [1, 1]} : vector<8x128xf32> to vector<8x32xf32>
    %172 = vector.extract_strided_slice %164 {offsets = [0, 64], sizes = [8, 32], strides = [1, 1]} : vector<8x128xf32> to vector<8x32xf32>
    %173 = math.tanh %172 : vector<8x32xf32>
    %174 = vector.extract_strided_slice %169 {offsets = [0, 96], sizes = [8, 32], strides = [1, 1]} : vector<8x128xf32> to vector<8x32xf32>
    %175 = arith.mulf %170, %133 : vector<8x32xf32>
    %176 = arith.mulf %171, %173 : vector<8x32xf32>
    %177 = arith.addf %175, %176 : vector<8x32xf32>
    %178 = math.tanh %177 : vector<8x32xf32>
    %179 = arith.mulf %174, %178 : vector<8x32xf32>
    %c0_59 = arith.constant 0 : index
    %c0_60 = arith.constant 0 : index
    %180 = vector.load %arg5[%c0_59, %c0_60] : memref<32x6xf32, #tpu.memory_space<vmem>>, vector<32x6xf32>
    %cst_61 = arith.constant dense<0.000000e+00> : vector<8x6xf32>
    %181 = tpu.matmul %179, %180, %cst_61 {dimension_numbers = #tpu.dot_dimension_numbers<[1], [0], [0], [1], [0, 0, 1, 1], [], []>} : vector<8x32xf32>, vector<32x6xf32>, vector<8x6xf32> -> vector<8x6xf32>
    %c0_62 = arith.constant 0 : index
    %c0_63 = arith.constant 0 : index
    %182 = vector.load %arg6[%c0_62, %c0_63] : memref<1x6xf32, #tpu.memory_space<vmem>>, vector<1x6xf32>
    %183 = vector.broadcast %182 : vector<1x6xf32> to vector<8x6xf32>
    %184 = arith.addf %181, %183 : vector<8x6xf32>
    %c0_64 = arith.constant 0 : index
    %c0_65 = arith.constant 0 : index
    %185 = vector.load %arg7[%c0_64, %c0_65] : memref<8x6xf32, #tpu.memory_space<vmem>>, vector<8x6xf32>
    tpu.vector_store %arg7[%c0_64, %c0_65], %184 {strides = array<i32>} : memref<8x6xf32, #tpu.memory_space<vmem>>, vector<8x6xf32>,
    return
  }
}

</mosaic_0001>

<llo_original>
// kernel: lstm_scratch_forward.4
$region0: #{lstm_scratch_forward.4}
  #allocation0 [shape = 'u32[]', space=smem, size = 0x4, offset = 0x4, fixed_abs, tag = 'smem constant byte address 0x4 - core index']
  #allocation1 [shape = 'u32[144,128]{1,0:T(1,128)}', space=vmem, size = 0x12000, scoped, tag = 'internal scratch']
  %s0 = inlined_call_operand.vmem [shape: f32[2048,9], index: 0, kind: input, shape index: {}]
  %s1 = inlined_call_operand.vmem [shape: f32[9,16], index: 1, kind: input, shape index: {}]
  %s2 = inlined_call_operand.vmem [shape: f32[1,16], index: 2, kind: input, shape index: {}]
  %s3 = inlined_call_operand.vmem [shape: f32[512,16], index: 3, kind: output, shape index: {}]
  %s4 = sld [smem:[#allocation0]]
  $region22: #{lstm_scratch_forward.4} parent=0
    _
  %s6 = ssub.s32 1, %s4
  %s7 = scalar_select 0, %s6, %s4
  // Predicated region
  $region2: #{lstm_scratch_forward.4} parent=0 // pred_check
    _
  $region3: #{lstm_scratch_forward.4} parent=0 // pred_check_branch
    %9 = sbr.rel (0) target = $region5
  $region4: #{lstm_scratch_forward.4} parent=0 // pred_region
    _
  $region5: #{lstm_scratch_forward.4} parent=0 // pred_fallthru
    _
  // Predicated region
  $region6: #{lstm_scratch_forward.4} parent=0 // pred_check
    _
  $region7: #{lstm_scratch_forward.4} parent=0 // pred_check_branch
    %11 = sbr.rel (0) target = $region9
  $region8: #{lstm_scratch_forward.4} parent=0 // pred_region
    _
  $region9: #{lstm_scratch_forward.4} parent=0 // pred_fallthru
    _
  // Predicated region
  $region10: #{lstm_scratch_forward.4} parent=0 // pred_check
    _
  $region11: #{lstm_scratch_forward.4} parent=0 // pred_check_branch
    %13 = sbr.rel (0) target = $region13
  $region12: #{lstm_scratch_forward.4} parent=0 // pred_region
    _
  $region13: #{lstm_scratch_forward.4} parent=0 // pred_fallthru
    _
  %v14 = vld [vmem:[%s0] sm:$0xff]
  %v15 = vld [vmem:[%s0 + $0x8] sm:$0xff]
  %v16 = vld [vmem:[%s0 + $0x10] sm:$0xff]
  %v17 = vld [vmem:[%s0 + $0x18] sm:$0xff]
  %v18 = vld [vmem:[%s0 + $0x20] sm:$0xff]
  %v19 = vld [vmem:[%s0 + $0x28] sm:$0xff]
  %v20 = vld [vmem:[%s0 + $0x30] sm:$0xff]
  %v21 = vld [vmem:[%s0 + $0x38] sm:$0xff]
  %v22 = vld [vmem:[%s0 + $0x40] sm:$0xff]
  %v23 = vld [vmem:[%s0 + $0x48] sm:$0xff]
  %v24 = vld [vmem:[%s0 + $0x50] sm:$0xff]
  %v25 = vld [vmem:[%s0 + $0x58] sm:$0xff]
  %v26 = vld [vmem:[%s0 + $0x60] sm:$0xff]
  %v27 = vld [vmem:[%s0 + $0x68] sm:$0xff]
  %v28 = vld [vmem:[%s0 + $0x70] sm:$0xff]
  %v29 = vld [vmem:[%s0 + $0x78] sm:$0xff]
  %v30 = vld [vmem:[%s0 + $0x80] sm:$0xff]
  %v31 = vld [vmem:[%s0 + $0x88] sm:$0xff]
  %v32 = vld [vmem:[%s0 + $0x90] sm:$0xff]
  %v33 = vld [vmem:[%s0 + $0x98] sm:$0xff]
  %v34 = vld [vmem:[%s0 + $0xa0] sm:$0xff]
  %v35 = vld [vmem:[%s0 + $0xa8] sm:$0xff]
  %v36 = vld [vmem:[%s0 + $0xb0] sm:$0xff]
  %v37 = vld [vmem:[%s0 + $0xb8] sm:$0xff]
  %v38 = vld [vmem:[%s0 + $0xc0] sm:$0xff]
  %v39 = vld [vmem:[%s0 + $0xc8] sm:$0xff]
  %v40 = vld [vmem:[%s0 + $0xd0] sm:$0xff]
  %v41 = vld [vmem:[%s0 + $0xd8] sm:$0xff]
  %v42 = vld [vmem:[%s0 + $0xe0] sm:$0xff]
  %v43 = vld [vmem:[%s0 + $0xe8] sm:$0xff]
  %v44 = vld [vmem:[%s0 + $0xf0] sm:$0xff]
  %v45 = vld [vmem:[%s0 + $0xf8] sm:$0xff]
  %v46 = vld [vmem:[%s0 + $0x100] sm:$0xff]
  %v47 = vld [vmem:[%s0 + $0x108] sm:$0xff]
  %v48 = vld [vmem:[%s0 + $0x110] sm:$0xff]
  %v49 = vld [vmem:[%s0 + $0x118] sm:$0xff]
  %v50 = vld [vmem:[%s0 + $0x120] sm:$0xff]
  %v51 = vld [vmem:[%s0 + $0x128] sm:$0xff]
  %v52 = vld [vmem:[%s0 + $0x130] sm:$0xff]
  %v53 = vld [vmem:[%s0 + $0x138] sm:$0xff]
  %v54 = vld [vmem:[%s0 + $0x140] sm:$0xff]
  %v55 = vld [vmem:[%s0 + $0x148] sm:$0xff]
  %v56 = vld [vmem:[%s0 + $0x150] sm:$0xff]
  %v57 = vld [vmem:[%s0 + $0x158] sm:$0xff]
  %v58 = vld [vmem:[%s0 + $0x160] sm:$0xff]
  %v59 = vld [vmem:[%s0 + $0x168] sm:$0xff]
  %v60 = vld [vmem:[%s0 + $0x170] sm:$0xff]
  %v61 = vld [vmem:[%s0 + $0x178] sm:$0xff]
  %v62 = vld [vmem:[%s0 + $0x180] sm:$0xff]
  %v63 = vld [vmem:[%s0 + $0x188] sm:$0xff]
  %v64 = vld [vmem:[%s0 + $0x190] sm:$0xff]
  %v65 = vld [vmem:[%s0 + $0x198] sm:$0xff]
  %v66 = vld [vmem:[%s0 + $0x1a0] sm:$0xff]
  %v67 = vld [vmem:[%s0 + $0x1a8] sm:$0xff]
  %v68 = vld [vmem:[%s0 + $0x1b0] sm:$0xff]
  %v69 = vld [vmem:[%s0 + $0x1b8] sm:$0xff]
  %v70 = vld [vmem:[%s0 + $0x1c0] sm:$0xff]
  %v71 = vld [vmem:[%s0 + $0x1c8] sm:$0xff]
  %v72 = vld [vmem:[%s0 + $0x1d0] sm:$0xff]
  %v73 = vld [vmem:[%s0 + $0x1d8] sm:$0xff]
  %v74 = vld [vmem:[%s0 + $0x1e0] sm:$0xff]
  %v75 = vld [vmem:[%s0 + $0x1e8] sm:$0xff]
  %v76 = vld [vmem:[%s0 + $0x1f0] sm:$0xff]
  %v77 = vld [vmem:[%s0 + $0x1f8] sm:$0xff]
  %v78 = vld [vmem:[%s0 + $0x200] sm:$0xff]
  %v79 = vld [vmem:[%s0 + $0x208] sm:$0xff]
  %v80 = vld [vmem:[%s0 + $0x210] sm:$0xff]
  %v81 = vld [vmem:[%s0 + $0x218] sm:$0xff]
  %v82 = vld [vmem:[%s0 + $0x220] sm:$0xff]
  %v83 = vld [vmem:[%s0 + $0x228] sm:$0xff]
  %v84 = vld [vmem:[%s0 + $0x230] sm:$0xff]
  %v85 = vld [vmem:[%s0 + $0x238] sm:$0xff]
  %v86 = vld [vmem:[%s0 + $0x240] sm:$0xff]
  %v87 = vld [vmem:[%s0 + $0x248] sm:$0xff]
  %v88 = vld [vmem:[%s0 + $0x250] sm:$0xff]
  %v89 = vld [vmem:[%s0 + $0x258] sm:$0xff]
  %v90 = vld [vmem:[%s0 + $0x260] sm:$0xff]
  %v91 = vld [vmem:[%s0 + $0x268] sm:$0xff]
  %v92 = vld [vmem:[%s0 + $0x270] sm:$0xff]
  %v93 = vld [vmem:[%s0 + $0x278] sm:$0xff]
  %v94 = vld [vmem:[%s0 + $0x280] sm:$0xff]
  %v95 = vld [vmem:[%s0 + $0x288] sm:$0xff]
  %v96 = vld [vmem:[%s0 + $0x290] sm:$0xff]
  %v97 = vld [vmem:[%s0 + $0x298] sm:$0xff]
  %v98 = vld [vmem:[%s0 + $0x2a0] sm:$0xff]
  %v99 = vld [vmem:[%s0 + $0x2a8] sm:$0xff]
  %v100 = vld [vmem:[%s0 + $0x2b0] sm:$0xff]
  %v101 = vld [vmem:[%s0 + $0x2b8] sm:$0xff]
  %v102 = vld [vmem:[%s0 + $0x2c0] sm:$0xff]
  %v103 = vld [vmem:[%s0 + $0x2c8] sm:$0xff]
  %v104 = vld [vmem:[%s0 + $0x2d0] sm:$0xff]
  %v105 = vld [vmem:[%s0 + $0x2d8] sm:$0xff]
  %v106 = vld [vmem:[%s0 + $0x2e0] sm:$0xff]
  %v107 = vld [vmem:[%s0 + $0x2e8] sm:$0xff]
  %v108 = vld [vmem:[%s0 + $0x2f0] sm:$0xff]
  %v109 = vld [vmem:[%s0 + $0x2f8] sm:$0xff]
  %v110 = vld [vmem:[%s0 + $0x300] sm:$0xff]
  %v111 = vld [vmem:[%s0 + $0x308] sm:$0xff]
  %v112 = vld [vmem:[%s0 + $0x310] sm:$0xff]
  %v113 = vld [vmem:[%s0 + $0x318] sm:$0xff]
  %v114 = vld [vmem:[%s0 + $0x320] sm:$0xff]
  %v115 = vld [vmem:[%s0 + $0x328] sm:$0xff]
  %v116 = vld [vmem:[%s0 + $0x330] sm:$0xff]
  %v117 = vld [vmem:[%s0 + $0x338] sm:$0xff]
  %v118 = vld [vmem:[%s0 + $0x340] sm:$0xff]
  %v119 = vld [vmem:[%s0 + $0x348] sm:$0xff]
  %v120 = vld [vmem:[%s0 + $0x350] sm:$0xff]
  %v121 = vld [vmem:[%s0 + $0x358] sm:$0xff]
  %v122 = vld [vmem:[%s0 + $0x360] sm:$0xff]
  %v123 = vld [vmem:[%s0 + $0x368] sm:$0xff]
  %v124 = vld [vmem:[%s0 + $0x370] sm:$0xff]
  %v125 = vld [vmem:[%s0 + $0x378] sm:$0xff]
  %v126 = vld [vmem:[%s0 + $0x380] sm:$0xff]
  %v127 = vld [vmem:[%s0 + $0x388] sm:$0xff]
  %v128 = vld [vmem:[%s0 + $0x390] sm:$0xff]
  %v129 = vld [vmem:[%s0 + $0x398] sm:$0xff]
  %v130 = vld [vmem:[%s0 + $0x3a0] sm:$0xff]
  %v131 = vld [vmem:[%s0 + $0x3a8] sm:$0xff]
  %v132 = vld [vmem:[%s0 + $0x3b0] sm:$0xff]
  %v133 = vld [vmem:[%s0 + $0x3b8] sm:$0xff]
  %v134 = vld [vmem:[%s0 + $0x3c0] sm:$0xff]
  %v135 = vld [vmem:[%s0 + $0x3c8] sm:$0xff]
  %v136 = vld [vmem:[%s0 + $0x3d0] sm:$0xff]
  %v137 = vld [vmem:[%s0 + $0x3d8] sm:$0xff]
  %v138 = vld [vmem:[%s0 + $0x3e0] sm:$0xff]
  %v139 = vld [vmem:[%s0 + $0x3e8] sm:$0xff]
  %v140 = vld [vmem:[%s0 + $0x3f0] sm:$0xff]
  %v141 = vld [vmem:[%s0 + $0x3f8] sm:$0xff]
  %v142 = vld [vmem:[%s0 + $0x400] sm:$0xff]
  %v143 = vld [vmem:[%s0 + $0x408] sm:$0xff]
  %v144 = vld [vmem:[%s0 + $0x410] sm:$0xff]
  %v145 = vld [vmem:[%s0 + $0x418] sm:$0xff]
  %v146 = vld [vmem:[%s0 + $0x420] sm:$0xff]
  %v147 = vld [vmem:[%s0 + $0x428] sm:$0xff]
  %v148 = vld [vmem:[%s0 + $0x430] sm:$0xff]
  %v149 = vld [vmem:[%s0 + $0x438] sm:$0xff]
  %v150 = vld [vmem:[%s0 + $0x440] sm:$0xff]
  %v151 = vld [vmem:[%s0 + $0x448] sm:$0xff]
  %v152 = vld [vmem:[%s0 + $0x450] sm:$0xff]
  %v153 = vld [vmem:[%s0 + $0x458] sm:$0xff]
  %v154 = vld [vmem:[%s0 + $0x460] sm:$0xff]
  %v155 = vld [vmem:[%s0 + $0x468] sm:$0xff]
  %v156 = vld [vmem:[%s0 + $0x470] sm:$0xff]
  %v157 = vld [vmem:[%s0 + $0x478] sm:$0xff]
  %v158 = vld [vmem:[%s0 + $0x480] sm:$0xff]
  %v159 = vld [vmem:[%s0 + $0x488] sm:$0xff]
  %v160 = vld [vmem:[%s0 + $0x490] sm:$0xff]
  %v161 = vld [vmem:[%s0 + $0x498] sm:$0xff]
  %v162 = vld [vmem:[%s0 + $0x4a0] sm:$0xff]
  %v163 = vld [vmem:[%s0 + $0x4a8] sm:$0xff]
  %v164 = vld [vmem:[%s0 + $0x4b0] sm:$0xff]
  %v165 = vld [vmem:[%s0 + $0x4b8] sm:$0xff]
  %v166 = vld [vmem:[%s0 + $0x4c0] sm:$0xff]
  %v167 = vld [vmem:[%s0 + $0x4c8] sm:$0xff]
  %v168 = vld [vmem:[%s0 + $0x4d0] sm:$0xff]
  %v169 = vld [vmem:[%s0 + $0x4d8] sm:$0xff]
  %v170 = vld [vmem:[%s0 + $0x4e0] sm:$0xff]
  %v171 = vld [vmem:[%s0 + $0x4e8] sm:$0xff]
  %v172 = vld [vmem:[%s0 + $0x4f0] sm:$0xff]
  %v173 = vld [vmem:[%s0 + $0x4f8] sm:$0xff]
  %v174 = vld [vmem:[%s0 + $0x500] sm:$0xff]
  %v175 = vld [vmem:[%s0 + $0x508] sm:$0xff]
  %v176 = vld [vmem:[%s0 + $0x510] sm:$0xff]
  %v177 = vld [vmem:[%s0 + $0x518] sm:$0xff]
  %v178 = vld [vmem:[%s0 + $0x520] sm:$0xff]
  %v179 = vld [vmem:[%s0 + $0x528] sm:$0xff]
  %v180 = vld [vmem:[%s0 + $0x530] sm:$0xff]
  %v181 = vld [vmem:[%s0 + $0x538] sm:$0xff]
  %v182 = vld [vmem:[%s0 + $0x540] sm:$0xff]
  %v183 = vld [vmem:[%s0 + $0x548] sm:$0xff]
  %v184 = vld [vmem:[%s0 + $0x550] sm:$0xff]
  %v185 = vld [vmem:[%s0 + $0x558] sm:$0xff]
  %v186 = vld [vmem:[%s0 + $0x560] sm:$0xff]
  %v187 = vld [vmem:[%s0 + $0x568] sm:$0xff]
  %v188 = vld [vmem:[%s0 + $0x570] sm:$0xff]
  %v189 = vld [vmem:[%s0 + $0x578] sm:$0xff]
  %v190 = vld [vmem:[%s0 + $0x580] sm:$0xff]
  %v191 = vld [vmem:[%s0 + $0x588] sm:$0xff]
  %v192 = vld [vmem:[%s0 + $0x590] sm:$0xff]
  %v193 = vld [vmem:[%s0 + $0x598] sm:$0xff]
  %v194 = vld [vmem:[%s0 + $0x5a0] sm:$0xff]
  %v195 = vld [vmem:[%s0 + $0x5a8] sm:$0xff]
  %v196 = vld [vmem:[%s0 + $0x5b0] sm:$0xff]
  %v197 = vld [vmem:[%s0 + $0x5b8] sm:$0xff]
  %v198 = vld [vmem:[%s0 + $0x5c0] sm:$0xff]
  %v199 = vld [vmem:[%s0 + $0x5c8] sm:$0xff]
  %v200 = vld [vmem:[%s0 + $0x5d0] sm:$0xff]
  %v201 = vld [vmem:[%s0 + $0x5d8] sm:$0xff]
  %v202 = vld [vmem:[%s0 + $0x5e0] sm:$0xff]
  %v203 = vld [vmem:[%s0 + $0x5e8] sm:$0xff]
  %v204 = vld [vmem:[%s0 + $0x5f0] sm:$0xff]
  %v205 = vld [vmem:[%s0 + $0x5f8] sm:$0xff]
  %v206 = vld [vmem:[%s0 + $0x600] sm:$0xff]
  %v207 = vld [vmem:[%s0 + $0x608] sm:$0xff]
  %v208 = vld [vmem:[%s0 + $0x610] sm:$0xff]
  %v209 = vld [vmem:[%s0 + $0x618] sm:$0xff]
  %v210 = vld [vmem:[%s0 + $0x620] sm:$0xff]
  %v211 = vld [vmem:[%s0 + $0x628] sm:$0xff]
  %v212 = vld [vmem:[%s0 + $0x630] sm:$0xff]
  %v213 = vld [vmem:[%s0 + $0x638] sm:$0xff]
  %v214 = vld [vmem:[%s0 + $0x640] sm:$0xff]
  %v215 = vld [vmem:[%s0 + $0x648] sm:$0xff]
  %v216 = vld [vmem:[%s0 + $0x650] sm:$0xff]
  %v217 = vld [vmem:[%s0 + $0x658] sm:$0xff]
  %v218 = vld [vmem:[%s0 + $0x660] sm:$0xff]
  %v219 = vld [vmem:[%s0 + $0x668] sm:$0xff]
  %v220 = vld [vmem:[%s0 + $0x670] sm:$0xff]
  %v221 = vld [vmem:[%s0 + $0x678] sm:$0xff]
  %v222 = vld [vmem:[%s0 + $0x680] sm:$0xff]
  %v223 = vld [vmem:[%s0 + $0x688] sm:$0xff]
  %v224 = vld [vmem:[%s0 + $0x690] sm:$0xff]
  %v225 = vld [vmem:[%s0 + $0x698] sm:$0xff]
  %v226 = vld [vmem:[%s0 + $0x6a0] sm:$0xff]
  %v227 = vld [vmem:[%s0 + $0x6a8] sm:$0xff]
  %v228 = vld [vmem:[%s0 + $0x6b0] sm:$0xff]
  %v229 = vld [vmem:[%s0 + $0x6b8] sm:$0xff]
  %v230 = vld [vmem:[%s0 + $0x6c0] sm:$0xff]
  %v231 = vld [vmem:[%s0 + $0x6c8] sm:$0xff]
  %v232 = vld [vmem:[%s0 + $0x6d0] sm:$0xff]
  %v233 = vld [vmem:[%s0 + $0x6d8] sm:$0xff]
  %v234 = vld [vmem:[%s0 + $0x6e0] sm:$0xff]
  %v235 = vld [vmem:[%s0 + $0x6e8] sm:$0xff]
  %v236 = vld [vmem:[%s0 + $0x6f0] sm:$0xff]
  %v237 = vld [vmem:[%s0 + $0x6f8] sm:$0xff]
  %v238 = vld [vmem:[%s0 + $0x700] sm:$0xff]
  %v239 = vld [vmem:[%s0 + $0x708] sm:$0xff]
  %v240 = vld [vmem:[%s0 + $0x710] sm:$0xff]
  %v241 = vld [vmem:[%s0 + $0x718] sm:$0xff]
  %v242 = vld [vmem:[%s0 + $0x720] sm:$0xff]
  %v243 = vld [vmem:[%s0 + $0x728] sm:$0xff]
  %v244 = vld [vmem:[%s0 + $0x730] sm:$0xff]
  %v245 = vld [vmem:[%s0 + $0x738] sm:$0xff]
  %v246 = vld [vmem:[%s0 + $0x740] sm:$0xff]
  %v247 = vld [vmem:[%s0 + $0x748] sm:$0xff]
  %v248 = vld [vmem:[%s0 + $0x750] sm:$0xff]
  %v249 = vld [vmem:[%s0 + $0x758] sm:$0xff]
  %v250 = vld [vmem:[%s0 + $0x760] sm:$0xff]
  %v251 = vld [vmem:[%s0 + $0x768] sm:$0xff]
  %v252 = vld [vmem:[%s0 + $0x770] sm:$0xff]
  %v253 = vld [vmem:[%s0 + $0x778] sm:$0xff]
  %v254 = vld [vmem:[%s0 + $0x780] sm:$0xff]
  %v255 = vld [vmem:[%s0 + $0x788] sm:$0xff]
  %v256 = vld [vmem:[%s0 + $0x790] sm:$0xff]
  %v257 = vld [vmem:[%s0 + $0x798] sm:$0xff]
  %v258 = vld [vmem:[%s0 + $0x7a0] sm:$0xff]
  %v259 = vld [vmem:[%s0 + $0x7a8] sm:$0xff]
  %v260 = vld [vmem:[%s0 + $0x7b0] sm:$0xff]
  %v261 = vld [vmem:[%s0 + $0x7b8] sm:$0xff]
  %v262 = vld [vmem:[%s0 + $0x7c0] sm:$0xff]
  %v263 = vld [vmem:[%s0 + $0x7c8] sm:$0xff]
  %v264 = vld [vmem:[%s0 + $0x7d0] sm:$0xff]
  %v265 = vld [vmem:[%s0 + $0x7d8] sm:$0xff]
  %v266 = vld [vmem:[%s0 + $0x7e0] sm:$0xff]
  %v267 = vld [vmem:[%s0 + $0x7e8] sm:$0xff]
  %v268 = vld [vmem:[%s0 + $0x7f0] sm:$0xff]
  %v269 = vld [vmem:[%s0 + $0x7f8] sm:$0xff]
  %v270 = vld [vmem:[%s1] sm:$0xff]
  %v271 = vld [vmem:[%s1 + $0x8] sm:$0x1]
  %v272 = vld [vmem:[%s2] sm:$0x1]
  %v274 = vlaneseq
  %v275 = vshrl.u32 %v274, 7
  %v276 = vsub.s32 0, %v275
  %v277 = vrot.slane %v272, %v276
  %vm279 = vcmask 72704
  %v281 = vsel %vm279, %v14, 0
  %v284 = vsel %vm279, %v15, 0
  %v287 = vsel %vm279, %v16, 0
  %v290 = vsel %vm279, %v17, 0
  %v293 = vsel %vm279, %v18, 0
  %v296 = vsel %vm279, %v19, 0
  %v299 = vsel %vm279, %v20, 0
  %v302 = vsel %vm279, %v21, 0
  %v305 = vsel %vm279, %v22, 0
  %v308 = vsel %vm279, %v23, 0
  %v311 = vsel %vm279, %v24, 0
  %v314 = vsel %vm279, %v25, 0
  %v317 = vsel %vm279, %v26, 0
  %v320 = vsel %vm279, %v27, 0
  %v323 = vsel %vm279, %v28, 0
  %v326 = vsel %vm279, %v29, 0
  %v329 = vsel %vm279, %v30, 0
  %v332 = vsel %vm279, %v31, 0
  %v335 = vsel %vm279, %v32, 0
  %v338 = vsel %vm279, %v33, 0
  %v341 = vsel %vm279, %v34, 0
  %v344 = vsel %vm279, %v35, 0
  %v347 = vsel %vm279, %v36, 0
  %v350 = vsel %vm279, %v37, 0
  %v353 = vsel %vm279, %v38, 0
  %v356 = vsel %vm279, %v39, 0
  %v359 = vsel %vm279, %v40, 0
  %v362 = vsel %vm279, %v41, 0
  %v365 = vsel %vm279, %v42, 0
  %v368 = vsel %vm279, %v43, 0
  %v371 = vsel %vm279, %v44, 0
  %v374 = vsel %vm279, %v45, 0
  %v377 = vsel %vm279, %v46, 0
  %v380 = vsel %vm279, %v47, 0
  %v383 = vsel %vm279, %v48, 0
  %v386 = vsel %vm279, %v49, 0
  %v389 = vsel %vm279, %v50, 0
  %v392 = vsel %vm279, %v51, 0
  %v395 = vsel %vm279, %v52, 0
  %v398 = vsel %vm279, %v53, 0
  %v401 = vsel %vm279, %v54, 0
  %v404 = vsel %vm279, %v55, 0
  %v407 = vsel %vm279, %v56, 0
  %v410 = vsel %vm279, %v57, 0
  %v413 = vsel %vm279, %v58, 0
  %v416 = vsel %vm279, %v59, 0
  %v419 = vsel %vm279, %v60, 0
  %v422 = vsel %vm279, %v61, 0
  %v425 = vsel %vm279, %v62, 0
  %v428 = vsel %vm279, %v63, 0
  %v431 = vsel %vm279, %v64, 0
  %v434 = vsel %vm279, %v65, 0
  %v437 = vsel %vm279, %v66, 0
  %v440 = vsel %vm279, %v67, 0
  %v443 = vsel %vm279, %v68, 0
  %v446 = vsel %vm279, %v69, 0
  %v449 = vsel %vm279, %v70, 0
  %v452 = vsel %vm279, %v71, 0
  %v455 = vsel %vm279, %v72, 0
  %v458 = vsel %vm279, %v73, 0
  %v461 = vsel %vm279, %v74, 0
  %v464 = vsel %vm279, %v75, 0
  %v467 = vsel %vm279, %v76, 0
  %v470 = vsel %vm279, %v77, 0
  %v473 = vsel %vm279, %v78, 0
  %v476 = vsel %vm279, %v79, 0
  %v479 = vsel %vm279, %v80, 0
  %v482 = vsel %vm279, %v81, 0
  %v485 = vsel %vm279, %v82, 0
  %v488 = vsel %vm279, %v83, 0
  %v491 = vsel %vm279, %v84, 0
  %v494 = vsel %vm279, %v85, 0
  %v497 = vsel %vm279, %v86, 0
  %v500 = vsel %vm279, %v87, 0
  %v503 = vsel %vm279, %v88, 0
  %v506 = vsel %vm279, %v89, 0
  %v509 = vsel %vm279, %v90, 0
  %v512 = vsel %vm279, %v91, 0
  %v515 = vsel %vm279, %v92, 0
  %v518 = vsel %vm279, %v93, 0
  %v521 = vsel %vm279, %v94, 0
  %v524 = vsel %vm279, %v95, 0
  %v527 = vsel %vm279, %v96, 0
  %v530 = vsel %vm279, %v97, 0
  %v533 = vsel %vm279, %v98, 0
  %v536 = vsel %vm279, %v99, 0
  %v539 = vsel %vm279, %v100, 0
  %v542 = vsel %vm279, %v101, 0
  %v545 = vsel %vm279, %v102, 0
  %v548 = vsel %vm279, %v103, 0
  %v551 = vsel %vm279, %v104, 0
  %v554 = vsel %vm279, %v105, 0
  %v557 = vsel %vm279, %v106, 0
  %v560 = vsel %vm279, %v107, 0
  %v563 = vsel %vm279, %v108, 0
  %v566 = vsel %vm279, %v109, 0
  %v569 = vsel %vm279, %v110, 0
  %v572 = vsel %vm279, %v111, 0
  %v575 = vsel %vm279, %v112, 0
  %v578 = vsel %vm279, %v113, 0
  %v581 = vsel %vm279, %v114, 0
  %v584 = vsel %vm279, %v115, 0
  %v587 = vsel %vm279, %v116, 0
  %v590 = vsel %vm279, %v117, 0
  %v593 = vsel %vm279, %v118, 0
  %v596 = vsel %vm279, %v119, 0
  %v599 = vsel %vm279, %v120, 0
  %v602 = vsel %vm279, %v121, 0
  %v605 = vsel %vm279, %v122, 0
  %v608 = vsel %vm279, %v123, 0
  %v611 = vsel %vm279, %v124, 0
  %v614 = vsel %vm279, %v125, 0
  %v617 = vsel %vm279, %v126, 0
  %v620 = vsel %vm279, %v127, 0
  %v623 = vsel %vm279, %v128, 0
  %v626 = vsel %vm279, %v129, 0
  %v629 = vsel %vm279, %v130, 0
  %v632 = vsel %vm279, %v131, 0
  %v635 = vsel %vm279, %v132, 0
  %v638 = vsel %vm279, %v133, 0
  %v641 = vsel %vm279, %v134, 0
  %v644 = vsel %vm279, %v135, 0
  %v647 = vsel %vm279, %v136, 0
  %v650 = vsel %vm279, %v137, 0
  %v653 = vsel %vm279, %v138, 0
  %v656 = vsel %vm279, %v139, 0
  %v659 = vsel %vm279, %v140, 0
  %v662 = vsel %vm279, %v141, 0
  %v665 = vsel %vm279, %v142, 0
  %v668 = vsel %vm279, %v143, 0
  %v671 = vsel %vm279, %v144, 0
  %v674 = vsel %vm279, %v145, 0
  %v677 = vsel %vm279, %v146, 0
  %v680 = vsel %vm279, %v147, 0
  %v683 = vsel %vm279, %v148, 0
  %v686 = vsel %vm279, %v149, 0
  %v689 = vsel %vm279, %v150, 0
  %v692 = vsel %vm279, %v151, 0
  %v695 = vsel %vm279, %v152, 0
  %v698 = vsel %vm279, %v153, 0
  %v701 = vsel %vm279, %v154, 0
  %v704 = vsel %vm279, %v155, 0
  %v707 = vsel %vm279, %v156, 0
  %v710 = vsel %vm279, %v157, 0
  %v713 = vsel %vm279, %v158, 0
  %v716 = vsel %vm279, %v159, 0
  %v719 = vsel %vm279, %v160, 0
  %v722 = vsel %vm279, %v161, 0
  %v725 = vsel %vm279, %v162, 0
  %v728 = vsel %vm279, %v163, 0
  %v731 = vsel %vm279, %v164, 0
  %v734 = vsel %vm279, %v165, 0
  %v737 = vsel %vm279, %v166, 0
  %v740 = vsel %vm279, %v167, 0
  %v743 = vsel %vm279, %v168, 0
  %v746 = vsel %vm279, %v169, 0
  %v749 = vsel %vm279, %v170, 0
  %v752 = vsel %vm279, %v171, 0
  %v755 = vsel %vm279, %v172, 0
  %v758 = vsel %vm279, %v173, 0
  %v761 = vsel %vm279, %v174, 0
  %v764 = vsel %vm279, %v175, 0
  %v767 = vsel %vm279, %v176, 0
  %v770 = vsel %vm279, %v177, 0
  %v773 = vsel %vm279, %v178, 0
  %v776 = vsel %vm279, %v179, 0
  %v779 = vsel %vm279, %v180, 0
  %v782 = vsel %vm279, %v181, 0
  %v785 = vsel %vm279, %v182, 0
  %v788 = vsel %vm279, %v183, 0
  %v791 = vsel %vm279, %v184, 0
  %v794 = vsel %vm279, %v185, 0
  %v797 = vsel %vm279, %v186, 0
  %v800 = vsel %vm279, %v187, 0
  %v803 = vsel %vm279, %v188, 0
  %v806 = vsel %vm279, %v189, 0
  %v809 = vsel %vm279, %v190, 0
  %v812 = vsel %vm279, %v191, 0
  %v815 = vsel %vm279, %v192, 0
  %v818 = vsel %vm279, %v193, 0
  %v821 = vsel %vm279, %v194, 0
  %v824 = vsel %vm279, %v195, 0
  %v827 = vsel %vm279, %v196, 0
  %v830 = vsel %vm279, %v197, 0
  %v833 = vsel %vm279, %v198, 0
  %v836 = vsel %vm279, %v199, 0
  %v839 = vsel %vm279, %v200, 0
  %v842 = vsel %vm279, %v201, 0
  %v845 = vsel %vm279, %v202, 0
  %v848 = vsel %vm279, %v203, 0
  %v851 = vsel %vm279, %v204, 0
  %v854 = vsel %vm279, %v205, 0
  %v857 = vsel %vm279, %v206, 0
  %v860 = vsel %vm279, %v207, 0
  %v863 = vsel %vm279, %v208, 0
  %v866 = vsel %vm279, %v209, 0
  %v869 = vsel %vm279, %v210, 0
  %v872 = vsel %vm279, %v211, 0
  %v875 = vsel %vm279, %v212, 0
  %v878 = vsel %vm279, %v213, 0
  %v881 = vsel %vm279, %v214, 0
  %v884 = vsel %vm279, %v215, 0
  %v887 = vsel %vm279, %v216, 0
  %v890 = vsel %vm279, %v217, 0
  %v893 = vsel %vm279, %v218, 0
  %v896 = vsel %vm279, %v219, 0
  %v899 = vsel %vm279, %v220, 0
  %v902 = vsel %vm279, %v221, 0
  %v905 = vsel %vm279, %v222, 0
  %v908 = vsel %vm279, %v223, 0
  %v911 = vsel %vm279, %v224, 0
  %v914 = vsel %vm279, %v225, 0
  %v917 = vsel %vm279, %v226, 0
  %v920 = vsel %vm279, %v227, 0
  %v923 = vsel %vm279, %v228, 0
  %v926 = vsel %vm279, %v229, 0
  %v929 = vsel %vm279, %v230, 0
  %v932 = vsel %vm279, %v231, 0
  %v935 = vsel %vm279, %v232, 0
  %v938 = vsel %vm279, %v233, 0
  %v941 = vsel %vm279, %v234, 0
  %v944 = vsel %vm279, %v235, 0
  %v947 = vsel %vm279, %v236, 0
  %v950 = vsel %vm279, %v237, 0
  %v953 = vsel %vm279, %v238, 0
  %v956 = vsel %vm279, %v239, 0
  %v959 = vsel %vm279, %v240, 0
  %v962 = vsel %vm279, %v241, 0
  %v965 = vsel %vm279, %v242, 0
  %v968 = vsel %vm279, %v243, 0
  %v971 = vsel %vm279, %v244, 0
  %v974 = vsel %vm279, %v245, 0
  %v977 = vsel %vm279, %v246, 0
  %v980 = vsel %vm279, %v247, 0
  %v983 = vsel %vm279, %v248, 0
  %v986 = vsel %vm279, %v249, 0
  %v989 = vsel %vm279, %v250, 0
  %v992 = vsel %vm279, %v251, 0
  %v995 = vsel %vm279, %v252, 0
  %v998 = vsel %vm279, %v253, 0
  %v1001 = vsel %vm279, %v254, 0
  %v1004 = vsel %vm279, %v255, 0
  %v1007 = vsel %vm279, %v256, 0
  %v1010 = vsel %vm279, %v257, 0
  %v1013 = vsel %vm279, %v258, 0
  %v1016 = vsel %vm279, %v259, 0
  %v1019 = vsel %vm279, %v260, 0
  %v1022 = vsel %vm279, %v261, 0
  %v1025 = vsel %vm279, %v262, 0
  %v1028 = vsel %vm279, %v263, 0
  %v1031 = vsel %vm279, %v264, 0
  %v1034 = vsel %vm279, %v265, 0
  %v1037 = vsel %vm279, %v266, 0
  %v1040 = vsel %vm279, %v267, 0
  %v1043 = vsel %vm279, %v268, 0
  %v1046 = vsel %vm279, %v269, 0
  %vm1048 = vcmask 1040384
  %v1050 = vsel %vm1048, %v271, 0
  %1052 = vmatprep.subr.mxu0 0.0
  %1053 = vmatpush1.msra.mxu0 0.0
  %1054 = vmatprep.subr.mxu0 0.0
  %1055 = vmatpush1.msra.mxu0 0.0
  %1056 = vmatprep.subr.mxu0 0.0
  %1057 = vmatpush1.msra.mxu0 0.0
  %1058 = vmatprep.subr.mxu0 0.0
  %1059 = vmatpush1.msra.mxu0 0.0
  %1060 = vmatprep.subr.mxu0 0.0
  %1061 = vmatpush1.msra.mxu0 0.0
  %1062 = vmatprep.subr.mxu0 0.0
  %1063 = vmatpush1.msra.mxu0 0.0
  %1064 = vmatprep.subr.mxu0 0.0
  %1065 = vmatpush1.msra.mxu0 0.0
  %1066 = vmatprep.subr.mxu0 0.0
  %1067 = vmatpush1.msra.mxu0 0.0
  %1068 = vmatprep.subr.mxu0 0.0
  %1069 = vmatpush1.msra.mxu0 0.0
  %1070 = vmatprep.subr.mxu0 0.0
  %1071 = vmatpush1.msra.mxu0 0.0
  %1072 = vmatprep.subr.mxu0 0.0
  %1073 = vmatpush1.msra.mxu0 0.0
  %1074 = vmatprep.subr.mxu0 0.0
  %1075 = vmatpush1.msra.mxu0 0.0
  %1076 = vmatprep.subr.mxu0 0.0
  %1077 = vmatpush1.msra.mxu0 0.0
  %1078 = vmatprep.subr.mxu0 0.0
  %1079 = vmatpush1.msra.mxu0 0.0
  %1080 = vmatprep.subr.mxu0 0.0
  %1081 = vmatpush1.msra.mxu0 %v1050
  %1082 = vmatprep.subr.mxu0 0.0
  %1083 = vmatpush1.msra.mxu0 %v270
  %1084 = vmatprep.subr.mxu0 0.0
  %1085 = vmatpush2.msra.mxu0 0.0
  %1086 = vmatprep.subr.mxu0 0.0
  %1087 = vmatpush2.msra.mxu0 0.0
  %1088 = vmatprep.subr.mxu0 0.0
  %1089 = vmatpush2.msra.mxu0 0.0
  %1090 = vmatprep.subr.mxu0 0.0
  %1091 = vmatpush2.msra.mxu0 0.0
  %1092 = vmatprep.subr.mxu0 0.0
  %1093 = vmatpush2.msra.mxu0 0.0
  %1094 = vmatprep.subr.mxu0 0.0
  %1095 = vmatpush2.msra.mxu0 0.0
  %1096 = vmatprep.subr.mxu0 0.0
  %1097 = vmatpush2.msra.mxu0 0.0
  %1098 = vmatprep.subr.mxu0 0.0
  %1099 = vmatpush2.msra.mxu0 0.0
  %1100 = vmatprep.subr.mxu0 0.0
  %1101 = vmatpush2.msra.mxu0 0.0
  %1102 = vmatprep.subr.mxu0 0.0
  %1103 = vmatpush2.msra.mxu0 0.0
  %1104 = vmatprep.subr.mxu0 0.0
  %1105 = vmatpush2.msra.mxu0 0.0
  %1106 = vmatprep.subr.mxu0 0.0
  %1107 = vmatpush2.msra.mxu0 0.0
  %1108 = vmatprep.subr.mxu0 0.0
  %1109 = vmatpush2.msra.mxu0 0.0
  %1110 = vmatprep.subr.mxu0 0.0
  %1111 = vmatpush2.msra.mxu0 0.0
  %1112 = vmatprep.subr.mxu0 0.0
  %1113 = vmatpush2.msra.mxu0 0.0
  %1114 = vmatprep.subr.mxu0 0.0
  %1115 = vmatpush2.msra.mxu0 0.0
  %1116 = vmatprep.mubr.f32.mxu0 0.0
  %1117 = vmatmul.mubr.f32.gmra.mxu0 %v281
  %v1118 = vpop.f32.mrf.mxu0
  %v1119 = vadd.f32 %v277, %v1118
  %v1120 = vpop.f32.mrf.mxu0
  %1121 = vmatprep.mubr.f32.mxu0 0.0
  %1122 = vmatmul.mubr.f32.gmra.mxu0 %v284
  %v1123 = vpop.f32.mrf.mxu0
  %v1124 = vadd.f32 %v277, %v1123
  %v1125 = vpop.f32.mrf.mxu0
  %1126 = vmatprep.mubr.f32.mxu0 0.0
  %1127 = vmatmul.mubr.f32.gmra.mxu0 %v287
  %v1128 = vpop.f32.mrf.mxu0
  %v1129 = vadd.f32 %v277, %v1128
  %v1130 = vpop.f32.mrf.mxu0
  %1131 = vmatprep.mubr.f32.mxu0 0.0
  %1132 = vmatmul.mubr.f32.gmra.mxu0 %v290
  %v1133 = vpop.f32.mrf.mxu0
  %v1134 = vadd.f32 %v277, %v1133
  %v1135 = vpop.f32.mrf.mxu0
  %1136 = vmatprep.mubr.f32.mxu0 0.0
  %1137 = vmatmul.mubr.f32.gmra.mxu0 %v293
  %v1138 = vpop.f32.mrf.mxu0
  %v1139 = vadd.f32 %v277, %v1138
  %v1140 = vpop.f32.mrf.mxu0
  %1141 = vmatprep.mubr.f32.mxu0 0.0
  %1142 = vmatmul.mubr.f32.gmra.mxu0 %v296
  %v1143 = vpop.f32.mrf.mxu0
  %v1144 = vadd.f32 %v277, %v1143
  %v1145 = vpop.f32.mrf.mxu0
  %1146 = vmatprep.mubr.f32.mxu0 0.0
  %1147 = vmatmul.mubr.f32.gmra.mxu0 %v299
  %v1148 = vpop.f32.mrf.mxu0
  %v1149 = vadd.f32 %v277, %v1148
  %v1150 = vpop.f32.mrf.mxu0
  %1151 = vmatprep.mubr.f32.mxu0 0.0
  %1152 = vmatmul.mubr.f32.gmra.mxu0 %v302
  %v1153 = vpop.f32.mrf.mxu0
  %v1154 = vadd.f32 %v277, %v1153
  %v1155 = vpop.f32.mrf.mxu0
  %1156 = vmatprep.mubr.f32.mxu0 0.0
  %1157 = vmatmul.mubr.f32.gmra.mxu0 %v305
  %v1158 = vpop.f32.mrf.mxu0
  %v1159 = vadd.f32 %v277, %v1158
  %v1160 = vpop.f32.mrf.mxu0
  %1161 = vmatprep.mubr.f32.mxu0 0.0
  %1162 = vmatmul.mubr.f32.gmra.mxu0 %v308
  %v1163 = vpop.f32.mrf.mxu0
  %v1164 = vadd.f32 %v277, %v1163
  %v1165 = vpop.f32.mrf.mxu0
  %1166 = vmatprep.mubr.f32.mxu0 0.0
  %1167 = vmatmul.mubr.f32.gmra.mxu0 %v311
  %v1168 = vpop.f32.mrf.mxu0
  %v1169 = vadd.f32 %v277, %v1168
  %v1170 = vpop.f32.mrf.mxu0
  %1171 = vmatprep.mubr.f32.mxu0 0.0
  %1172 = vmatmul.mubr.f32.gmra.mxu0 %v314
  %v1173 = vpop.f32.mrf.mxu0
  %v1174 = vadd.f32 %v277, %v1173
  %v1175 = vpop.f32.mrf.mxu0
  %1176 = vmatprep.mubr.f32.mxu0 0.0
  %1177 = vmatmul.mubr.f32.gmra.mxu0 %v317
  %v1178 = vpop.f32.mrf.mxu0
  %v1179 = vadd.f32 %v277, %v1178
  %v1180 = vpop.f32.mrf.mxu0
  %1181 = vmatprep.mubr.f32.mxu0 0.0
  %1182 = vmatmul.mubr.f32.gmra.mxu0 %v320
  %v1183 = vpop.f32.mrf.mxu0
  %v1184 = vadd.f32 %v277, %v1183
  %v1185 = vpop.f32.mrf.mxu0
  %1186 = vmatprep.mubr.f32.mxu0 0.0
  %1187 = vmatmul.mubr.f32.gmra.mxu0 %v323
  %v1188 = vpop.f32.mrf.mxu0
  %v1189 = vadd.f32 %v277, %v1188
  %v1190 = vpop.f32.mrf.mxu0
  %1191 = vmatprep.mubr.f32.mxu0 0.0
  %1192 = vmatmul.mubr.f32.gmra.mxu0 %v326
  %v1193 = vpop.f32.mrf.mxu0
  %v1194 = vadd.f32 %v277, %v1193
  %v1195 = vpop.f32.mrf.mxu0
  %1196 = vmatprep.mubr.f32.mxu0 0.0
  %1197 = vmatmul.mubr.f32.gmra.mxu0 %v329
  %v1198 = vpop.f32.mrf.mxu0
  %v1199 = vadd.f32 %v277, %v1198
  %v1200 = vpop.f32.mrf.mxu0
  %1201 = vmatprep.mubr.f32.mxu0 0.0
  %1202 = vmatmul.mubr.f32.gmra.mxu0 %v332
  %v1203 = vpop.f32.mrf.mxu0
  %v1204 = vadd.f32 %v277, %v1203
  %v1205 = vpop.f32.mrf.mxu0
  %1206 = vmatprep.mubr.f32.mxu0 0.0
  %1207 = vmatmul.mubr.f32.gmra.mxu0 %v335
  %v1208 = vpop.f32.mrf.mxu0
  %v1209 = vadd.f32 %v277, %v1208
  %v1210 = vpop.f32.mrf.mxu0
  %1211 = vmatprep.mubr.f32.mxu0 0.0
  %1212 = vmatmul.mubr.f32.gmra.mxu0 %v338
  %v1213 = vpop.f32.mrf.mxu0
  %v1214 = vadd.f32 %v277, %v1213
  %v1215 = vpop.f32.mrf.mxu0
  %1216 = vmatprep.mubr.f32.mxu0 0.0
  %1217 = vmatmul.mubr.f32.gmra.mxu0 %v341
  %v1218 = vpop.f32.mrf.mxu0
  %v1219 = vadd.f32 %v277, %v1218
  %v1220 = vpop.f32.mrf.mxu0
  %1221 = vmatprep.mubr.f32.mxu0 0.0
  %1222 = vmatmul.mubr.f32.gmra.mxu0 %v344
  %v1223 = vpop.f32.mrf.mxu0
  %v1224 = vadd.f32 %v277, %v1223
  %v1225 = vpop.f32.mrf.mxu0
  %1226 = vmatprep.mubr.f32.mxu0 0.0
  %1227 = vmatmul.mubr.f32.gmra.mxu0 %v347
  %v1228 = vpop.f32.mrf.mxu0
  %v1229 = vadd.f32 %v277, %v1228
  %v1230 = vpop.f32.mrf.mxu0
  %1231 = vmatprep.mubr.f32.mxu0 0.0
  %1232 = vmatmul.mubr.f32.gmra.mxu0 %v350
  %v1233 = vpop.f32.mrf.mxu0
  %v1234 = vadd.f32 %v277, %v1233
  %v1235 = vpop.f32.mrf.mxu0
  %1236 = vmatprep.mubr.f32.mxu0 0.0
  %1237 = vmatmul.mubr.f32.gmra.mxu0 %v353
  %v1238 = vpop.f32.mrf.mxu0
  %v1239 = vadd.f32 %v277, %v1238
  %v1240 = vpop.f32.mrf.mxu0
  %1241 = vmatprep.mubr.f32.mxu0 0.0
  %1242 = vmatmul.mubr.f32.gmra.mxu0 %v356
  %v1243 = vpop.f32.mrf.mxu0
  %v1244 = vadd.f32 %v277, %v1243
  %v1245 = vpop.f32.mrf.mxu0
  %1246 = vmatprep.mubr.f32.mxu0 0.0
  %1247 = vmatmul.mubr.f32.gmra.mxu0 %v359
  %v1248 = vpop.f32.mrf.mxu0
  %v1249 = vadd.f32 %v277, %v1248
  %v1250 = vpop.f32.mrf.mxu0
  %1251 = vmatprep.mubr.f32.mxu0 0.0
  %1252 = vmatmul.mubr.f32.gmra.mxu0 %v362
  %v1253 = vpop.f32.mrf.mxu0
  %v1254 = vadd.f32 %v277, %v1253
  %v1255 = vpop.f32.mrf.mxu0
  %1256 = vmatprep.mubr.f32.mxu0 0.0
  %1257 = vmatmul.mubr.f32.gmra.mxu0 %v365
  %v1258 = vpop.f32.mrf.mxu0
  %v1259 = vadd.f32 %v277, %v1258
  %v1260 = vpop.f32.mrf.mxu0
  %1261 = vmatprep.mubr.f32.mxu0 0.0
  %1262 = vmatmul.mubr.f32.gmra.mxu0 %v368
  %v1263 = vpop.f32.mrf.mxu0
  %v1264 = vadd.f32 %v277, %v1263
  %v1265 = vpop.f32.mrf.mxu0
  %1266 = vmatprep.mubr.f32.mxu0 0.0
  %1267 = vmatmul.mubr.f32.gmra.mxu0 %v371
  %v1268 = vpop.f32.mrf.mxu0
  %v1269 = vadd.f32 %v277, %v1268
  %v1270 = vpop.f32.mrf.mxu0
  %1271 = vmatprep.mubr.f32.mxu0 0.0
  %1272 = vmatmul.mubr.f32.gmra.mxu0 %v374
  %v1273 = vpop.f32.mrf.mxu0
  %v1274 = vadd.f32 %v277, %v1273
  %v1275 = vpop.f32.mrf.mxu0
  %1276 = vmatprep.mubr.f32.mxu0 0.0
  %1277 = vmatmul.mubr.f32.gmra.mxu0 %v377
  %v1278 = vpop.f32.mrf.mxu0
  %v1279 = vadd.f32 %v277, %v1278
  %v1280 = vpop.f32.mrf.mxu0
  %1281 = vmatprep.mubr.f32.mxu0 0.0
  %1282 = vmatmul.mubr.f32.gmra.mxu0 %v380
  %v1283 = vpop.f32.mrf.mxu0
  %v1284 = vadd.f32 %v277, %v1283
  %v1285 = vpop.f32.mrf.mxu0
  %1286 = vmatprep.mubr.f32.mxu0 0.0
  %1287 = vmatmul.mubr.f32.gmra.mxu0 %v383
  %v1288 = vpop.f32.mrf.mxu0
  %v1289 = vadd.f32 %v277, %v1288
  %v1290 = vpop.f32.mrf.mxu0
  %1291 = vmatprep.mubr.f32.mxu0 0.0
  %1292 = vmatmul.mubr.f32.gmra.mxu0 %v386
  %v1293 = vpop.f32.mrf.mxu0
  %v1294 = vadd.f32 %v277, %v1293
  %v1295 = vpop.f32.mrf.mxu0
  %1296 = vmatprep.mubr.f32.mxu0 0.0
  %1297 = vmatmul.mubr.f32.gmra.mxu0 %v389
  %v1298 = vpop.f32.mrf.mxu0
  %v1299 = vadd.f32 %v277, %v1298
  %v1300 = vpop.f32.mrf.mxu0
  %1301 = vmatprep.mubr.f32.mxu0 0.0
  %1302 = vmatmul.mubr.f32.gmra.mxu0 %v392
  %v1303 = vpop.f32.mrf.mxu0
  %v1304 = vadd.f32 %v277, %v1303
  %v1305 = vpop.f32.mrf.mxu0
  %1306 = vmatprep.mubr.f32.mxu0 0.0
  %1307 = vmatmul.mubr.f32.gmra.mxu0 %v395
  %v1308 = vpop.f32.mrf.mxu0
  %v1309 = vadd.f32 %v277, %v1308
  %v1310 = vpop.f32.mrf.mxu0
  %1311 = vmatprep.mubr.f32.mxu0 0.0
  %1312 = vmatmul.mubr.f32.gmra.mxu0 %v398
  %v1313 = vpop.f32.mrf.mxu0
  %v1314 = vadd.f32 %v277, %v1313
  %v1315 = vpop.f32.mrf.mxu0
  %1316 = vmatprep.mubr.f32.mxu0 0.0
  %1317 = vmatmul.mubr.f32.gmra.mxu0 %v401
  %v1318 = vpop.f32.mrf.mxu0
  %v1319 = vadd.f32 %v277, %v1318
  %v1320 = vpop.f32.mrf.mxu0
  %1321 = vmatprep.mubr.f32.mxu0 0.0
  %1322 = vmatmul.mubr.f32.gmra.mxu0 %v404
  %v1323 = vpop.f32.mrf.mxu0
  %v1324 = vadd.f32 %v277, %v1323
  %v1325 = vpop.f32.mrf.mxu0
  %1326 = vmatprep.mubr.f32.mxu0 0.0
  %1327 = vmatmul.mubr.f32.gmra.mxu0 %v407
  %v1328 = vpop.f32.mrf.mxu0
  %v1329 = vadd.f32 %v277, %v1328
  %v1330 = vpop.f32.mrf.mxu0
  %1331 = vmatprep.mubr.f32.mxu0 0.0
  %1332 = vmatmul.mubr.f32.gmra.mxu0 %v410
  %v1333 = vpop.f32.mrf.mxu0
  %v1334 = vadd.f32 %v277, %v1333
  %v1335 = vpop.f32.mrf.mxu0
  %1336 = vmatprep.mubr.f32.mxu0 0.0
  %1337 = vmatmul.mubr.f32.gmra.mxu0 %v413
  %v1338 = vpop.f32.mrf.mxu0
  %v1339 = vadd.f32 %v277, %v1338
  %v1340 = vpop.f32.mrf.mxu0
  %1341 = vmatprep.mubr.f32.mxu0 0.0
  %1342 = vmatmul.mubr.f32.gmra.mxu0 %v416
  %v1343 = vpop.f32.mrf.mxu0
  %v1344 = vadd.f32 %v277, %v1343
  %v1345 = vpop.f32.mrf.mxu0
  %1346 = vmatprep.mubr.f32.mxu0 0.0
  %1347 = vmatmul.mubr.f32.gmra.mxu0 %v419
  %v1348 = vpop.f32.mrf.mxu0
  %v1349 = vadd.f32 %v277, %v1348
  %v1350 = vpop.f32.mrf.mxu0
  %1351 = vmatprep.mubr.f32.mxu0 0.0
  %1352 = vmatmul.mubr.f32.gmra.mxu0 %v422
  %v1353 = vpop.f32.mrf.mxu0
  %v1354 = vadd.f32 %v277, %v1353
  %v1355 = vpop.f32.mrf.mxu0
  %1356 = vmatprep.mubr.f32.mxu0 0.0
  %1357 = vmatmul.mubr.f32.gmra.mxu0 %v425
  %v1358 = vpop.f32.mrf.mxu0
  %v1359 = vadd.f32 %v277, %v1358
  %v1360 = vpop.f32.mrf.mxu0
  %1361 = vmatprep.mubr.f32.mxu0 0.0
  %1362 = vmatmul.mubr.f32.gmra.mxu0 %v428
  %v1363 = vpop.f32.mrf.mxu0
  %v1364 = vadd.f32 %v277, %v1363
  %v1365 = vpop.f32.mrf.mxu0
  %1366 = vmatprep.mubr.f32.mxu0 0.0
  %1367 = vmatmul.mubr.f32.gmra.mxu0 %v431
  %v1368 = vpop.f32.mrf.mxu0
  %v1369 = vadd.f32 %v277, %v1368
  %v1370 = vpop.f32.mrf.mxu0
  %1371 = vmatprep.mubr.f32.mxu0 0.0
  %1372 = vmatmul.mubr.f32.gmra.mxu0 %v434
  %v1373 = vpop.f32.mrf.mxu0
  %v1374 = vadd.f32 %v277, %v1373
  %v1375 = vpop.f32.mrf.mxu0
  %1376 = vmatprep.mubr.f32.mxu0 0.0
  %1377 = vmatmul.mubr.f32.gmra.mxu0 %v437
  %v1378 = vpop.f32.mrf.mxu0
  %v1379 = vadd.f32 %v277, %v1378
  %v1380 = vpop.f32.mrf.mxu0
  %1381 = vmatprep.mubr.f32.mxu0 0.0
  %1382 = vmatmul.mubr.f32.gmra.mxu0 %v440
  %v1383 = vpop.f32.mrf.mxu0
  %v1384 = vadd.f32 %v277, %v1383
  %v1385 = vpop.f32.mrf.mxu0
  %1386 = vmatprep.mubr.f32.mxu0 0.0
  %1387 = vmatmul.mubr.f32.gmra.mxu0 %v443
  %v1388 = vpop.f32.mrf.mxu0
  %v1389 = vadd.f32 %v277, %v1388
  %v1390 = vpop.f32.mrf.mxu0
  %1391 = vmatprep.mubr.f32.mxu0 0.0
  %1392 = vmatmul.mubr.f32.gmra.mxu0 %v446
  %v1393 = vpop.f32.mrf.mxu0
  %v1394 = vadd.f32 %v277, %v1393
  %v1395 = vpop.f32.mrf.mxu0
  %1396 = vmatprep.mubr.f32.mxu0 0.0
  %1397 = vmatmul.mubr.f32.gmra.mxu0 %v449
  %v1398 = vpop.f32.mrf.mxu0
  %v1399 = vadd.f32 %v277, %v1398
  %v1400 = vpop.f32.mrf.mxu0
  %1401 = vmatprep.mubr.f32.mxu0 0.0
  %1402 = vmatmul.mubr.f32.gmra.mxu0 %v452
  %v1403 = vpop.f32.mrf.mxu0
  %v1404 = vadd.f32 %v277, %v1403
  %v1405 = vpop.f32.mrf.mxu0
  %1406 = vmatprep.mubr.f32.mxu0 0.0
  %1407 = vmatmul.mubr.f32.gmra.mxu0 %v455
  %v1408 = vpop.f32.mrf.mxu0
  %v1409 = vadd.f32 %v277, %v1408
  %v1410 = vpop.f32.mrf.mxu0
  %1411 = vmatprep.mubr.f32.mxu0 0.0
  %1412 = vmatmul.mubr.f32.gmra.mxu0 %v458
  %v1413 = vpop.f32.mrf.mxu0
  %v1414 = vadd.f32 %v277, %v1413
  %v1415 = vpop.f32.mrf.mxu0
  %1416 = vmatprep.mubr.f32.mxu0 0.0
  %1417 = vmatmul.mubr.f32.gmra.mxu0 %v461
  %v1418 = vpop.f32.mrf.mxu0
  %v1419 = vadd.f32 %v277, %v1418
  %v1420 = vpop.f32.mrf.mxu0
  %1421 = vmatprep.mubr.f32.mxu0 0.0
  %1422 = vmatmul.mubr.f32.gmra.mxu0 %v464
  %v1423 = vpop.f32.mrf.mxu0
  %v1424 = vadd.f32 %v277, %v1423
  %v1425 = vpop.f32.mrf.mxu0
  %1426 = vmatprep.mubr.f32.mxu0 0.0
  %1427 = vmatmul.mubr.f32.gmra.mxu0 %v467
  %v1428 = vpop.f32.mrf.mxu0
  %v1429 = vadd.f32 %v277, %v1428
  %v1430 = vpop.f32.mrf.mxu0
  %1431 = vmatprep.mubr.f32.mxu0 0.0
  %1432 = vmatmul.mubr.f32.gmra.mxu0 %v470
  %v1433 = vpop.f32.mrf.mxu0
  %v1434 = vadd.f32 %v277, %v1433
  %v1435 = vpop.f32.mrf.mxu0
  %1436 = vmatprep.mubr.f32.mxu0 0.0
  %1437 = vmatmul.mubr.f32.gmra.mxu0 %v473
  %v1438 = vpop.f32.mrf.mxu0
  %v1439 = vadd.f32 %v277, %v1438
  %v1440 = vpop.f32.mrf.mxu0
  %1441 = vmatprep.mubr.f32.mxu0 0.0
  %1442 = vmatmul.mubr.f32.gmra.mxu0 %v476
  %v1443 = vpop.f32.mrf.mxu0
  %v1444 = vadd.f32 %v277, %v1443
  %v1445 = vpop.f32.mrf.mxu0
  %1446 = vmatprep.mubr.f32.mxu0 0.0
  %1447 = vmatmul.mubr.f32.gmra.mxu0 %v479
  %v1448 = vpop.f32.mrf.mxu0
  %v1449 = vadd.f32 %v277, %v1448
  %v1450 = vpop.f32.mrf.mxu0
  %1451 = vmatprep.mubr.f32.mxu0 0.0
  %1452 = vmatmul.mubr.f32.gmra.mxu0 %v482
  %v1453 = vpop.f32.mrf.mxu0
  %v1454 = vadd.f32 %v277, %v1453
  %v1455 = vpop.f32.mrf.mxu0
  %1456 = vmatprep.mubr.f32.mxu0 0.0
  %1457 = vmatmul.mubr.f32.gmra.mxu0 %v485
  %v1458 = vpop.f32.mrf.mxu0
  %v1459 = vadd.f32 %v277, %v1458
  %v1460 = vpop.f32.mrf.mxu0
  %1461 = vmatprep.mubr.f32.mxu0 0.0
  %1462 = vmatmul.mubr.f32.gmra.mxu0 %v488
  %v1463 = vpop.f32.mrf.mxu0
  %v1464 = vadd.f32 %v277, %v1463
  %v1465 = vpop.f32.mrf.mxu0
  %1466 = vmatprep.mubr.f32.mxu0 0.0
  %1467 = vmatmul.mubr.f32.gmra.mxu0 %v491
  %v1468 = vpop.f32.mrf.mxu0
  %v1469 = vadd.f32 %v277, %v1468
  %v1470 = vpop.f32.mrf.mxu0
  %1471 = vmatprep.mubr.f32.mxu0 0.0
  %1472 = vmatmul.mubr.f32.gmra.mxu0 %v494
  %v1473 = vpop.f32.mrf.mxu0
  %v1474 = vadd.f32 %v277, %v1473
  %v1475 = vpop.f32.mrf.mxu0
  %1476 = vmatprep.mubr.f32.mxu0 0.0
  %1477 = vmatmul.mubr.f32.gmra.mxu0 %v497
  %v1478 = vpop.f32.mrf.mxu0
  %v1479 = vadd.f32 %v277, %v1478
  %v1480 = vpop.f32.mrf.mxu0
  %1481 = vmatprep.mubr.f32.mxu0 0.0
  %1482 = vmatmul.mubr.f32.gmra.mxu0 %v500
  %v1483 = vpop.f32.mrf.mxu0
  %v1484 = vadd.f32 %v277, %v1483
  %v1485 = vpop.f32.mrf.mxu0
  %1486 = vmatprep.mubr.f32.mxu0 0.0
  %1487 = vmatmul.mubr.f32.gmra.mxu0 %v503
  %v1488 = vpop.f32.mrf.mxu0
  %v1489 = vadd.f32 %v277, %v1488
  %v1490 = vpop.f32.mrf.mxu0
  %1491 = vmatprep.mubr.f32.mxu0 0.0
  %1492 = vmatmul.mubr.f32.gmra.mxu0 %v506
  %v1493 = vpop.f32.mrf.mxu0
  %v1494 = vadd.f32 %v277, %v1493
  %v1495 = vpop.f32.mrf.mxu0
  %1496 = vmatprep.mubr.f32.mxu0 0.0
  %1497 = vmatmul.mubr.f32.gmra.mxu0 %v509
  %v1498 = vpop.f32.mrf.mxu0
  %v1499 = vadd.f32 %v277, %v1498
  %v1500 = vpop.f32.mrf.mxu0
  %1501 = vmatprep.mubr.f32.mxu0 0.0
  %1502 = vmatmul.mubr.f32.gmra.mxu0 %v512
  %v1503 = vpop.f32.mrf.mxu0
  %v1504 = vadd.f32 %v277, %v1503
  %v1505 = vpop.f32.mrf.mxu0
  %1506 = vmatprep.mubr.f32.mxu0 0.0
  %1507 = vmatmul.mubr.f32.gmra.mxu0 %v515
  %v1508 = vpop.f32.mrf.mxu0
  %v1509 = vadd.f32 %v277, %v1508
  %v1510 = vpop.f32.mrf.mxu0
  %1511 = vmatprep.mubr.f32.mxu0 0.0
  %1512 = vmatmul.mubr.f32.gmra.mxu0 %v518
  %v1513 = vpop.f32.mrf.mxu0
  %v1514 = vadd.f32 %v277, %v1513
  %v1515 = vpop.f32.mrf.mxu0
  %1516 = vmatprep.mubr.f32.mxu0 0.0
  %1517 = vmatmul.mubr.f32.gmra.mxu0 %v521
  %v1518 = vpop.f32.mrf.mxu0
  %v1519 = vadd.f32 %v277, %v1518
  %v1520 = vpop.f32.mrf.mxu0
  %1521 = vmatprep.mubr.f32.mxu0 0.0
  %1522 = vmatmul.mubr.f32.gmra.mxu0 %v524
  %v1523 = vpop.f32.mrf.mxu0
  %v1524 = vadd.f32 %v277, %v1523
  %v1525 = vpop.f32.mrf.mxu0
  %1526 = vmatprep.mubr.f32.mxu0 0.0
  %1527 = vmatmul.mubr.f32.gmra.mxu0 %v527
  %v1528 = vpop.f32.mrf.mxu0
  %v1529 = vadd.f32 %v277, %v1528
  %v1530 = vpop.f32.mrf.mxu0
  %1531 = vmatprep.mubr.f32.mxu0 0.0
  %1532 = vmatmul.mubr.f32.gmra.mxu0 %v530
  %v1533 = vpop.f32.mrf.mxu0
  %v1534 = vadd.f32 %v277, %v1533
  %v1535 = vpop.f32.mrf.mxu0
  %1536 = vmatprep.mubr.f32.mxu0 0.0
  %1537 = vmatmul.mubr.f32.gmra.mxu0 %v533
  %v1538 = vpop.f32.mrf.mxu0
  %v1539 = vadd.f32 %v277, %v1538
  %v1540 = vpop.f32.mrf.mxu0
  %1541 = vmatprep.mubr.f32.mxu0 0.0
  %1542 = vmatmul.mubr.f32.gmra.mxu0 %v536
  %v1543 = vpop.f32.mrf.mxu0
  %v1544 = vadd.f32 %v277, %v1543
  %v1545 = vpop.f32.mrf.mxu0
  %1546 = vmatprep.mubr.f32.mxu0 0.0
  %1547 = vmatmul.mubr.f32.gmra.mxu0 %v539
  %v1548 = vpop.f32.mrf.mxu0
  %v1549 = vadd.f32 %v277, %v1548
  %v1550 = vpop.f32.mrf.mxu0
  %1551 = vmatprep.mubr.f32.mxu0 0.0
  %1552 = vmatmul.mubr.f32.gmra.mxu0 %v542
  %v1553 = vpop.f32.mrf.mxu0
  %v1554 = vadd.f32 %v277, %v1553
  %v1555 = vpop.f32.mrf.mxu0
  %1556 = vmatprep.mubr.f32.mxu0 0.0
  %1557 = vmatmul.mubr.f32.gmra.mxu0 %v545
  %v1558 = vpop.f32.mrf.mxu0
  %v1559 = vadd.f32 %v277, %v1558
  %v1560 = vpop.f32.mrf.mxu0
  %1561 = vmatprep.mubr.f32.mxu0 0.0
  %1562 = vmatmul.mubr.f32.gmra.mxu0 %v548
  %v1563 = vpop.f32.mrf.mxu0
  %v1564 = vadd.f32 %v277, %v1563
  %v1565 = vpop.f32.mrf.mxu0
  %1566 = vmatprep.mubr.f32.mxu0 0.0
  %1567 = vmatmul.mubr.f32.gmra.mxu0 %v551
  %v1568 = vpop.f32.mrf.mxu0
  %v1569 = vadd.f32 %v277, %v1568
  %v1570 = vpop.f32.mrf.mxu0
  %1571 = vmatprep.mubr.f32.mxu0 0.0
  %1572 = vmatmul.mubr.f32.gmra.mxu0 %v554
  %v1573 = vpop.f32.mrf.mxu0
  %v1574 = vadd.f32 %v277, %v1573
  %v1575 = vpop.f32.mrf.mxu0
  %1576 = vmatprep.mubr.f32.mxu0 0.0
  %1577 = vmatmul.mubr.f32.gmra.mxu0 %v557
  %v1578 = vpop.f32.mrf.mxu0
  %v1579 = vadd.f32 %v277, %v1578
  %v1580 = vpop.f32.mrf.mxu0
  %1581 = vmatprep.mubr.f32.mxu0 0.0
  %1582 = vmatmul.mubr.f32.gmra.mxu0 %v560
  %v1583 = vpop.f32.mrf.mxu0
  %v1584 = vadd.f32 %v277, %v1583
  %v1585 = vpop.f32.mrf.mxu0
  %1586 = vmatprep.mubr.f32.mxu0 0.0
  %1587 = vmatmul.mubr.f32.gmra.mxu0 %v563
  %v1588 = vpop.f32.mrf.mxu0
  %v1589 = vadd.f32 %v277, %v1588
  %v1590 = vpop.f32.mrf.mxu0
  %1591 = vmatprep.mubr.f32.mxu0 0.0
  %1592 = vmatmul.mubr.f32.gmra.mxu0 %v566
  %v1593 = vpop.f32.mrf.mxu0
  %v1594 = vadd.f32 %v277, %v1593
  %v1595 = vpop.f32.mrf.mxu0
  %1596 = vmatprep.mubr.f32.mxu0 0.0
  %1597 = vmatmul.mubr.f32.gmra.mxu0 %v569
  %v1598 = vpop.f32.mrf.mxu0
  %v1599 = vadd.f32 %v277, %v1598
  %v1600 = vpop.f32.mrf.mxu0
  %1601 = vmatprep.mubr.f32.mxu0 0.0
  %1602 = vmatmul.mubr.f32.gmra.mxu0 %v572
  %v1603 = vpop.f32.mrf.mxu0
  %v1604 = vadd.f32 %v277, %v1603
  %v1605 = vpop.f32.mrf.mxu0
  %1606 = vmatprep.mubr.f32.mxu0 0.0
  %1607 = vmatmul.mubr.f32.gmra.mxu0 %v575
  %v1608 = vpop.f32.mrf.mxu0
  %v1609 = vadd.f32 %v277, %v1608
  %v1610 = vpop.f32.mrf.mxu0
  %1611 = vmatprep.mubr.f32.mxu0 0.0
  %1612 = vmatmul.mubr.f32.gmra.mxu0 %v578
  %v1613 = vpop.f32.mrf.mxu0
  %v1614 = vadd.f32 %v277, %v1613
  %v1615 = vpop.f32.mrf.mxu0
  %1616 = vmatprep.mubr.f32.mxu0 0.0
  %1617 = vmatmul.mubr.f32.gmra.mxu0 %v581
  %v1618 = vpop.f32.mrf.mxu0
  %v1619 = vadd.f32 %v277, %v1618
  %v1620 = vpop.f32.mrf.mxu0
  %1621 = vmatprep.mubr.f32.mxu0 0.0
  %1622 = vmatmul.mubr.f32.gmra.mxu0 %v584
  %v1623 = vpop.f32.mrf.mxu0
  %v1624 = vadd.f32 %v277, %v1623
  %v1625 = vpop.f32.mrf.mxu0
  %1626 = vmatprep.mubr.f32.mxu0 0.0
  %1627 = vmatmul.mubr.f32.gmra.mxu0 %v587
  %v1628 = vpop.f32.mrf.mxu0
  %v1629 = vadd.f32 %v277, %v1628
  %v1630 = vpop.f32.mrf.mxu0
  %1631 = vmatprep.mubr.f32.mxu0 0.0
  %1632 = vmatmul.mubr.f32.gmra.mxu0 %v590
  %v1633 = vpop.f32.mrf.mxu0
  %v1634 = vadd.f32 %v277, %v1633
  %v1635 = vpop.f32.mrf.mxu0
  %1636 = vmatprep.mubr.f32.mxu0 0.0
  %1637 = vmatmul.mubr.f32.gmra.mxu0 %v593
  %v1638 = vpop.f32.mrf.mxu0
  %v1639 = vadd.f32 %v277, %v1638
  %v1640 = vpop.f32.mrf.mxu0
  %1641 = vmatprep.mubr.f32.mxu0 0.0
  %1642 = vmatmul.mubr.f32.gmra.mxu0 %v596
  %v1643 = vpop.f32.mrf.mxu0
  %v1644 = vadd.f32 %v277, %v1643
  %v1645 = vpop.f32.mrf.mxu0
  %1646 = vmatprep.mubr.f32.mxu0 0.0
  %1647 = vmatmul.mubr.f32.gmra.mxu0 %v599
  %v1648 = vpop.f32.mrf.mxu0
  %v1649 = vadd.f32 %v277, %v1648
  %v1650 = vpop.f32.mrf.mxu0
  %1651 = vmatprep.mubr.f32.mxu0 0.0
  %1652 = vmatmul.mubr.f32.gmra.mxu0 %v602
  %v1653 = vpop.f32.mrf.mxu0
  %v1654 = vadd.f32 %v277, %v1653
  %v1655 = vpop.f32.mrf.mxu0
  %1656 = vmatprep.mubr.f32.mxu0 0.0
  %1657 = vmatmul.mubr.f32.gmra.mxu0 %v605
  %v1658 = vpop.f32.mrf.mxu0
  %v1659 = vadd.f32 %v277, %v1658
  %v1660 = vpop.f32.mrf.mxu0
  %1661 = vmatprep.mubr.f32.mxu0 0.0
  %1662 = vmatmul.mubr.f32.gmra.mxu0 %v608
  %v1663 = vpop.f32.mrf.mxu0
  %v1664 = vadd.f32 %v277, %v1663
  %v1665 = vpop.f32.mrf.mxu0
  %1666 = vmatprep.mubr.f32.mxu0 0.0
  %1667 = vmatmul.mubr.f32.gmra.mxu0 %v611
  %v1668 = vpop.f32.mrf.mxu0
  %v1669 = vadd.f32 %v277, %v1668
  %v1670 = vpop.f32.mrf.mxu0
  %1671 = vmatprep.mubr.f32.mxu0 0.0
  %1672 = vmatmul.mubr.f32.gmra.mxu0 %v614
  %v1673 = vpop.f32.mrf.mxu0
  %v1674 = vadd.f32 %v277, %v1673
  %v1675 = vpop.f32.mrf.mxu0
  %1676 = vmatprep.mubr.f32.mxu0 0.0
  %1677 = vmatmul.mubr.f32.gmra.mxu0 %v617
  %v1678 = vpop.f32.mrf.mxu0
  %v1679 = vadd.f32 %v277, %v1678
  %v1680 = vpop.f32.mrf.mxu0
  %1681 = vmatprep.mubr.f32.mxu0 0.0
  %1682 = vmatmul.mubr.f32.gmra.mxu0 %v620
  %v1683 = vpop.f32.mrf.mxu0
  %v1684 = vadd.f32 %v277, %v1683
  %v1685 = vpop.f32.mrf.mxu0
  %1686 = vmatprep.mubr.f32.mxu0 0.0
  %1687 = vmatmul.mubr.f32.gmra.mxu0 %v623
  %v1688 = vpop.f32.mrf.mxu0
  %v1689 = vadd.f32 %v277, %v1688
  %v1690 = vpop.f32.mrf.mxu0
  %1691 = vmatprep.mubr.f32.mxu0 0.0
  %1692 = vmatmul.mubr.f32.gmra.mxu0 %v626
  %v1693 = vpop.f32.mrf.mxu0
  %v1694 = vadd.f32 %v277, %v1693
  %v1695 = vpop.f32.mrf.mxu0
  %1696 = vmatprep.mubr.f32.mxu0 0.0
  %1697 = vmatmul.mubr.f32.gmra.mxu0 %v629
  %v1698 = vpop.f32.mrf.mxu0
  %v1699 = vadd.f32 %v277, %v1698
  %v1700 = vpop.f32.mrf.mxu0
  %1701 = vmatprep.mubr.f32.mxu0 0.0
  %1702 = vmatmul.mubr.f32.gmra.mxu0 %v632
  %v1703 = vpop.f32.mrf.mxu0
  %v1704 = vadd.f32 %v277, %v1703
  %v1705 = vpop.f32.mrf.mxu0
  %1706 = vmatprep.mubr.f32.mxu0 0.0
  %1707 = vmatmul.mubr.f32.gmra.mxu0 %v635
  %v1708 = vpop.f32.mrf.mxu0
  %v1709 = vadd.f32 %v277, %v1708
  %v1710 = vpop.f32.mrf.mxu0
  %1711 = vmatprep.mubr.f32.mxu0 0.0
  %1712 = vmatmul.mubr.f32.gmra.mxu0 %v638
  %v1713 = vpop.f32.mrf.mxu0
  %v1714 = vadd.f32 %v277, %v1713
  %v1715 = vpop.f32.mrf.mxu0
  %1716 = vmatprep.mubr.f32.mxu0 0.0
  %1717 = vmatmul.mubr.f32.gmra.mxu0 %v641
  %v1718 = vpop.f32.mrf.mxu0
  %v1719 = vadd.f32 %v277, %v1718
  %v1720 = vpop.f32.mrf.mxu0
  %1721 = vmatprep.mubr.f32.mxu0 0.0
  %1722 = vmatmul.mubr.f32.gmra.mxu0 %v644
  %v1723 = vpop.f32.mrf.mxu0
  %v1724 = vadd.f32 %v277, %v1723
  %v1725 = vpop.f32.mrf.mxu0
  %1726 = vmatprep.mubr.f32.mxu0 0.0
  %1727 = vmatmul.mubr.f32.gmra.mxu0 %v647
  %v1728 = vpop.f32.mrf.mxu0
  %v1729 = vadd.f32 %v277, %v1728
  %v1730 = vpop.f32.mrf.mxu0
  %1731 = vmatprep.mubr.f32.mxu0 0.0
  %1732 = vmatmul.mubr.f32.gmra.mxu0 %v650
  %v1733 = vpop.f32.mrf.mxu0
  %v1734 = vadd.f32 %v277, %v1733
  %v1735 = vpop.f32.mrf.mxu0
  %1736 = vmatprep.mubr.f32.mxu0 0.0
  %1737 = vmatmul.mubr.f32.gmra.mxu0 %v653
  %v1738 = vpop.f32.mrf.mxu0
  %v1739 = vadd.f32 %v277, %v1738
  %v1740 = vpop.f32.mrf.mxu0
  %1741 = vmatprep.mubr.f32.mxu0 0.0
  %1742 = vmatmul.mubr.f32.gmra.mxu0 %v656
  %v1743 = vpop.f32.mrf.mxu0
  %v1744 = vadd.f32 %v277, %v1743
  %v1745 = vpop.f32.mrf.mxu0
  %1746 = vmatprep.mubr.f32.mxu0 0.0
  %1747 = vmatmul.mubr.f32.gmra.mxu0 %v659
  %v1748 = vpop.f32.mrf.mxu0
  %v1749 = vadd.f32 %v277, %v1748
  %v1750 = vpop.f32.mrf.mxu0
  %1751 = vmatprep.mubr.f32.mxu0 0.0
  %1752 = vmatmul.mubr.f32.gmra.mxu0 %v662
  %v1753 = vpop.f32.mrf.mxu0
  %v1754 = vadd.f32 %v277, %v1753
  %v1755 = vpop.f32.mrf.mxu0
  %1756 = vmatprep.mubr.f32.mxu0 0.0
  %1757 = vmatmul.mubr.f32.gmra.mxu0 %v665
  %v1758 = vpop.f32.mrf.mxu0
  %v1759 = vadd.f32 %v277, %v1758
  %v1760 = vpop.f32.mrf.mxu0
  %1761 = vmatprep.mubr.f32.mxu0 0.0
  %1762 = vmatmul.mubr.f32.gmra.mxu0 %v668
  %v1763 = vpop.f32.mrf.mxu0
  %v1764 = vadd.f32 %v277, %v1763
  %v1765 = vpop.f32.mrf.mxu0
  %1766 = vmatprep.mubr.f32.mxu0 0.0
  %1767 = vmatmul.mubr.f32.gmra.mxu0 %v671
  %v1768 = vpop.f32.mrf.mxu0
  %v1769 = vadd.f32 %v277, %v1768
  %v1770 = vpop.f32.mrf.mxu0
  %1771 = vmatprep.mubr.f32.mxu0 0.0
  %1772 = vmatmul.mubr.f32.gmra.mxu0 %v674
  %v1773 = vpop.f32.mrf.mxu0
  %v1774 = vadd.f32 %v277, %v1773
  %v1775 = vpop.f32.mrf.mxu0
  %1776 = vmatprep.mubr.f32.mxu0 0.0
  %1777 = vmatmul.mubr.f32.gmra.mxu0 %v677
  %v1778 = vpop.f32.mrf.mxu0
  %v1779 = vadd.f32 %v277, %v1778
  %v1780 = vpop.f32.mrf.mxu0
  %1781 = vmatprep.mubr.f32.mxu0 0.0
  %1782 = vmatmul.mubr.f32.gmra.mxu0 %v680
  %v1783 = vpop.f32.mrf.mxu0
  %v1784 = vadd.f32 %v277, %v1783
  %v1785 = vpop.f32.mrf.mxu0
  %1786 = vmatprep.mubr.f32.mxu0 0.0
  %1787 = vmatmul.mubr.f32.gmra.mxu0 %v683
  %v1788 = vpop.f32.mrf.mxu0
  %v1789 = vadd.f32 %v277, %v1788
  %v1790 = vpop.f32.mrf.mxu0
  %1791 = vmatprep.mubr.f32.mxu0 0.0
  %1792 = vmatmul.mubr.f32.gmra.mxu0 %v686
  %v1793 = vpop.f32.mrf.mxu0
  %v1794 = vadd.f32 %v277, %v1793
  %v1795 = vpop.f32.mrf.mxu0
  %1796 = vmatprep.mubr.f32.mxu0 0.0
  %1797 = vmatmul.mubr.f32.gmra.mxu0 %v689
  %v1798 = vpop.f32.mrf.mxu0
  %v1799 = vadd.f32 %v277, %v1798
  %v1800 = vpop.f32.mrf.mxu0
  %1801 = vmatprep.mubr.f32.mxu0 0.0
  %1802 = vmatmul.mubr.f32.gmra.mxu0 %v692
  %v1803 = vpop.f32.mrf.mxu0
  %v1804 = vadd.f32 %v277, %v1803
  %v1805 = vpop.f32.mrf.mxu0
  %1806 = vmatprep.mubr.f32.mxu0 0.0
  %1807 = vmatmul.mubr.f32.gmra.mxu0 %v695
  %v1808 = vpop.f32.mrf.mxu0
  %v1809 = vadd.f32 %v277, %v1808
  %v1810 = vpop.f32.mrf.mxu0
  %1811 = vmatprep.mubr.f32.mxu0 0.0
  %1812 = vmatmul.mubr.f32.gmra.mxu0 %v698
  %v1813 = vpop.f32.mrf.mxu0
  %v1814 = vadd.f32 %v277, %v1813
  %v1815 = vpop.f32.mrf.mxu0
  %1816 = vmatprep.mubr.f32.mxu0 0.0
  %1817 = vmatmul.mubr.f32.gmra.mxu0 %v701
  %v1818 = vpop.f32.mrf.mxu0
  %v1819 = vadd.f32 %v277, %v1818
  %v1820 = vpop.f32.mrf.mxu0
  %1821 = vmatprep.mubr.f32.mxu0 0.0
  %1822 = vmatmul.mubr.f32.gmra.mxu0 %v704
  %v1823 = vpop.f32.mrf.mxu0
  %v1824 = vadd.f32 %v277, %v1823
  %v1825 = vpop.f32.mrf.mxu0
  %1826 = vmatprep.mubr.f32.mxu0 0.0
  %1827 = vmatmul.mubr.f32.gmra.mxu0 %v707
  %v1828 = vpop.f32.mrf.mxu0
  %v1829 = vadd.f32 %v277, %v1828
  %v1830 = vpop.f32.mrf.mxu0
  %1831 = vmatprep.mubr.f32.mxu0 0.0
  %1832 = vmatmul.mubr.f32.gmra.mxu0 %v710
  %v1833 = vpop.f32.mrf.mxu0
  %v1834 = vadd.f32 %v277, %v1833
  %v1835 = vpop.f32.mrf.mxu0
  %1836 = vmatprep.mubr.f32.mxu0 0.0
  %1837 = vmatmul.mubr.f32.gmra.mxu0 %v713
  %v1838 = vpop.f32.mrf.mxu0
  %v1839 = vadd.f32 %v277, %v1838
  %v1840 = vpop.f32.mrf.mxu0
  %1841 = vmatprep.mubr.f32.mxu0 0.0
  %1842 = vmatmul.mubr.f32.gmra.mxu0 %v716
  %v1843 = vpop.f32.mrf.mxu0
  %v1844 = vadd.f32 %v277, %v1843
  %v1845 = vpop.f32.mrf.mxu0
  %1846 = vmatprep.mubr.f32.mxu0 0.0
  %1847 = vmatmul.mubr.f32.gmra.mxu0 %v719
  %v1848 = vpop.f32.mrf.mxu0
  %v1849 = vadd.f32 %v277, %v1848
  %v1850 = vpop.f32.mrf.mxu0
  %1851 = vmatprep.mubr.f32.mxu0 0.0
  %1852 = vmatmul.mubr.f32.gmra.mxu0 %v722
  %v1853 = vpop.f32.mrf.mxu0
  %v1854 = vadd.f32 %v277, %v1853
  %v1855 = vpop.f32.mrf.mxu0
  %1856 = vmatprep.mubr.f32.mxu0 0.0
  %1857 = vmatmul.mubr.f32.gmra.mxu0 %v725
  %v1858 = vpop.f32.mrf.mxu0
  %v1859 = vadd.f32 %v277, %v1858
  %v1860 = vpop.f32.mrf.mxu0
  %1861 = vmatprep.mubr.f32.mxu0 0.0
  %1862 = vmatmul.mubr.f32.gmra.mxu0 %v728
  %v1863 = vpop.f32.mrf.mxu0
  %v1864 = vadd.f32 %v277, %v1863
  %v1865 = vpop.f32.mrf.mxu0
  %1866 = vmatprep.mubr.f32.mxu0 0.0
  %1867 = vmatmul.mubr.f32.gmra.mxu0 %v731
  %v1868 = vpop.f32.mrf.mxu0
  %v1869 = vadd.f32 %v277, %v1868
  %v1870 = vpop.f32.mrf.mxu0
  %1871 = vmatprep.mubr.f32.mxu0 0.0
  %1872 = vmatmul.mubr.f32.gmra.mxu0 %v734
  %v1873 = vpop.f32.mrf.mxu0
  %v1874 = vadd.f32 %v277, %v1873
  %v1875 = vpop.f32.mrf.mxu0
  %1876 = vmatprep.mubr.f32.mxu0 0.0
  %1877 = vmatmul.mubr.f32.gmra.mxu0 %v737
  %v1878 = vpop.f32.mrf.mxu0
  %v1879 = vadd.f32 %v277, %v1878
  %v1880 = vpop.f32.mrf.mxu0
  %1881 = vmatprep.mubr.f32.mxu0 0.0
  %1882 = vmatmul.mubr.f32.gmra.mxu0 %v740
  %v1883 = vpop.f32.mrf.mxu0
  %v1884 = vadd.f32 %v277, %v1883
  %v1885 = vpop.f32.mrf.mxu0
  %1886 = vmatprep.mubr.f32.mxu0 0.0
  %1887 = vmatmul.mubr.f32.gmra.mxu0 %v743
  %v1888 = vpop.f32.mrf.mxu0
  %v1889 = vadd.f32 %v277, %v1888
  %v1890 = vpop.f32.mrf.mxu0
  %1891 = vmatprep.mubr.f32.mxu0 0.0
  %1892 = vmatmul.mubr.f32.gmra.mxu0 %v746
  %v1893 = vpop.f32.mrf.mxu0
  %v1894 = vadd.f32 %v277, %v1893
  %v1895 = vpop.f32.mrf.mxu0
  %1896 = vmatprep.mubr.f32.mxu0 0.0
  %1897 = vmatmul.mubr.f32.gmra.mxu0 %v749
  %v1898 = vpop.f32.mrf.mxu0
  %v1899 = vadd.f32 %v277, %v1898
  %v1900 = vpop.f32.mrf.mxu0
  %1901 = vmatprep.mubr.f32.mxu0 0.0
  %1902 = vmatmul.mubr.f32.gmra.mxu0 %v752
  %v1903 = vpop.f32.mrf.mxu0
  %v1904 = vadd.f32 %v277, %v1903
  %v1905 = vpop.f32.mrf.mxu0
  %1906 = vmatprep.mubr.f32.mxu0 0.0
  %1907 = vmatmul.mubr.f32.gmra.mxu0 %v755
  %v1908 = vpop.f32.mrf.mxu0
  %v1909 = vadd.f32 %v277, %v1908
  %v1910 = vpop.f32.mrf.mxu0
  %1911 = vmatprep.mubr.f32.mxu0 0.0
  %1912 = vmatmul.mubr.f32.gmra.mxu0 %v758
  %v1913 = vpop.f32.mrf.mxu0
  %v1914 = vadd.f32 %v277, %v1913
  %v1915 = vpop.f32.mrf.mxu0
  %1916 = vmatprep.mubr.f32.mxu0 0.0
  %1917 = vmatmul.mubr.f32.gmra.mxu0 %v761
  %v1918 = vpop.f32.mrf.mxu0
  %v1919 = vadd.f32 %v277, %v1918
  %v1920 = vpop.f32.mrf.mxu0
  %1921 = vmatprep.mubr.f32.mxu0 0.0
  %1922 = vmatmul.mubr.f32.gmra.mxu0 %v764
  %v1923 = vpop.f32.mrf.mxu0
  %v1924 = vadd.f32 %v277, %v1923
  %v1925 = vpop.f32.mrf.mxu0
  %1926 = vmatprep.mubr.f32.mxu0 0.0
  %1927 = vmatmul.mubr.f32.gmra.mxu0 %v767
  %v1928 = vpop.f32.mrf.mxu0
  %v1929 = vadd.f32 %v277, %v1928
  %v1930 = vpop.f32.mrf.mxu0
  %1931 = vmatprep.mubr.f32.mxu0 0.0
  %1932 = vmatmul.mubr.f32.gmra.mxu0 %v770
  %v1933 = vpop.f32.mrf.mxu0
  %v1934 = vadd.f32 %v277, %v1933
  %v1935 = vpop.f32.mrf.mxu0
  %1936 = vmatprep.mubr.f32.mxu0 0.0
  %1937 = vmatmul.mubr.f32.gmra.mxu0 %v773
  %v1938 = vpop.f32.mrf.mxu0
  %v1939 = vadd.f32 %v277, %v1938
  %v1940 = vpop.f32.mrf.mxu0
  %1941 = vmatprep.mubr.f32.mxu0 0.0
  %1942 = vmatmul.mubr.f32.gmra.mxu0 %v776
  %v1943 = vpop.f32.mrf.mxu0
  %v1944 = vadd.f32 %v277, %v1943
  %v1945 = vpop.f32.mrf.mxu0
  %1946 = vmatprep.mubr.f32.mxu0 0.0
  %1947 = vmatmul.mubr.f32.gmra.mxu0 %v779
  %v1948 = vpop.f32.mrf.mxu0
  %v1949 = vadd.f32 %v277, %v1948
  %v1950 = vpop.f32.mrf.mxu0
  %1951 = vmatprep.mubr.f32.mxu0 0.0
  %1952 = vmatmul.mubr.f32.gmra.mxu0 %v782
  %v1953 = vpop.f32.mrf.mxu0
  %v1954 = vadd.f32 %v277, %v1953
  %v1955 = vpop.f32.mrf.mxu0
  %1956 = vmatprep.mubr.f32.mxu0 0.0
  %1957 = vmatmul.mubr.f32.gmra.mxu0 %v785
  %v1958 = vpop.f32.mrf.mxu0
  %v1959 = vadd.f32 %v277, %v1958
  %v1960 = vpop.f32.mrf.mxu0
  %1961 = vmatprep.mubr.f32.mxu0 0.0
  %1962 = vmatmul.mubr.f32.gmra.mxu0 %v788
  %v1963 = vpop.f32.mrf.mxu0
  %v1964 = vadd.f32 %v277, %v1963
  %v1965 = vpop.f32.mrf.mxu0
  %1966 = vmatprep.mubr.f32.mxu0 0.0
  %1967 = vmatmul.mubr.f32.gmra.mxu0 %v791
  %v1968 = vpop.f32.mrf.mxu0
  %v1969 = vadd.f32 %v277, %v1968
  %v1970 = vpop.f32.mrf.mxu0
  %1971 = vmatprep.mubr.f32.mxu0 0.0
  %1972 = vmatmul.mubr.f32.gmra.mxu0 %v794
  %v1973 = vpop.f32.mrf.mxu0
  %v1974 = vadd.f32 %v277, %v1973
  %v1975 = vpop.f32.mrf.mxu0
  %1976 = vmatprep.mubr.f32.mxu0 0.0
  %1977 = vmatmul.mubr.f32.gmra.mxu0 %v797
  %v1978 = vpop.f32.mrf.mxu0
  %v1979 = vadd.f32 %v277, %v1978
  %v1980 = vpop.f32.mrf.mxu0
  %1981 = vmatprep.mubr.f32.mxu0 0.0
  %1982 = vmatmul.mubr.f32.gmra.mxu0 %v800
  %v1983 = vpop.f32.mrf.mxu0
  %v1984 = vadd.f32 %v277, %v1983
  %v1985 = vpop.f32.mrf.mxu0
  %1986 = vmatprep.mubr.f32.mxu0 0.0
  %1987 = vmatmul.mubr.f32.gmra.mxu0 %v803
  %v1988 = vpop.f32.mrf.mxu0
  %v1989 = vadd.f32 %v277, %v1988
  %v1990 = vpop.f32.mrf.mxu0
  %1991 = vmatprep.mubr.f32.mxu0 0.0
  %1992 = vmatmul.mubr.f32.gmra.mxu0 %v806
  %v1993 = vpop.f32.mrf.mxu0
  %v1994 = vadd.f32 %v277, %v1993
  %v1995 = vpop.f32.mrf.mxu0
  %1996 = vmatprep.mubr.f32.mxu0 0.0
  %1997 = vmatmul.mubr.f32.gmra.mxu0 %v809
  %v1998 = vpop.f32.mrf.mxu0
  %v1999 = vadd.f32 %v277, %v1998
  %v2000 = vpop.f32.mrf.mxu0
  %2001 = vmatprep.mubr.f32.mxu0 0.0
  %2002 = vmatmul.mubr.f32.gmra.mxu0 %v812
  %v2003 = vpop.f32.mrf.mxu0
  %v2004 = vadd.f32 %v277, %v2003
  %v2005 = vpop.f32.mrf.mxu0
  %2006 = vmatprep.mubr.f32.mxu0 0.0
  %2007 = vmatmul.mubr.f32.gmra.mxu0 %v815
  %v2008 = vpop.f32.mrf.mxu0
  %v2009 = vadd.f32 %v277, %v2008
  %v2010 = vpop.f32.mrf.mxu0
  %2011 = vmatprep.mubr.f32.mxu0 0.0
  %2012 = vmatmul.mubr.f32.gmra.mxu0 %v818
  %v2013 = vpop.f32.mrf.mxu0
  %v2014 = vadd.f32 %v277, %v2013
  %v2015 = vpop.f32.mrf.mxu0
  %2016 = vmatprep.mubr.f32.mxu0 0.0
  %2017 = vmatmul.mubr.f32.gmra.mxu0 %v821
  %v2018 = vpop.f32.mrf.mxu0
  %v2019 = vadd.f32 %v277, %v2018
  %v2020 = vpop.f32.mrf.mxu0
  %2021 = vmatprep.mubr.f32.mxu0 0.0
  %2022 = vmatmul.mubr.f32.gmra.mxu0 %v824
  %v2023 = vpop.f32.mrf.mxu0
  %v2024 = vadd.f32 %v277, %v2023
  %v2025 = vpop.f32.mrf.mxu0
  %2026 = vmatprep.mubr.f32.mxu0 0.0
  %2027 = vmatmul.mubr.f32.gmra.mxu0 %v827
  %v2028 = vpop.f32.mrf.mxu0
  %v2029 = vadd.f32 %v277, %v2028
  %v2030 = vpop.f32.mrf.mxu0
  %2031 = vmatprep.mubr.f32.mxu0 0.0
  %2032 = vmatmul.mubr.f32.gmra.mxu0 %v830
  %v2033 = vpop.f32.mrf.mxu0
  %v2034 = vadd.f32 %v277, %v2033
  %v2035 = vpop.f32.mrf.mxu0
  %2036 = vmatprep.mubr.f32.mxu0 0.0
  %2037 = vmatmul.mubr.f32.gmra.mxu0 %v833
  %v2038 = vpop.f32.mrf.mxu0
  %v2039 = vadd.f32 %v277, %v2038
  %v2040 = vpop.f32.mrf.mxu0
  %2041 = vmatprep.mubr.f32.mxu0 0.0
  %2042 = vmatmul.mubr.f32.gmra.mxu0 %v836
  %v2043 = vpop.f32.mrf.mxu0
  %v2044 = vadd.f32 %v277, %v2043
  %v2045 = vpop.f32.mrf.mxu0
  %2046 = vmatprep.mubr.f32.mxu0 0.0
  %2047 = vmatmul.mubr.f32.gmra.mxu0 %v839
  %v2048 = vpop.f32.mrf.mxu0
  %v2049 = vadd.f32 %v277, %v2048
  %v2050 = vpop.f32.mrf.mxu0
  %2051 = vmatprep.mubr.f32.mxu0 0.0
  %2052 = vmatmul.mubr.f32.gmra.mxu0 %v842
  %v2053 = vpop.f32.mrf.mxu0
  %v2054 = vadd.f32 %v277, %v2053
  %v2055 = vpop.f32.mrf.mxu0
  %2056 = vmatprep.mubr.f32.mxu0 0.0
  %2057 = vmatmul.mubr.f32.gmra.mxu0 %v845
  %v2058 = vpop.f32.mrf.mxu0
  %v2059 = vadd.f32 %v277, %v2058
  %v2060 = vpop.f32.mrf.mxu0
  %2061 = vmatprep.mubr.f32.mxu0 0.0
  %2062 = vmatmul.mubr.f32.gmra.mxu0 %v848
  %v2063 = vpop.f32.mrf.mxu0
  %v2064 = vadd.f32 %v277, %v2063
  %v2065 = vpop.f32.mrf.mxu0
  %2066 = vmatprep.mubr.f32.mxu0 0.0
  %2067 = vmatmul.mubr.f32.gmra.mxu0 %v851
  %v2068 = vpop.f32.mrf.mxu0
  %v2069 = vadd.f32 %v277, %v2068
  %v2070 = vpop.f32.mrf.mxu0
  %2071 = vmatprep.mubr.f32.mxu0 0.0
  %2072 = vmatmul.mubr.f32.gmra.mxu0 %v854
  %v2073 = vpop.f32.mrf.mxu0
  %v2074 = vadd.f32 %v277, %v2073
  %v2075 = vpop.f32.mrf.mxu0
  %2076 = vmatprep.mubr.f32.mxu0 0.0
  %2077 = vmatmul.mubr.f32.gmra.mxu0 %v857
  %v2078 = vpop.f32.mrf.mxu0
  %v2079 = vadd.f32 %v277, %v2078
  %v2080 = vpop.f32.mrf.mxu0
  %2081 = vmatprep.mubr.f32.mxu0 0.0
  %2082 = vmatmul.mubr.f32.gmra.mxu0 %v860
  %v2083 = vpop.f32.mrf.mxu0
  %v2084 = vadd.f32 %v277, %v2083
  %v2085 = vpop.f32.mrf.mxu0
  %2086 = vmatprep.mubr.f32.mxu0 0.0
  %2087 = vmatmul.mubr.f32.gmra.mxu0 %v863
  %v2088 = vpop.f32.mrf.mxu0
  %v2089 = vadd.f32 %v277, %v2088
  %v2090 = vpop.f32.mrf.mxu0
  %2091 = vmatprep.mubr.f32.mxu0 0.0
  %2092 = vmatmul.mubr.f32.gmra.mxu0 %v866
  %v2093 = vpop.f32.mrf.mxu0
  %v2094 = vadd.f32 %v277, %v2093
  %v2095 = vpop.f32.mrf.mxu0
  %2096 = vmatprep.mubr.f32.mxu0 0.0
  %2097 = vmatmul.mubr.f32.gmra.mxu0 %v869
  %v2098 = vpop.f32.mrf.mxu0
  %v2099 = vadd.f32 %v277, %v2098
  %v2100 = vpop.f32.mrf.mxu0
  %2101 = vmatprep.mubr.f32.mxu0 0.0
  %2102 = vmatmul.mubr.f32.gmra.mxu0 %v872
  %v2103 = vpop.f32.mrf.mxu0
  %v2104 = vadd.f32 %v277, %v2103
  %v2105 = vpop.f32.mrf.mxu0
  %2106 = vmatprep.mubr.f32.mxu0 0.0
  %2107 = vmatmul.mubr.f32.gmra.mxu0 %v875
  %v2108 = vpop.f32.mrf.mxu0
  %v2109 = vadd.f32 %v277, %v2108
  %v2110 = vpop.f32.mrf.mxu0
  %2111 = vmatprep.mubr.f32.mxu0 0.0
  %2112 = vmatmul.mubr.f32.gmra.mxu0 %v878
  %v2113 = vpop.f32.mrf.mxu0
  %v2114 = vadd.f32 %v277, %v2113
  %v2115 = vpop.f32.mrf.mxu0
  %2116 = vmatprep.mubr.f32.mxu0 0.0
  %2117 = vmatmul.mubr.f32.gmra.mxu0 %v881
  %v2118 = vpop.f32.mrf.mxu0
  %v2119 = vadd.f32 %v277, %v2118
  %v2120 = vpop.f32.mrf.mxu0
  %2121 = vmatprep.mubr.f32.mxu0 0.0
  %2122 = vmatmul.mubr.f32.gmra.mxu0 %v884
  %v2123 = vpop.f32.mrf.mxu0
  %v2124 = vadd.f32 %v277, %v2123
  %v2125 = vpop.f32.mrf.mxu0
  %2126 = vmatprep.mubr.f32.mxu0 0.0
  %2127 = vmatmul.mubr.f32.gmra.mxu0 %v887
  %v2128 = vpop.f32.mrf.mxu0
  %v2129 = vadd.f32 %v277, %v2128
  %v2130 = vpop.f32.mrf.mxu0
  %2131 = vmatprep.mubr.f32.mxu0 0.0
  %2132 = vmatmul.mubr.f32.gmra.mxu0 %v890
  %v2133 = vpop.f32.mrf.mxu0
  %v2134 = vadd.f32 %v277, %v2133
  %v2135 = vpop.f32.mrf.mxu0
  %2136 = vmatprep.mubr.f32.mxu0 0.0
  %2137 = vmatmul.mubr.f32.gmra.mxu0 %v893
  %v2138 = vpop.f32.mrf.mxu0
  %v2139 = vadd.f32 %v277, %v2138
  %v2140 = vpop.f32.mrf.mxu0
  %2141 = vmatprep.mubr.f32.mxu0 0.0
  %2142 = vmatmul.mubr.f32.gmra.mxu0 %v896
  %v2143 = vpop.f32.mrf.mxu0
  %v2144 = vadd.f32 %v277, %v2143
  %v2145 = vpop.f32.mrf.mxu0
  %2146 = vmatprep.mubr.f32.mxu0 0.0
  %2147 = vmatmul.mubr.f32.gmra.mxu0 %v899
  %v2148 = vpop.f32.mrf.mxu0
  %v2149 = vadd.f32 %v277, %v2148
  %v2150 = vpop.f32.mrf.mxu0
  %2151 = vmatprep.mubr.f32.mxu0 0.0
  %2152 = vmatmul.mubr.f32.gmra.mxu0 %v902
  %v2153 = vpop.f32.mrf.mxu0
  %v2154 = vadd.f32 %v277, %v2153
  %v2155 = vpop.f32.mrf.mxu0
  %2156 = vmatprep.mubr.f32.mxu0 0.0
  %2157 = vmatmul.mubr.f32.gmra.mxu0 %v905
  %v2158 = vpop.f32.mrf.mxu0
  %v2159 = vadd.f32 %v277, %v2158
  %v2160 = vpop.f32.mrf.mxu0
  %2161 = vmatprep.mubr.f32.mxu0 0.0
  %2162 = vmatmul.mubr.f32.gmra.mxu0 %v908
  %v2163 = vpop.f32.mrf.mxu0
  %v2164 = vadd.f32 %v277, %v2163
  %v2165 = vpop.f32.mrf.mxu0
  %2166 = vmatprep.mubr.f32.mxu0 0.0
  %2167 = vmatmul.mubr.f32.gmra.mxu0 %v911
  %v2168 = vpop.f32.mrf.mxu0
  %v2169 = vadd.f32 %v277, %v2168
  %v2170 = vpop.f32.mrf.mxu0
  %2171 = vmatprep.mubr.f32.mxu0 0.0
  %2172 = vmatmul.mubr.f32.gmra.mxu0 %v914
  %v2173 = vpop.f32.mrf.mxu0
  %v2174 = vadd.f32 %v277, %v2173
  %v2175 = vpop.f32.mrf.mxu0
  %2176 = vmatprep.mubr.f32.mxu0 0.0
  %2177 = vmatmul.mubr.f32.gmra.mxu0 %v917
  %v2178 = vpop.f32.mrf.mxu0
  %v2179 = vadd.f32 %v277, %v2178
  %v2180 = vpop.f32.mrf.mxu0
  %2181 = vmatprep.mubr.f32.mxu0 0.0
  %2182 = vmatmul.mubr.f32.gmra.mxu0 %v920
  %v2183 = vpop.f32.mrf.mxu0
  %v2184 = vadd.f32 %v277, %v2183
  %v2185 = vpop.f32.mrf.mxu0
  %2186 = vmatprep.mubr.f32.mxu0 0.0
  %2187 = vmatmul.mubr.f32.gmra.mxu0 %v923
  %v2188 = vpop.f32.mrf.mxu0
  %v2189 = vadd.f32 %v277, %v2188
  %v2190 = vpop.f32.mrf.mxu0
  %2191 = vmatprep.mubr.f32.mxu0 0.0
  %2192 = vmatmul.mubr.f32.gmra.mxu0 %v926
  %v2193 = vpop.f32.mrf.mxu0
  %v2194 = vadd.f32 %v277, %v2193
  %v2195 = vpop.f32.mrf.mxu0
  %2196 = vmatprep.mubr.f32.mxu0 0.0
  %2197 = vmatmul.mubr.f32.gmra.mxu0 %v929
  %v2198 = vpop.f32.mrf.mxu0
  %v2199 = vadd.f32 %v277, %v2198
  %v2200 = vpop.f32.mrf.mxu0
  %2201 = vmatprep.mubr.f32.mxu0 0.0
  %2202 = vmatmul.mubr.f32.gmra.mxu0 %v932
  %v2203 = vpop.f32.mrf.mxu0
  %v2204 = vadd.f32 %v277, %v2203
  %v2205 = vpop.f32.mrf.mxu0
  %2206 = vmatprep.mubr.f32.mxu0 0.0
  %2207 = vmatmul.mubr.f32.gmra.mxu0 %v935
  %v2208 = vpop.f32.mrf.mxu0
  %v2209 = vadd.f32 %v277, %v2208
  %v2210 = vpop.f32.mrf.mxu0
  %2211 = vmatprep.mubr.f32.mxu0 0.0
  %2212 = vmatmul.mubr.f32.gmra.mxu0 %v938
  %v2213 = vpop.f32.mrf.mxu0
  %v2214 = vadd.f32 %v277, %v2213
  %v2215 = vpop.f32.mrf.mxu0
  %2216 = vmatprep.mubr.f32.mxu0 0.0
  %2217 = vmatmul.mubr.f32.gmra.mxu0 %v941
  %v2218 = vpop.f32.mrf.mxu0
  %v2219 = vadd.f32 %v277, %v2218
  %v2220 = vpop.f32.mrf.mxu0
  %2221 = vmatprep.mubr.f32.mxu0 0.0
  %2222 = vmatmul.mubr.f32.gmra.mxu0 %v944
  %v2223 = vpop.f32.mrf.mxu0
  %v2224 = vadd.f32 %v277, %v2223
  %v2225 = vpop.f32.mrf.mxu0
  %2226 = vmatprep.mubr.f32.mxu0 0.0
  %2227 = vmatmul.mubr.f32.gmra.mxu0 %v947
  %v2228 = vpop.f32.mrf.mxu0
  %v2229 = vadd.f32 %v277, %v2228
  %v2230 = vpop.f32.mrf.mxu0
  %2231 = vmatprep.mubr.f32.mxu0 0.0
  %2232 = vmatmul.mubr.f32.gmra.mxu0 %v950
  %v2233 = vpop.f32.mrf.mxu0
  %v2234 = vadd.f32 %v277, %v2233
  %v2235 = vpop.f32.mrf.mxu0
  %2236 = vmatprep.mubr.f32.mxu0 0.0
  %2237 = vmatmul.mubr.f32.gmra.mxu0 %v953
  %v2238 = vpop.f32.mrf.mxu0
  %v2239 = vadd.f32 %v277, %v2238
  %v2240 = vpop.f32.mrf.mxu0
  %2241 = vmatprep.mubr.f32.mxu0 0.0
  %2242 = vmatmul.mubr.f32.gmra.mxu0 %v956
  %v2243 = vpop.f32.mrf.mxu0
  %v2244 = vadd.f32 %v277, %v2243
  %v2245 = vpop.f32.mrf.mxu0
  %2246 = vmatprep.mubr.f32.mxu0 0.0
  %2247 = vmatmul.mubr.f32.gmra.mxu0 %v959
  %v2248 = vpop.f32.mrf.mxu0
  %v2249 = vadd.f32 %v277, %v2248
  %v2250 = vpop.f32.mrf.mxu0
  %2251 = vmatprep.mubr.f32.mxu0 0.0
  %2252 = vmatmul.mubr.f32.gmra.mxu0 %v962
  %v2253 = vpop.f32.mrf.mxu0
  %v2254 = vadd.f32 %v277, %v2253
  %v2255 = vpop.f32.mrf.mxu0
  %2256 = vmatprep.mubr.f32.mxu0 0.0
  %2257 = vmatmul.mubr.f32.gmra.mxu0 %v965
  %v2258 = vpop.f32.mrf.mxu0
  %v2259 = vadd.f32 %v277, %v2258
  %v2260 = vpop.f32.mrf.mxu0
  %2261 = vmatprep.mubr.f32.mxu0 0.0
  %2262 = vmatmul.mubr.f32.gmra.mxu0 %v968
  %v2263 = vpop.f32.mrf.mxu0
  %v2264 = vadd.f32 %v277, %v2263
  %v2265 = vpop.f32.mrf.mxu0
  %2266 = vmatprep.mubr.f32.mxu0 0.0
  %2267 = vmatmul.mubr.f32.gmra.mxu0 %v971
  %v2268 = vpop.f32.mrf.mxu0
  %v2269 = vadd.f32 %v277, %v2268
  %v2270 = vpop.f32.mrf.mxu0
  %2271 = vmatprep.mubr.f32.mxu0 0.0
  %2272 = vmatmul.mubr.f32.gmra.mxu0 %v974
  %v2273 = vpop.f32.mrf.mxu0
  %v2274 = vadd.f32 %v277, %v2273
  %v2275 = vpop.f32.mrf.mxu0
  %2276 = vmatprep.mubr.f32.mxu0 0.0
  %2277 = vmatmul.mubr.f32.gmra.mxu0 %v977
  %v2278 = vpop.f32.mrf.mxu0
  %v2279 = vadd.f32 %v277, %v2278
  %v2280 = vpop.f32.mrf.mxu0
  %2281 = vmatprep.mubr.f32.mxu0 0.0
  %2282 = vmatmul.mubr.f32.gmra.mxu0 %v980
  %v2283 = vpop.f32.mrf.mxu0
  %v2284 = vadd.f32 %v277, %v2283
  %v2285 = vpop.f32.mrf.mxu0
  %2286 = vmatprep.mubr.f32.mxu0 0.0
  %2287 = vmatmul.mubr.f32.gmra.mxu0 %v983
  %v2288 = vpop.f32.mrf.mxu0
  %v2289 = vadd.f32 %v277, %v2288
  %v2290 = vpop.f32.mrf.mxu0
  %2291 = vmatprep.mubr.f32.mxu0 0.0
  %2292 = vmatmul.mubr.f32.gmra.mxu0 %v986
  %v2293 = vpop.f32.mrf.mxu0
  %v2294 = vadd.f32 %v277, %v2293
  %v2295 = vpop.f32.mrf.mxu0
  %2296 = vmatprep.mubr.f32.mxu0 0.0
  %2297 = vmatmul.mubr.f32.gmra.mxu0 %v989
  %v2298 = vpop.f32.mrf.mxu0
  %v2299 = vadd.f32 %v277, %v2298
  %v2300 = vpop.f32.mrf.mxu0
  %2301 = vmatprep.mubr.f32.mxu0 0.0
  %2302 = vmatmul.mubr.f32.gmra.mxu0 %v992
  %v2303 = vpop.f32.mrf.mxu0
  %v2304 = vadd.f32 %v277, %v2303
  %v2305 = vpop.f32.mrf.mxu0
  %2306 = vmatprep.mubr.f32.mxu0 0.0
  %2307 = vmatmul.mubr.f32.gmra.mxu0 %v995
  %v2308 = vpop.f32.mrf.mxu0
  %v2309 = vadd.f32 %v277, %v2308
  %v2310 = vpop.f32.mrf.mxu0
  %2311 = vmatprep.mubr.f32.mxu0 0.0
  %2312 = vmatmul.mubr.f32.gmra.mxu0 %v998
  %v2313 = vpop.f32.mrf.mxu0
  %v2314 = vadd.f32 %v277, %v2313
  %v2315 = vpop.f32.mrf.mxu0
  %2316 = vmatprep.mubr.f32.mxu0 0.0
  %2317 = vmatmul.mubr.f32.gmra.mxu0 %v1001
  %v2318 = vpop.f32.mrf.mxu0
  %v2319 = vadd.f32 %v277, %v2318
  %v2320 = vpop.f32.mrf.mxu0
  %2321 = vmatprep.mubr.f32.mxu0 0.0
  %2322 = vmatmul.mubr.f32.gmra.mxu0 %v1004
  %v2323 = vpop.f32.mrf.mxu0
  %v2324 = vadd.f32 %v277, %v2323
  %v2325 = vpop.f32.mrf.mxu0
  %2326 = vmatprep.mubr.f32.mxu0 0.0
  %2327 = vmatmul.mubr.f32.gmra.mxu0 %v1007
  %v2328 = vpop.f32.mrf.mxu0
  %v2329 = vadd.f32 %v277, %v2328
  %v2330 = vpop.f32.mrf.mxu0
  %2331 = vmatprep.mubr.f32.mxu0 0.0
  %2332 = vmatmul.mubr.f32.gmra.mxu0 %v1010
  %v2333 = vpop.f32.mrf.mxu0
  %v2334 = vadd.f32 %v277, %v2333
  %v2335 = vpop.f32.mrf.mxu0
  %2336 = vmatprep.mubr.f32.mxu0 0.0
  %2337 = vmatmul.mubr.f32.gmra.mxu0 %v1013
  %v2338 = vpop.f32.mrf.mxu0
  %v2339 = vadd.f32 %v277, %v2338
  %v2340 = vpop.f32.mrf.mxu0
  %2341 = vmatprep.mubr.f32.mxu0 0.0
  %2342 = vmatmul.mubr.f32.gmra.mxu0 %v1016
  %v2343 = vpop.f32.mrf.mxu0
  %v2344 = vadd.f32 %v277, %v2343
  %v2345 = vpop.f32.mrf.mxu0
  %2346 = vmatprep.mubr.f32.mxu0 0.0
  %2347 = vmatmul.mubr.f32.gmra.mxu0 %v1019
  %v2348 = vpop.f32.mrf.mxu0
  %v2349 = vadd.f32 %v277, %v2348
  %v2350 = vpop.f32.mrf.mxu0
  %2351 = vmatprep.mubr.f32.mxu0 0.0
  %2352 = vmatmul.mubr.f32.gmra.mxu0 %v1022
  %v2353 = vpop.f32.mrf.mxu0
  %v2354 = vadd.f32 %v277, %v2353
  %v2355 = vpop.f32.mrf.mxu0
  %2356 = vmatprep.mubr.f32.mxu0 0.0
  %2357 = vmatmul.mubr.f32.gmra.mxu0 %v1025
  %v2358 = vpop.f32.mrf.mxu0
  %v2359 = vadd.f32 %v277, %v2358
  %v2360 = vpop.f32.mrf.mxu0
  %2361 = vmatprep.mubr.f32.mxu0 0.0
  %2362 = vmatmul.mubr.f32.gmra.mxu0 %v1028
  %v2363 = vpop.f32.mrf.mxu0
  %v2364 = vadd.f32 %v277, %v2363
  %v2365 = vpop.f32.mrf.mxu0
  %2366 = vmatprep.mubr.f32.mxu0 0.0
  %2367 = vmatmul.mubr.f32.gmra.mxu0 %v1031
  %v2368 = vpop.f32.mrf.mxu0
  %v2369 = vadd.f32 %v277, %v2368
  %v2370 = vpop.f32.mrf.mxu0
  %2371 = vmatprep.mubr.f32.mxu0 0.0
  %2372 = vmatmul.mubr.f32.gmra.mxu0 %v1034
  %v2373 = vpop.f32.mrf.mxu0
  %v2374 = vadd.f32 %v277, %v2373
  %v2375 = vpop.f32.mrf.mxu0
  %2376 = vmatprep.mubr.f32.mxu0 0.0
  %2377 = vmatmul.mubr.f32.gmra.mxu0 %v1037
  %v2378 = vpop.f32.mrf.mxu0
  %v2379 = vadd.f32 %v277, %v2378
  %v2380 = vpop.f32.mrf.mxu0
  %2381 = vmatprep.mubr.f32.mxu0 0.0
  %2382 = vmatmul.mubr.f32.gmra.mxu0 %v1040
  %v2383 = vpop.f32.mrf.mxu0
  %v2384 = vadd.f32 %v277, %v2383
  %v2385 = vpop.f32.mrf.mxu0
  %2386 = vmatprep.mubr.f32.mxu0 0.0
  %2387 = vmatmul.mubr.f32.gmra.mxu0 %v1043
  %v2388 = vpop.f32.mrf.mxu0
  %v2389 = vadd.f32 %v277, %v2388
  %v2390 = vpop.f32.mrf.mxu0
  %2391 = vmatprep.mubr.f32.mxu0 0.0
  %2392 = vmatmul.mubr.f32.gmra.mxu0 %v1046
  %v2393 = vpop.f32.mrf.mxu0
  %v2394 = vadd.f32 %v277, %v2393
  %v2395 = vpop.f32.mrf.mxu0
  %2396 = vdwg.mxu0
  %v2397 = vmax.f32 %v1119, 0.0
  %v2398 = vmax.f32 %v1124, 0.0
  %v2399 = vmax.f32 %v1129, 0.0
  %v2400 = vmax.f32 %v1134, 0.0
  %v2401 = vmax.f32 %v1139, 0.0
  %v2402 = vmax.f32 %v1144, 0.0
  %v2403 = vmax.f32 %v1149, 0.0
  %v2404 = vmax.f32 %v1154, 0.0
  %v2405 = vmax.f32 %v1159, 0.0
  %v2406 = vmax.f32 %v1164, 0.0
  %v2407 = vmax.f32 %v1169, 0.0
  %v2408 = vmax.f32 %v1174, 0.0
  %v2409 = vmax.f32 %v1179, 0.0
  %v2410 = vmax.f32 %v1184, 0.0
  %v2411 = vmax.f32 %v1189, 0.0
  %v2412 = vmax.f32 %v1194, 0.0
  %v2413 = vmax.f32 %v1199, 0.0
  %v2414 = vmax.f32 %v1204, 0.0
  %v2415 = vmax.f32 %v1209, 0.0
  %v2416 = vmax.f32 %v1214, 0.0
  %v2417 = vmax.f32 %v1219, 0.0
  %v2418 = vmax.f32 %v1224, 0.0
  %v2419 = vmax.f32 %v1229, 0.0
  %v2420 = vmax.f32 %v1234, 0.0
  %v2421 = vmax.f32 %v1239, 0.0
  %v2422 = vmax.f32 %v1244, 0.0
  %v2423 = vmax.f32 %v1249, 0.0
  %v2424 = vmax.f32 %v1254, 0.0
  %v2425 = vmax.f32 %v1259, 0.0
  %v2426 = vmax.f32 %v1264, 0.0
  %v2427 = vmax.f32 %v1269, 0.0
  %v2428 = vmax.f32 %v1274, 0.0
  %v2429 = vmax.f32 %v1279, 0.0
  %v2430 = vmax.f32 %v1284, 0.0
  %v2431 = vmax.f32 %v1289, 0.0
  %v2432 = vmax.f32 %v1294, 0.0
  %v2433 = vmax.f32 %v1299, 0.0
  %v2434 = vmax.f32 %v1304, 0.0
  %v2435 = vmax.f32 %v1309, 0.0
  %v2436 = vmax.f32 %v1314, 0.0
  %v2437 = vmax.f32 %v1319, 0.0
  %v2438 = vmax.f32 %v1324, 0.0
  %v2439 = vmax.f32 %v1329, 0.0
  %v2440 = vmax.f32 %v1334, 0.0
  %v2441 = vmax.f32 %v1339, 0.0
  %v2442 = vmax.f32 %v1344, 0.0
  %v2443 = vmax.f32 %v1349, 0.0
  %v2444 = vmax.f32 %v1354, 0.0
  %v2445 = vmax.f32 %v1359, 0.0
  %v2446 = vmax.f32 %v1364, 0.0
  %v2447 = vmax.f32 %v1369, 0.0
  %v2448 = vmax.f32 %v1374, 0.0
  %v2449 = vmax.f32 %v1379, 0.0
  %v2450 = vmax.f32 %v1384, 0.0
  %v2451 = vmax.f32 %v1389, 0.0
  %v2452 = vmax.f32 %v1394, 0.0
  %v2453 = vmax.f32 %v1399, 0.0
  %v2454 = vmax.f32 %v1404, 0.0
  %v2455 = vmax.f32 %v1409, 0.0
  %v2456 = vmax.f32 %v1414, 0.0
  %v2457 = vmax.f32 %v1419, 0.0
  %v2458 = vmax.f32 %v1424, 0.0
  %v2459 = vmax.f32 %v1429, 0.0
  %v2460 = vmax.f32 %v1434, 0.0
  %v2461 = vmax.f32 %v1439, 0.0
  %v2462 = vmax.f32 %v1444, 0.0
  %v2463 = vmax.f32 %v1449, 0.0
  %v2464 = vmax.f32 %v1454, 0.0
  %v2465 = vmax.f32 %v1459, 0.0
  %v2466 = vmax.f32 %v1464, 0.0
  %v2467 = vmax.f32 %v1469, 0.0
  %v2468 = vmax.f32 %v1474, 0.0
  %v2469 = vmax.f32 %v1479, 0.0
  %v2470 = vmax.f32 %v1484, 0.0
  %v2471 = vmax.f32 %v1489, 0.0
  %v2472 = vmax.f32 %v1494, 0.0
  %v2473 = vmax.f32 %v1499, 0.0
  %v2474 = vmax.f32 %v1504, 0.0
  %v2475 = vmax.f32 %v1509, 0.0
  %v2476 = vmax.f32 %v1514, 0.0
  %v2477 = vmax.f32 %v1519, 0.0
  %v2478 = vmax.f32 %v1524, 0.0
  %v2479 = vmax.f32 %v1529, 0.0
  %v2480 = vmax.f32 %v1534, 0.0
  %v2481 = vmax.f32 %v1539, 0.0
  %v2482 = vmax.f32 %v1544, 0.0
  %v2483 = vmax.f32 %v1549, 0.0
  %v2484 = vmax.f32 %v1554, 0.0
  %v2485 = vmax.f32 %v1559, 0.0
  %v2486 = vmax.f32 %v1564, 0.0
  %v2487 = vmax.f32 %v1569, 0.0
  %v2488 = vmax.f32 %v1574, 0.0
  %v2489 = vmax.f32 %v1579, 0.0
  %v2490 = vmax.f32 %v1584, 0.0
  %v2491 = vmax.f32 %v1589, 0.0
  %v2492 = vmax.f32 %v1594, 0.0
  %v2493 = vmax.f32 %v1599, 0.0
  %v2494 = vmax.f32 %v1604, 0.0
  %v2495 = vmax.f32 %v1609, 0.0
  %v2496 = vmax.f32 %v1614, 0.0
  %v2497 = vmax.f32 %v1619, 0.0
  %v2498 = vmax.f32 %v1624, 0.0
  %v2499 = vmax.f32 %v1629, 0.0
  %v2500 = vmax.f32 %v1634, 0.0
  %v2501 = vmax.f32 %v1639, 0.0
  %v2502 = vmax.f32 %v1644, 0.0
  %v2503 = vmax.f32 %v1649, 0.0
  %v2504 = vmax.f32 %v1654, 0.0
  %v2505 = vmax.f32 %v1659, 0.0
  %v2506 = vmax.f32 %v1664, 0.0
  %v2507 = vmax.f32 %v1669, 0.0
  %v2508 = vmax.f32 %v1674, 0.0
  %v2509 = vmax.f32 %v1679, 0.0
  %v2510 = vmax.f32 %v1684, 0.0
  %v2511 = vmax.f32 %v1689, 0.0
  %v2512 = vmax.f32 %v1694, 0.0
  %v2513 = vmax.f32 %v1699, 0.0
  %v2514 = vmax.f32 %v1704, 0.0
  %v2515 = vmax.f32 %v1709, 0.0
  %v2516 = vmax.f32 %v1714, 0.0
  %v2517 = vmax.f32 %v1719, 0.0
  %v2518 = vmax.f32 %v1724, 0.0
  %v2519 = vmax.f32 %v1729, 0.0
  %v2520 = vmax.f32 %v1734, 0.0
  %v2521 = vmax.f32 %v1739, 0.0
  %v2522 = vmax.f32 %v1744, 0.0
  %v2523 = vmax.f32 %v1749, 0.0
  %v2524 = vmax.f32 %v1754, 0.0
  %v2525 = vmax.f32 %v1759, 0.0
  %v2526 = vmax.f32 %v1764, 0.0
  %v2527 = vmax.f32 %v1769, 0.0
  %v2528 = vmax.f32 %v1774, 0.0
  %v2529 = vmax.f32 %v1779, 0.0
  %v2530 = vmax.f32 %v1784, 0.0
  %v2531 = vmax.f32 %v1789, 0.0
  %v2532 = vmax.f32 %v1794, 0.0
  %v2533 = vmax.f32 %v1799, 0.0
  %v2534 = vmax.f32 %v1804, 0.0
  %v2535 = vmax.f32 %v1809, 0.0
  %v2536 = vmax.f32 %v1814, 0.0
  %v2537 = vmax.f32 %v1819, 0.0
  %v2538 = vmax.f32 %v1824, 0.0
  %v2539 = vmax.f32 %v1829, 0.0
  %v2540 = vmax.f32 %v1834, 0.0
  %v2541 = vmax.f32 %v1839, 0.0
  %v2542 = vmax.f32 %v1844, 0.0
  %v2543 = vmax.f32 %v1849, 0.0
  %v2544 = vmax.f32 %v1854, 0.0
  %v2545 = vmax.f32 %v1859, 0.0
  %v2546 = vmax.f32 %v1864, 0.0
  %v2547 = vmax.f32 %v1869, 0.0
  %v2548 = vmax.f32 %v1874, 0.0
  %v2549 = vmax.f32 %v1879, 0.0
  %v2550 = vmax.f32 %v1884, 0.0
  %v2551 = vmax.f32 %v1889, 0.0
  %v2552 = vmax.f32 %v1894, 0.0
  %v2553 = vmax.f32 %v1899, 0.0
  %v2554 = vmax.f32 %v1904, 0.0
  %v2555 = vmax.f32 %v1909, 0.0
  %v2556 = vmax.f32 %v1914, 0.0
  %v2557 = vmax.f32 %v1919, 0.0
  %v2558 = vmax.f32 %v1924, 0.0
  %v2559 = vmax.f32 %v1929, 0.0
  %v2560 = vmax.f32 %v1934, 0.0
  %v2561 = vmax.f32 %v1939, 0.0
  %v2562 = vmax.f32 %v1944, 0.0
  %v2563 = vmax.f32 %v1949, 0.0
  %v2564 = vmax.f32 %v1954, 0.0
  %v2565 = vmax.f32 %v1959, 0.0
  %v2566 = vmax.f32 %v1964, 0.0
  %v2567 = vmax.f32 %v1969, 0.0
  %v2568 = vmax.f32 %v1974, 0.0
  %v2569 = vmax.f32 %v1979, 0.0
  %v2570 = vmax.f32 %v1984, 0.0
  %v2571 = vmax.f32 %v1989, 0.0
  %v2572 = vmax.f32 %v1994, 0.0
  %v2573 = vmax.f32 %v1999, 0.0
  %v2574 = vmax.f32 %v2004, 0.0
  %v2575 = vmax.f32 %v2009, 0.0
  %v2576 = vmax.f32 %v2014, 0.0
  %v2577 = vmax.f32 %v2019, 0.0
  %v2578 = vmax.f32 %v2024, 0.0
  %v2579 = vmax.f32 %v2029, 0.0
  %v2580 = vmax.f32 %v2034, 0.0
  %v2581 = vmax.f32 %v2039, 0.0
  %v2582 = vmax.f32 %v2044, 0.0
  %v2583 = vmax.f32 %v2049, 0.0
  %v2584 = vmax.f32 %v2054, 0.0
  %v2585 = vmax.f32 %v2059, 0.0
  %v2586 = vmax.f32 %v2064, 0.0
  %v2587 = vmax.f32 %v2069, 0.0
  %v2588 = vmax.f32 %v2074, 0.0
  %v2589 = vmax.f32 %v2079, 0.0
  %v2590 = vmax.f32 %v2084, 0.0
  %v2591 = vmax.f32 %v2089, 0.0
  %v2592 = vmax.f32 %v2094, 0.0
  %v2593 = vmax.f32 %v2099, 0.0
  %v2594 = vmax.f32 %v2104, 0.0
  %v2595 = vmax.f32 %v2109, 0.0
  %v2596 = vmax.f32 %v2114, 0.0
  %v2597 = vmax.f32 %v2119, 0.0
  %v2598 = vmax.f32 %v2124, 0.0
  %v2599 = vmax.f32 %v2129, 0.0
  %v2600 = vmax.f32 %v2134, 0.0
  %v2601 = vmax.f32 %v2139, 0.0
  %v2602 = vmax.f32 %v2144, 0.0
  %v2603 = vmax.f32 %v2149, 0.0
  %v2604 = vmax.f32 %v2154, 0.0
  %v2605 = vmax.f32 %v2159, 0.0
  %v2606 = vmax.f32 %v2164, 0.0
  %v2607 = vmax.f32 %v2169, 0.0
  %v2608 = vmax.f32 %v2174, 0.0
  %v2609 = vmax.f32 %v2179, 0.0
  %v2610 = vmax.f32 %v2184, 0.0
  %v2611 = vmax.f32 %v2189, 0.0
  %v2612 = vmax.f32 %v2194, 0.0
  %v2613 = vmax.f32 %v2199, 0.0
  %v2614 = vmax.f32 %v2204, 0.0
  %v2615 = vmax.f32 %v2209, 0.0
  %v2616 = vmax.f32 %v2214, 0.0
  %v2617 = vmax.f32 %v2219, 0.0
  %v2618 = vmax.f32 %v2224, 0.0
  %v2619 = vmax.f32 %v2229, 0.0
  %v2620 = vmax.f32 %v2234, 0.0
  %v2621 = vmax.f32 %v2239, 0.0
  %v2622 = vmax.f32 %v2244, 0.0
  %v2623 = vmax.f32 %v2249, 0.0
  %v2624 = vmax.f32 %v2254, 0.0
  %v2625 = vmax.f32 %v2259, 0.0
  %v2626 = vmax.f32 %v2264, 0.0
  %v2627 = vmax.f32 %v2269, 0.0
  %v2628 = vmax.f32 %v2274, 0.0
  %v2629 = vmax.f32 %v2279, 0.0
  %v2630 = vmax.f32 %v2284, 0.0
  %v2631 = vmax.f32 %v2289, 0.0
  %v2632 = vmax.f32 %v2294, 0.0
  %v2633 = vmax.f32 %v2299, 0.0
  %v2634 = vmax.f32 %v2304, 0.0
  %v2635 = vmax.f32 %v2309, 0.0
  %v2636 = vmax.f32 %v2314, 0.0
  %v2637 = vmax.f32 %v2319, 0.0
  %v2638 = vmax.f32 %v2324, 0.0
  %v2639 = vmax.f32 %v2329, 0.0
  %v2640 = vmax.f32 %v2334, 0.0
  %v2641 = vmax.f32 %v2339, 0.0
  %v2642 = vmax.f32 %v2344, 0.0
  %v2643 = vmax.f32 %v2349, 0.0
  %v2644 = vmax.f32 %v2354, 0.0
  %v2645 = vmax.f32 %v2359, 0.0
  %v2646 = vmax.f32 %v2364, 0.0
  %v2647 = vmax.f32 %v2369, 0.0
  %v2648 = vmax.f32 %v2374, 0.0
  %v2649 = vmax.f32 %v2379, 0.0
  %v2650 = vmax.f32 %v2384, 0.0
  %v2651 = vmax.f32 %v2389, 0.0
  %v2652 = vmax.f32 %v2394, 0.0
  %v2653 = vmax.f32 %v2397, %v2405
  %v2654 = vmax.f32 %v2398, %v2406
  %v2655 = vmax.f32 %v2399, %v2407
  %v2656 = vmax.f32 %v2400, %v2408
  %v2657 = vmax.f32 %v2401, %v2409
  %v2658 = vmax.f32 %v2402, %v2410
  %v2659 = vmax.f32 %v2403, %v2411
  %v2660 = vmax.f32 %v2404, %v2412
  %v2661 = vmax.f32 %v2413, %v2421
  %v2662 = vmax.f32 %v2414, %v2422
  %v2663 = vmax.f32 %v2415, %v2423
  %v2664 = vmax.f32 %v2416, %v2424
  %v2665 = vmax.f32 %v2417, %v2425
  %v2666 = vmax.f32 %v2418, %v2426
  %v2667 = vmax.f32 %v2419, %v2427
  %v2668 = vmax.f32 %v2420, %v2428
  %v2669 = vmax.f32 %v2653, %v2661
  %v2670 = vmax.f32 %v2654, %v2662
  %v2671 = vmax.f32 %v2655, %v2663
  %v2672 = vmax.f32 %v2656, %v2664
  %v2673 = vmax.f32 %v2657, %v2665
  %v2674 = vmax.f32 %v2658, %v2666
  %v2675 = vmax.f32 %v2659, %v2667
  %v2676 = vmax.f32 %v2660, %v2668
  %vm2677 = vcmask 130048
  %2678 = vst.msk [vmem:[%s3] sm:$0xff] %vm2677, %v2669
  %2679 = vst.msk [vmem:[%s3 + $0x8] sm:$0xff] %vm2677, %v2670
  %2680 = vst.msk [vmem:[%s3 + $0x10] sm:$0xff] %vm2677, %v2671
  %2681 = vst.msk [vmem:[%s3 + $0x18] sm:$0xff] %vm2677, %v2672
  %2682 = vst.msk [vmem:[%s3 + $0x20] sm:$0xff] %vm2677, %v2673
  %2683 = vst.msk [vmem:[%s3 + $0x28] sm:$0xff] %vm2677, %v2674
  %2684 = vst.msk [vmem:[%s3 + $0x30] sm:$0xff] %vm2677, %v2675
  %2685 = vst.msk [vmem:[%s3 + $0x38] sm:$0xff] %vm2677, %v2676
  %v2686 = vmax.f32 %v2429, %v2437
  %v2687 = vmax.f32 %v2430, %v2438
  %v2688 = vmax.f32 %v2431, %v2439
  %v2689 = vmax.f32 %v2432, %v2440
  %v2690 = vmax.f32 %v2433, %v2441
  %v2691 = vmax.f32 %v2434, %v2442
  %v2692 = vmax.f32 %v2435, %v2443
  %v2693 = vmax.f32 %v2436, %v2444
  %v2694 = vmax.f32 %v2445, %v2453
  %v2695 = vmax.f32 %v2446, %v2454
  %v2696 = vmax.f32 %v2447, %v2455
  %v2697 = vmax.f32 %v2448, %v2456
  %v2698 = vmax.f32 %v2449, %v2457
  %v2699 = vmax.f32 %v2450, %v2458
  %v2700 = vmax.f32 %v2451, %v2459
  %v2701 = vmax.f32 %v2452, %v2460
  %v2702 = vmax.f32 %v2686, %v2694
  %v2703 = vmax.f32 %v2687, %v2695
  %v2704 = vmax.f32 %v2688, %v2696
  %v2705 = vmax.f32 %v2689, %v2697
  %v2706 = vmax.f32 %v2690, %v2698
  %v2707 = vmax.f32 %v2691, %v2699
  %v2708 = vmax.f32 %v2692, %v2700
  %v2709 = vmax.f32 %v2693, %v2701
  %2710 = vst.msk [vmem:[%s3 + $0x40] sm:$0xff] %vm2677, %v2702
  %2711 = vst.msk [vmem:[%s3 + $0x48] sm:$0xff] %vm2677, %v2703
  %2712 = vst.msk [vmem:[%s3 + $0x50] sm:$0xff] %vm2677, %v2704
  %2713 = vst.msk [vmem:[%s3 + $0x58] sm:$0xff] %vm2677, %v2705
  %2714 = vst.msk [vmem:[%s3 + $0x60] sm:$0xff] %vm2677, %v2706
  %2715 = vst.msk [vmem:[%s3 + $0x68] sm:$0xff] %vm2677, %v2707
  %2716 = vst.msk [vmem:[%s3 + $0x70] sm:$0xff] %vm2677, %v2708
  %2717 = vst.msk [vmem:[%s3 + $0x78] sm:$0xff] %vm2677, %v2709
  %v2718 = vmax.f32 %v2461, %v2469
  %v2719 = vmax.f32 %v2462, %v2470
  %v2720 = vmax.f32 %v2463, %v2471
  %v2721 = vmax.f32 %v2464, %v2472
  %v2722 = vmax.f32 %v2465, %v2473
  %v2723 = vmax.f32 %v2466, %v2474
  %v2724 = vmax.f32 %v2467, %v2475
  %v2725 = vmax.f32 %v2468, %v2476
  %v2726 = vmax.f32 %v2477, %v2485
  %v2727 = vmax.f32 %v2478, %v2486
  %v2728 = vmax.f32 %v2479, %v2487
  %v2729 = vmax.f32 %v2480, %v2488
  %v2730 = vmax.f32 %v2481, %v2489
  %v2731 = vmax.f32 %v2482, %v2490
  %v2732 = vmax.f32 %v2483, %v2491
  %v2733 = vmax.f32 %v2484, %v2492
  %v2734 = vmax.f32 %v2718, %v2726
  %v2735 = vmax.f32 %v2719, %v2727
  %v2736 = vmax.f32 %v2720, %v2728
  %v2737 = vmax.f32 %v2721, %v2729
  %v2738 = vmax.f32 %v2722, %v2730
  %v2739 = vmax.f32 %v2723, %v2731
  %v2740 = vmax.f32 %v2724, %v2732
  %v2741 = vmax.f32 %v2725, %v2733
  %2742 = vst.msk [vmem:[%s3 + $0x80] sm:$0xff] %vm2677, %v2734
  %2743 = vst.msk [vmem:[%s3 + $0x88] sm:$0xff] %vm2677, %v2735
  %2744 = vst.msk [vmem:[%s3 + $0x90] sm:$0xff] %vm2677, %v2736
  %2745 = vst.msk [vmem:[%s3 + $0x98] sm:$0xff] %vm2677, %v2737
  %2746 = vst.msk [vmem:[%s3 + $0xa0] sm:$0xff] %vm2677, %v2738
  %2747 = vst.msk [vmem:[%s3 + $0xa8] sm:$0xff] %vm2677, %v2739
  %2748 = vst.msk [vmem:[%s3 + $0xb0] sm:$0xff] %vm2677, %v2740
  %2749 = vst.msk [vmem:[%s3 + $0xb8] sm:$0xff] %vm2677, %v2741
  %v2750 = vmax.f32 %v2493, %v2501
  %v2751 = vmax.f32 %v2494, %v2502
  %v2752 = vmax.f32 %v2495, %v2503
  %v2753 = vmax.f32 %v2496, %v2504
  %v2754 = vmax.f32 %v2497, %v2505
  %v2755 = vmax.f32 %v2498, %v2506
  %v2756 = vmax.f32 %v2499, %v2507
  %v2757 = vmax.f32 %v2500, %v2508
  %v2758 = vmax.f32 %v2509, %v2517
  %v2759 = vmax.f32 %v2510, %v2518
  %v2760 = vmax.f32 %v2511, %v2519
  %v2761 = vmax.f32 %v2512, %v2520
  %v2762 = vmax.f32 %v2513, %v2521
  %v2763 = vmax.f32 %v2514, %v2522
  %v2764 = vmax.f32 %v2515, %v2523
  %v2765 = vmax.f32 %v2516, %v2524
  %v2766 = vmax.f32 %v2750, %v2758
  %v2767 = vmax.f32 %v2751, %v2759
  %v2768 = vmax.f32 %v2752, %v2760
  %v2769 = vmax.f32 %v2753, %v2761
  %v2770 = vmax.f32 %v2754, %v2762
  %v2771 = vmax.f32 %v2755, %v2763
  %v2772 = vmax.f32 %v2756, %v2764
  %v2773 = vmax.f32 %v2757, %v2765
  %2774 = vst.msk [vmem:[%s3 + $0xc0] sm:$0xff] %vm2677, %v2766
  %2775 = vst.msk [vmem:[%s3 + $0xc8] sm:$0xff] %vm2677, %v2767
  %2776 = vst.msk [vmem:[%s3 + $0xd0] sm:$0xff] %vm2677, %v2768
  %2777 = vst.msk [vmem:[%s3 + $0xd8] sm:$0xff] %vm2677, %v2769
  %2778 = vst.msk [vmem:[%s3 + $0xe0] sm:$0xff] %vm2677, %v2770
  %2779 = vst.msk [vmem:[%s3 + $0xe8] sm:$0xff] %vm2677, %v2771
  %2780 = vst.msk [vmem:[%s3 + $0xf0] sm:$0xff] %vm2677, %v2772
  %2781 = vst.msk [vmem:[%s3 + $0xf8] sm:$0xff] %vm2677, %v2773
  %v2782 = vmax.f32 %v2525, %v2533
  %v2783 = vmax.f32 %v2526, %v2534
  %v2784 = vmax.f32 %v2527, %v2535
  %v2785 = vmax.f32 %v2528, %v2536
  %v2786 = vmax.f32 %v2529, %v2537
  %v2787 = vmax.f32 %v2530, %v2538
  %v2788 = vmax.f32 %v2531, %v2539
  %v2789 = vmax.f32 %v2532, %v2540
  %v2790 = vmax.f32 %v2541, %v2549
  %v2791 = vmax.f32 %v2542, %v2550
  %v2792 = vmax.f32 %v2543, %v2551
  %v2793 = vmax.f32 %v2544, %v2552
  %v2794 = vmax.f32 %v2545, %v2553
  %v2795 = vmax.f32 %v2546, %v2554
  %v2796 = vmax.f32 %v2547, %v2555
  %v2797 = vmax.f32 %v2548, %v2556
  %v2798 = vmax.f32 %v2782, %v2790
  %v2799 = vmax.f32 %v2783, %v2791
  %v2800 = vmax.f32 %v2784, %v2792
  %v2801 = vmax.f32 %v2785, %v2793
  %v2802 = vmax.f32 %v2786, %v2794
  %v2803 = vmax.f32 %v2787, %v2795
  %v2804 = vmax.f32 %v2788, %v2796
  %v2805 = vmax.f32 %v2789, %v2797
  %2806 = vst.msk [vmem:[%s3 + $0x100] sm:$0xff] %vm2677, %v2798
  %2807 = vst.msk [vmem:[%s3 + $0x108] sm:$0xff] %vm2677, %v2799
  %2808 = vst.msk [vmem:[%s3 + $0x110] sm:$0xff] %vm2677, %v2800
  %2809 = vst.msk [vmem:[%s3 + $0x118] sm:$0xff] %vm2677, %v2801
  %2810 = vst.msk [vmem:[%s3 + $0x120] sm:$0xff] %vm2677, %v2802
  %2811 = vst.msk [vmem:[%s3 + $0x128] sm:$0xff] %vm2677, %v2803
  %2812 = vst.msk [vmem:[%s3 + $0x130] sm:$0xff] %vm2677, %v2804
  %2813 = vst.msk [vmem:[%s3 + $0x138] sm:$0xff] %vm2677, %v2805
  %v2814 = vmax.f32 %v2557, %v2565
  %v2815 = vmax.f32 %v2558, %v2566
  %v2816 = vmax.f32 %v2559, %v2567
  %v2817 = vmax.f32 %v2560, %v2568
  %v2818 = vmax.f32 %v2561, %v2569
  %v2819 = vmax.f32 %v2562, %v2570
  %v2820 = vmax.f32 %v2563, %v2571
  %v2821 = vmax.f32 %v2564, %v2572
  %v2822 = vmax.f32 %v2573, %v2581
  %v2823 = vmax.f32 %v2574, %v2582
  %v2824 = vmax.f32 %v2575, %v2583
  %v2825 = vmax.f32 %v2576, %v2584
  %v2826 = vmax.f32 %v2577, %v2585
  %v2827 = vmax.f32 %v2578, %v2586
  %v2828 = vmax.f32 %v2579, %v2587
  %v2829 = vmax.f32 %v2580, %v2588
  %v2830 = vmax.f32 %v2814, %v2822
  %v2831 = vmax.f32 %v2815, %v2823
  %v2832 = vmax.f32 %v2816, %v2824
  %v2833 = vmax.f32 %v2817, %v2825
  %v2834 = vmax.f32 %v2818, %v2826
  %v2835 = vmax.f32 %v2819, %v2827
  %v2836 = vmax.f32 %v2820, %v2828
  %v2837 = vmax.f32 %v2821, %v2829
  %2838 = vst.msk [vmem:[%s3 + $0x140] sm:$0xff] %vm2677, %v2830
  %2839 = vst.msk [vmem:[%s3 + $0x148] sm:$0xff] %vm2677, %v2831
  %2840 = vst.msk [vmem:[%s3 + $0x150] sm:$0xff] %vm2677, %v2832
  %2841 = vst.msk [vmem:[%s3 + $0x158] sm:$0xff] %vm2677, %v2833
  %2842 = vst.msk [vmem:[%s3 + $0x160] sm:$0xff] %vm2677, %v2834
  %2843 = vst.msk [vmem:[%s3 + $0x168] sm:$0xff] %vm2677, %v2835
  %2844 = vst.msk [vmem:[%s3 + $0x170] sm:$0xff] %vm2677, %v2836
  %2845 = vst.msk [vmem:[%s3 + $0x178] sm:$0xff] %vm2677, %v2837
  %v2846 = vmax.f32 %v2589, %v2597
  %v2847 = vmax.f32 %v2590, %v2598
  %v2848 = vmax.f32 %v2591, %v2599
  %v2849 = vmax.f32 %v2592, %v2600
  %v2850 = vmax.f32 %v2593, %v2601
  %v2851 = vmax.f32 %v2594, %v2602
  %v2852 = vmax.f32 %v2595, %v2603
  %v2853 = vmax.f32 %v2596, %v2604
  %v2854 = vmax.f32 %v2605, %v2613
  %v2855 = vmax.f32 %v2606, %v2614
  %v2856 = vmax.f32 %v2607, %v2615
  %v2857 = vmax.f32 %v2608, %v2616
  %v2858 = vmax.f32 %v2609, %v2617
  %v2859 = vmax.f32 %v2610, %v2618
  %v2860 = vmax.f32 %v2611, %v2619
  %v2861 = vmax.f32 %v2612, %v2620
  %v2862 = vmax.f32 %v2846, %v2854
  %v2863 = vmax.f32 %v2847, %v2855
  %v2864 = vmax.f32 %v2848, %v2856
  %v2865 = vmax.f32 %v2849, %v2857
  %v2866 = vmax.f32 %v2850, %v2858
  %v2867 = vmax.f32 %v2851, %v2859
  %v2868 = vmax.f32 %v2852, %v2860
  %v2869 = vmax.f32 %v2853, %v2861
  %2870 = vst.msk [vmem:[%s3 + $0x180] sm:$0xff] %vm2677, %v2862
  %2871 = vst.msk [vmem:[%s3 + $0x188] sm:$0xff] %vm2677, %v2863
  %2872 = vst.msk [vmem:[%s3 + $0x190] sm:$0xff] %vm2677, %v2864
  %2873 = vst.msk [vmem:[%s3 + $0x198] sm:$0xff] %vm2677, %v2865
  %2874 = vst.msk [vmem:[%s3 + $0x1a0] sm:$0xff] %vm2677, %v2866
  %2875 = vst.msk [vmem:[%s3 + $0x1a8] sm:$0xff] %vm2677, %v2867
  %2876 = vst.msk [vmem:[%s3 + $0x1b0] sm:$0xff] %vm2677, %v2868
  %2877 = vst.msk [vmem:[%s3 + $0x1b8] sm:$0xff] %vm2677, %v2869
  %v2878 = vmax.f32 %v2621, %v2629
  %v2879 = vmax.f32 %v2622, %v2630
  %v2880 = vmax.f32 %v2623, %v2631
  %v2881 = vmax.f32 %v2624, %v2632
  %v2882 = vmax.f32 %v2625, %v2633
  %v2883 = vmax.f32 %v2626, %v2634
  %v2884 = vmax.f32 %v2627, %v2635
  %v2885 = vmax.f32 %v2628, %v2636
  %v2886 = vmax.f32 %v2637, %v2645
  %v2887 = vmax.f32 %v2638, %v2646
  %v2888 = vmax.f32 %v2639, %v2647
  %v2889 = vmax.f32 %v2640, %v2648
  %v2890 = vmax.f32 %v2641, %v2649
  %v2891 = vmax.f32 %v2642, %v2650
  %v2892 = vmax.f32 %v2643, %v2651
  %v2893 = vmax.f32 %v2644, %v2652
  %v2894 = vmax.f32 %v2878, %v2886
  %v2895 = vmax.f32 %v2879, %v2887
  %v2896 = vmax.f32 %v2880, %v2888
  %v2897 = vmax.f32 %v2881, %v2889
  %v2898 = vmax.f32 %v2882, %v2890
  %v2899 = vmax.f32 %v2883, %v2891
  %v2900 = vmax.f32 %v2884, %v2892
  %v2901 = vmax.f32 %v2885, %v2893
  %2902 = vst.msk [vmem:[%s3 + $0x1c0] sm:$0xff] %vm2677, %v2894
  %2903 = vst.msk [vmem:[%s3 + $0x1c8] sm:$0xff] %vm2677, %v2895
  %2904 = vst.msk [vmem:[%s3 + $0x1d0] sm:$0xff] %vm2677, %v2896
  %2905 = vst.msk [vmem:[%s3 + $0x1d8] sm:$0xff] %vm2677, %v2897
  %2906 = vst.msk [vmem:[%s3 + $0x1e0] sm:$0xff] %vm2677, %v2898
  %2907 = vst.msk [vmem:[%s3 + $0x1e8] sm:$0xff] %vm2677, %v2899
  %2908 = vst.msk [vmem:[%s3 + $0x1f0] sm:$0xff] %vm2677, %v2900
  %2909 = vst.msk [vmem:[%s3 + $0x1f8] sm:$0xff] %vm2677, %v2901
  // Predicated region
  $region14: #{lstm_scratch_forward.4} parent=0 // pred_check
    _
  $region15: #{lstm_scratch_forward.4} parent=0 // pred_check_branch
    %2911 = sbr.rel (0) target = $region17
  $region16: #{lstm_scratch_forward.4} parent=0 // pred_region
    _
  $region17: #{lstm_scratch_forward.4} parent=0 // pred_fallthru
    _
  // Predicated region
  $region18: #{lstm_scratch_forward.4} parent=0 // pred_check
    _
  $region19: #{lstm_scratch_forward.4} parent=0 // pred_check_branch
    %2913 = sbr.rel (0) target = $region21
  $region20: #{lstm_scratch_forward.4} parent=0 // pred_region
    _
  $region21: #{lstm_scratch_forward.4} parent=0 // pred_fallthru
    _

// kernel: lstm_scratch_forward.5
$region0: #{lstm_scratch_forward.5}
  #allocation0 [shape = 'u32[]', space=smem, size = 0x4, offset = 0x4, fixed_abs, tag = 'smem constant byte address 0x4 - core index']
  #allocation1 [shape = 'u32[144,128]{1,0:T(1,128)}', space=vmem, size = 0x12000, scoped, tag = 'internal scratch']
  %s0 = inlined_call_operand.vmem [shape: f32[512,144], index: 0, kind: input, shape index: {}]
  %s1 = inlined_call_operand.vmem [shape: f32[144,32], index: 1, kind: input, shape index: {}]
  %s2 = inlined_call_operand.vmem [shape: f32[1,32], index: 2, kind: input, shape index: {}]
  %s3 = inlined_call_operand.vmem [shape: f32[128,32], index: 3, kind: output, shape index: {}]
  %s4 = sld [smem:[#allocation0]]
  $region22: #{lstm_scratch_forward.5} parent=0
    _
  %s6 = ssub.s32 1, %s4
  %s7 = scalar_select 0, %s6, %s4
  // Predicated region
  $region2: #{lstm_scratch_forward.5} parent=0 // pred_check
    _
  $region3: #{lstm_scratch_forward.5} parent=0 // pred_check_branch
    %9 = sbr.rel (0) target = $region5
  $region4: #{lstm_scratch_forward.5} parent=0 // pred_region
    _
  $region5: #{lstm_scratch_forward.5} parent=0 // pred_fallthru
    _
  // Predicated region
  $region6: #{lstm_scratch_forward.5} parent=0 // pred_check
    _
  $region7: #{lstm_scratch_forward.5} parent=0 // pred_check_branch
    %11 = sbr.rel (0) target = $region9
  $region8: #{lstm_scratch_forward.5} parent=0 // pred_region
    _
  $region9: #{lstm_scratch_forward.5} parent=0 // pred_fallthru
    _
  // Predicated region
  $region10: #{lstm_scratch_forward.5} parent=0 // pred_check
    _
  $region11: #{lstm_scratch_forward.5} parent=0 // pred_check_branch
    %13 = sbr.rel (0) target = $region13
  $region12: #{lstm_scratch_forward.5} parent=0 // pred_region
    _
  $region13: #{lstm_scratch_forward.5} parent=0 // pred_fallthru
    _
  %v14 = vld [vmem:[%s0] sm:$0xff]
  %v15 = vld [vmem:[%s0 + $0x8] sm:$0xff]
  %v16 = vld [vmem:[%s0 + $0x10] sm:$0xff]
  %v17 = vld [vmem:[%s0 + $0x18] sm:$0xff]
  %v18 = vld [vmem:[%s0 + $0x20] sm:$0xff]
  %v19 = vld [vmem:[%s0 + $0x28] sm:$0xff]
  %v20 = vld [vmem:[%s0 + $0x30] sm:$0xff]
  %v21 = vld [vmem:[%s0 + $0x38] sm:$0xff]
  %v22 = vld [vmem:[%s0 + $0x40] sm:$0xff]
  %v23 = vld [vmem:[%s0 + $0x48] sm:$0xff]
  %v24 = vld [vmem:[%s0 + $0x50] sm:$0xff]
  %v25 = vld [vmem:[%s0 + $0x58] sm:$0xff]
  %v26 = vld [vmem:[%s0 + $0x60] sm:$0xff]
  %v27 = vld [vmem:[%s0 + $0x68] sm:$0xff]
  %v28 = vld [vmem:[%s0 + $0x70] sm:$0xff]
  %v29 = vld [vmem:[%s0 + $0x78] sm:$0xff]
  %v30 = vld [vmem:[%s0 + $0x80] sm:$0xff]
  %v31 = vld [vmem:[%s0 + $0x88] sm:$0xff]
  %v32 = vld [vmem:[%s0 + $0x90] sm:$0xff]
  %v33 = vld [vmem:[%s0 + $0x98] sm:$0xff]
  %v34 = vld [vmem:[%s0 + $0xa0] sm:$0xff]
  %v35 = vld [vmem:[%s0 + $0xa8] sm:$0xff]
  %v36 = vld [vmem:[%s0 + $0xb0] sm:$0xff]
  %v37 = vld [vmem:[%s0 + $0xb8] sm:$0xff]
  %v38 = vld [vmem:[%s0 + $0xc0] sm:$0xff]
  %v39 = vld [vmem:[%s0 + $0xc8] sm:$0xff]
  %v40 = vld [vmem:[%s0 + $0xd0] sm:$0xff]
  %v41 = vld [vmem:[%s0 + $0xd8] sm:$0xff]
  %v42 = vld [vmem:[%s0 + $0xe0] sm:$0xff]
  %v43 = vld [vmem:[%s0 + $0xe8] sm:$0xff]
  %v44 = vld [vmem:[%s0 + $0xf0] sm:$0xff]
  %v45 = vld [vmem:[%s0 + $0xf8] sm:$0xff]
  %v46 = vld [vmem:[%s0 + $0x100] sm:$0xff]
  %v47 = vld [vmem:[%s0 + $0x108] sm:$0xff]
  %v48 = vld [vmem:[%s0 + $0x110] sm:$0xff]
  %v49 = vld [vmem:[%s0 + $0x118] sm:$0xff]
  %v50 = vld [vmem:[%s0 + $0x120] sm:$0xff]
  %v51 = vld [vmem:[%s0 + $0x128] sm:$0xff]
  %v52 = vld [vmem:[%s0 + $0x130] sm:$0xff]
  %v53 = vld [vmem:[%s0 + $0x138] sm:$0xff]
  %v54 = vld [vmem:[%s0 + $0x140] sm:$0xff]
  %v55 = vld [vmem:[%s0 + $0x148] sm:$0xff]
  %v56 = vld [vmem:[%s0 + $0x150] sm:$0xff]
  %v57 = vld [vmem:[%s0 + $0x158] sm:$0xff]
  %v58 = vld [vmem:[%s0 + $0x160] sm:$0xff]
  %v59 = vld [vmem:[%s0 + $0x168] sm:$0xff]
  %v60 = vld [vmem:[%s0 + $0x170] sm:$0xff]
  %v61 = vld [vmem:[%s0 + $0x178] sm:$0xff]
  %v62 = vld [vmem:[%s0 + $0x180] sm:$0xff]
  %v63 = vld [vmem:[%s0 + $0x188] sm:$0xff]
  %v64 = vld [vmem:[%s0 + $0x190] sm:$0xff]
  %v65 = vld [vmem:[%s0 + $0x198] sm:$0xff]
  %v66 = vld [vmem:[%s0 + $0x1a0] sm:$0xff]
  %v67 = vld [vmem:[%s0 + $0x1a8] sm:$0xff]
  %v68 = vld [vmem:[%s0 + $0x1b0] sm:$0xff]
  %v69 = vld [vmem:[%s0 + $0x1b8] sm:$0xff]
  %v70 = vld [vmem:[%s0 + $0x1c0] sm:$0xff]
  %v71 = vld [vmem:[%s0 + $0x1c8] sm:$0xff]
  %v72 = vld [vmem:[%s0 + $0x1d0] sm:$0xff]
  %v73 = vld [vmem:[%s0 + $0x1d8] sm:$0xff]
  %v74 = vld [vmem:[%s0 + $0x1e0] sm:$0xff]
  %v75 = vld [vmem:[%s0 + $0x1e8] sm:$0xff]
  %v76 = vld [vmem:[%s0 + $0x1f0] sm:$0xff]
  %v77 = vld [vmem:[%s0 + $0x1f8] sm:$0xff]
  %v78 = vld [vmem:[%s0 + $0x200] sm:$0xff]
  %v79 = vld [vmem:[%s0 + $0x208] sm:$0xff]
  %v80 = vld [vmem:[%s0 + $0x210] sm:$0xff]
  %v81 = vld [vmem:[%s0 + $0x218] sm:$0xff]
  %v82 = vld [vmem:[%s0 + $0x220] sm:$0xff]
  %v83 = vld [vmem:[%s0 + $0x228] sm:$0xff]
  %v84 = vld [vmem:[%s0 + $0x230] sm:$0xff]
  %v85 = vld [vmem:[%s0 + $0x238] sm:$0xff]
  %v86 = vld [vmem:[%s0 + $0x240] sm:$0xff]
  %v87 = vld [vmem:[%s0 + $0x248] sm:$0xff]
  %v88 = vld [vmem:[%s0 + $0x250] sm:$0xff]
  %v89 = vld [vmem:[%s0 + $0x258] sm:$0xff]
  %v90 = vld [vmem:[%s0 + $0x260] sm:$0xff]
  %v91 = vld [vmem:[%s0 + $0x268] sm:$0xff]
  %v92 = vld [vmem:[%s0 + $0x270] sm:$0xff]
  %v93 = vld [vmem:[%s0 + $0x278] sm:$0xff]
  %v94 = vld [vmem:[%s0 + $0x280] sm:$0xff]
  %v95 = vld [vmem:[%s0 + $0x288] sm:$0xff]
  %v96 = vld [vmem:[%s0 + $0x290] sm:$0xff]
  %v97 = vld [vmem:[%s0 + $0x298] sm:$0xff]
  %v98 = vld [vmem:[%s0 + $0x2a0] sm:$0xff]
  %v99 = vld [vmem:[%s0 + $0x2a8] sm:$0xff]
  %v100 = vld [vmem:[%s0 + $0x2b0] sm:$0xff]
  %v101 = vld [vmem:[%s0 + $0x2b8] sm:$0xff]
  %v102 = vld [vmem:[%s0 + $0x2c0] sm:$0xff]
  %v103 = vld [vmem:[%s0 + $0x2c8] sm:$0xff]
  %v104 = vld [vmem:[%s0 + $0x2d0] sm:$0xff]
  %v105 = vld [vmem:[%s0 + $0x2d8] sm:$0xff]
  %v106 = vld [vmem:[%s0 + $0x2e0] sm:$0xff]
  %v107 = vld [vmem:[%s0 + $0x2e8] sm:$0xff]
  %v108 = vld [vmem:[%s0 + $0x2f0] sm:$0xff]
  %v109 = vld [vmem:[%s0 + $0x2f8] sm:$0xff]
  %v110 = vld [vmem:[%s0 + $0x300] sm:$0xff]
  %v111 = vld [vmem:[%s0 + $0x308] sm:$0xff]
  %v112 = vld [vmem:[%s0 + $0x310] sm:$0xff]
  %v113 = vld [vmem:[%s0 + $0x318] sm:$0xff]
  %v114 = vld [vmem:[%s0 + $0x320] sm:$0xff]
  %v115 = vld [vmem:[%s0 + $0x328] sm:$0xff]
  %v116 = vld [vmem:[%s0 + $0x330] sm:$0xff]
  %v117 = vld [vmem:[%s0 + $0x338] sm:$0xff]
  %v118 = vld [vmem:[%s0 + $0x340] sm:$0xff]
  %v119 = vld [vmem:[%s0 + $0x348] sm:$0xff]
  %v120 = vld [vmem:[%s0 + $0x350] sm:$0xff]
  %v121 = vld [vmem:[%s0 + $0x358] sm:$0xff]
  %v122 = vld [vmem:[%s0 + $0x360] sm:$0xff]
  %v123 = vld [vmem:[%s0 + $0x368] sm:$0xff]
  %v124 = vld [vmem:[%s0 + $0x370] sm:$0xff]
  %v125 = vld [vmem:[%s0 + $0x378] sm:$0xff]
  %v126 = vld [vmem:[%s0 + $0x380] sm:$0xff]
  %v127 = vld [vmem:[%s0 + $0x388] sm:$0xff]
  %v128 = vld [vmem:[%s0 + $0x390] sm:$0xff]
  %v129 = vld [vmem:[%s0 + $0x398] sm:$0xff]
  %v130 = vld [vmem:[%s0 + $0x3a0] sm:$0xff]
  %v131 = vld [vmem:[%s0 + $0x3a8] sm:$0xff]
  %v132 = vld [vmem:[%s0 + $0x3b0] sm:$0xff]
  %v133 = vld [vmem:[%s0 + $0x3b8] sm:$0xff]
  %v134 = vld [vmem:[%s0 + $0x3c0] sm:$0xff]
  %v135 = vld [vmem:[%s0 + $0x3c8] sm:$0xff]
  %v136 = vld [vmem:[%s0 + $0x3d0] sm:$0xff]
  %v137 = vld [vmem:[%s0 + $0x3d8] sm:$0xff]
  %v138 = vld [vmem:[%s0 + $0x3e0] sm:$0xff]
  %v139 = vld [vmem:[%s0 + $0x3e8] sm:$0xff]
  %v140 = vld [vmem:[%s0 + $0x3f0] sm:$0xff]
  %v141 = vld [vmem:[%s0 + $0x3f8] sm:$0xff]
  %v142 = vld [vmem:[%s1] sm:$0xff]
  %v143 = vld [vmem:[%s1 + $0x8] sm:$0xff]
  %v144 = vld [vmem:[%s1 + $0x10] sm:$0xff]
  %v145 = vld [vmem:[%s1 + $0x18] sm:$0xff]
  %v146 = vld [vmem:[%s1 + $0x20] sm:$0xff]
  %v147 = vld [vmem:[%s1 + $0x28] sm:$0xff]
  %v148 = vld [vmem:[%s1 + $0x30] sm:$0xff]
  %v149 = vld [vmem:[%s1 + $0x38] sm:$0xff]
  %v150 = vld [vmem:[%s1 + $0x40] sm:$0xff]
  %v151 = vld [vmem:[%s1 + $0x48] sm:$0xff]
  %v152 = vld [vmem:[%s1 + $0x50] sm:$0xff]
  %v153 = vld [vmem:[%s1 + $0x58] sm:$0xff]
  %v154 = vld [vmem:[%s1 + $0x60] sm:$0xff]
  %v155 = vld [vmem:[%s1 + $0x68] sm:$0xff]
  %v156 = vld [vmem:[%s1 + $0x70] sm:$0xff]
  %v157 = vld [vmem:[%s1 + $0x78] sm:$0xff]
  %v158 = vld [vmem:[%s1 + $0x80] sm:$0xff]
  %v159 = vld [vmem:[%s1 + $0x88] sm:$0xff]
  %v160 = vld [vmem:[%s2] sm:$0x1]
  %v162 = vlaneseq
  %v163 = vshrl.u32 %v162, 7
  %v164 = vsub.s32 0, %v163
  %v165 = vrot.slane %v160, %v164
  %vm167 = vcmask 130048
  %v169 = vsel %vm167, %v15, 0
  %v172 = vsel %vm167, %v17, 0
  %v175 = vsel %vm167, %v19, 0
  %v178 = vsel %vm167, %v21, 0
  %v181 = vsel %vm167, %v23, 0
  %v184 = vsel %vm167, %v25, 0
  %v187 = vsel %vm167, %v27, 0
  %v190 = vsel %vm167, %v29, 0
  %v193 = vsel %vm167, %v31, 0
  %v196 = vsel %vm167, %v33, 0
  %v199 = vsel %vm167, %v35, 0
  %v202 = vsel %vm167, %v37, 0
  %v205 = vsel %vm167, %v39, 0
  %v208 = vsel %vm167, %v41, 0
  %v211 = vsel %vm167, %v43, 0
  %v214 = vsel %vm167, %v45, 0
  %v217 = vsel %vm167, %v47, 0
  %v220 = vsel %vm167, %v49, 0
  %v223 = vsel %vm167, %v51, 0
  %v226 = vsel %vm167, %v53, 0
  %v229 = vsel %vm167, %v55, 0
  %v232 = vsel %vm167, %v57, 0
  %v235 = vsel %vm167, %v59, 0
  %v238 = vsel %vm167, %v61, 0
  %v241 = vsel %vm167, %v63, 0
  %v244 = vsel %vm167, %v65, 0
  %v247 = vsel %vm167, %v67, 0
  %v250 = vsel %vm167, %v69, 0
  %v253 = vsel %vm167, %v71, 0
  %v256 = vsel %vm167, %v73, 0
  %v259 = vsel %vm167, %v75, 0
  %v262 = vsel %vm167, %v77, 0
  %v265 = vsel %vm167, %v79, 0
  %v268 = vsel %vm167, %v81, 0
  %v271 = vsel %vm167, %v83, 0
  %v274 = vsel %vm167, %v85, 0
  %v277 = vsel %vm167, %v87, 0
  %v280 = vsel %vm167, %v89, 0
  %v283 = vsel %vm167, %v91, 0
  %v286 = vsel %vm167, %v93, 0
  %v289 = vsel %vm167, %v95, 0
  %v292 = vsel %vm167, %v97, 0
  %v295 = vsel %vm167, %v99, 0
  %v298 = vsel %vm167, %v101, 0
  %v301 = vsel %vm167, %v103, 0
  %v304 = vsel %vm167, %v105, 0
  %v307 = vsel %vm167, %v107, 0
  %v310 = vsel %vm167, %v109, 0
  %v313 = vsel %vm167, %v111, 0
  %v316 = vsel %vm167, %v113, 0
  %v319 = vsel %vm167, %v115, 0
  %v322 = vsel %vm167, %v117, 0
  %v325 = vsel %vm167, %v119, 0
  %v328 = vsel %vm167, %v121, 0
  %v331 = vsel %vm167, %v123, 0
  %v334 = vsel %vm167, %v125, 0
  %v337 = vsel %vm167, %v127, 0
  %v340 = vsel %vm167, %v129, 0
  %v343 = vsel %vm167, %v131, 0
  %v346 = vsel %vm167, %v133, 0
  %v349 = vsel %vm167, %v135, 0
  %v352 = vsel %vm167, %v137, 0
  %v355 = vsel %vm167, %v139, 0
  %v358 = vsel %vm167, %v141, 0
  %360 = vmatprep.subr.mxu0 0.0
  %361 = vmatpush1.msra.mxu0 %v157
  %362 = vmatprep.subr.mxu0 0.0
  %363 = vmatpush1.msra.mxu0 %v156
  %364 = vmatprep.subr.mxu0 0.0
  %365 = vmatpush1.msra.mxu0 %v155
  %366 = vmatprep.subr.mxu0 0.0
  %367 = vmatpush1.msra.mxu0 %v154
  %368 = vmatprep.subr.mxu0 0.0
  %369 = vmatpush1.msra.mxu0 %v153
  %370 = vmatprep.subr.mxu0 0.0
  %371 = vmatpush1.msra.mxu0 %v152
  %372 = vmatprep.subr.mxu0 0.0
  %373 = vmatpush1.msra.mxu0 %v151
  %374 = vmatprep.subr.mxu0 0.0
  %375 = vmatpush1.msra.mxu0 %v150
  %376 = vmatprep.subr.mxu0 0.0
  %377 = vmatpush1.msra.mxu0 %v149
  %378 = vmatprep.subr.mxu0 0.0
  %379 = vmatpush1.msra.mxu0 %v148
  %380 = vmatprep.subr.mxu0 0.0
  %381 = vmatpush1.msra.mxu0 %v147
  %382 = vmatprep.subr.mxu0 0.0
  %383 = vmatpush1.msra.mxu0 %v146
  %384 = vmatprep.subr.mxu0 0.0
  %385 = vmatpush1.msra.mxu0 %v145
  %386 = vmatprep.subr.mxu0 0.0
  %387 = vmatpush1.msra.mxu0 %v144
  %388 = vmatprep.subr.mxu0 0.0
  %389 = vmatpush1.msra.mxu0 %v143
  %390 = vmatprep.subr.mxu0 0.0
  %391 = vmatpush1.msra.mxu0 %v142
  %392 = vmatprep.subr.mxu0 0.0
  %393 = vmatpush2.msra.mxu0 0.0
  %394 = vmatprep.subr.mxu0 0.0
  %395 = vmatpush2.msra.mxu0 0.0
  %396 = vmatprep.subr.mxu0 0.0
  %397 = vmatpush2.msra.mxu0 0.0
  %398 = vmatprep.subr.mxu0 0.0
  %399 = vmatpush2.msra.mxu0 0.0
  %400 = vmatprep.subr.mxu0 0.0
  %401 = vmatpush2.msra.mxu0 0.0
  %402 = vmatprep.subr.mxu0 0.0
  %403 = vmatpush2.msra.mxu0 0.0
  %404 = vmatprep.subr.mxu0 0.0
  %405 = vmatpush2.msra.mxu0 0.0
  %406 = vmatprep.subr.mxu0 0.0
  %407 = vmatpush2.msra.mxu0 0.0
  %408 = vmatprep.subr.mxu0 0.0
  %409 = vmatpush2.msra.mxu0 0.0
  %410 = vmatprep.subr.mxu0 0.0
  %411 = vmatpush2.msra.mxu0 0.0
  %412 = vmatprep.subr.mxu0 0.0
  %413 = vmatpush2.msra.mxu0 0.0
  %414 = vmatprep.subr.mxu0 0.0
  %415 = vmatpush2.msra.mxu0 0.0
  %416 = vmatprep.subr.mxu0 0.0
  %417 = vmatpush2.msra.mxu0 0.0
  %418 = vmatprep.subr.mxu0 0.0
  %419 = vmatpush2.msra.mxu0 0.0
  %420 = vmatprep.subr.mxu0 0.0
  %421 = vmatpush2.msra.mxu0 %v159
  %422 = vmatprep.subr.mxu0 0.0
  %423 = vmatpush2.msra.mxu0 %v158
  %424 = vmatprep.mubr.f32.mxu0 %v169
  %425 = vmatmul.mubr.f32.gmra.mxu0 %v14
  %v426 = vpop.f32.mrf.mxu0
  %v427 = vadd.f32 %v165, %v426
  %v428 = vpop.f32.mrf.mxu0
  %429 = vmatprep.mubr.f32.mxu0 %v172
  %430 = vmatmul.mubr.f32.gmra.mxu0 %v16
  %v431 = vpop.f32.mrf.mxu0
  %v432 = vadd.f32 %v165, %v431
  %v433 = vpop.f32.mrf.mxu0
  %434 = vmatprep.mubr.f32.mxu0 %v175
  %435 = vmatmul.mubr.f32.gmra.mxu0 %v18
  %v436 = vpop.f32.mrf.mxu0
  %v437 = vadd.f32 %v165, %v436
  %v438 = vpop.f32.mrf.mxu0
  %439 = vmatprep.mubr.f32.mxu0 %v178
  %440 = vmatmul.mubr.f32.gmra.mxu0 %v20
  %v441 = vpop.f32.mrf.mxu0
  %v442 = vadd.f32 %v165, %v441
  %v443 = vpop.f32.mrf.mxu0
  %444 = vmatprep.mubr.f32.mxu0 %v181
  %445 = vmatmul.mubr.f32.gmra.mxu0 %v22
  %v446 = vpop.f32.mrf.mxu0
  %v447 = vadd.f32 %v165, %v446
  %v448 = vpop.f32.mrf.mxu0
  %449 = vmatprep.mubr.f32.mxu0 %v184
  %450 = vmatmul.mubr.f32.gmra.mxu0 %v24
  %v451 = vpop.f32.mrf.mxu0
  %v452 = vadd.f32 %v165, %v451
  %v453 = vpop.f32.mrf.mxu0
  %454 = vmatprep.mubr.f32.mxu0 %v187
  %455 = vmatmul.mubr.f32.gmra.mxu0 %v26
  %v456 = vpop.f32.mrf.mxu0
  %v457 = vadd.f32 %v165, %v456
  %v458 = vpop.f32.mrf.mxu0
  %459 = vmatprep.mubr.f32.mxu0 %v190
  %460 = vmatmul.mubr.f32.gmra.mxu0 %v28
  %v461 = vpop.f32.mrf.mxu0
  %v462 = vadd.f32 %v165, %v461
  %v463 = vpop.f32.mrf.mxu0
  %464 = vmatprep.mubr.f32.mxu0 %v193
  %465 = vmatmul.mubr.f32.gmra.mxu0 %v30
  %v466 = vpop.f32.mrf.mxu0
  %v467 = vadd.f32 %v165, %v466
  %v468 = vpop.f32.mrf.mxu0
  %469 = vmatprep.mubr.f32.mxu0 %v196
  %470 = vmatmul.mubr.f32.gmra.mxu0 %v32
  %v471 = vpop.f32.mrf.mxu0
  %v472 = vadd.f32 %v165, %v471
  %v473 = vpop.f32.mrf.mxu0
  %474 = vmatprep.mubr.f32.mxu0 %v199
  %475 = vmatmul.mubr.f32.gmra.mxu0 %v34
  %v476 = vpop.f32.mrf.mxu0
  %v477 = vadd.f32 %v165, %v476
  %v478 = vpop.f32.mrf.mxu0
  %479 = vmatprep.mubr.f32.mxu0 %v202
  %480 = vmatmul.mubr.f32.gmra.mxu0 %v36
  %v481 = vpop.f32.mrf.mxu0
  %v482 = vadd.f32 %v165, %v481
  %v483 = vpop.f32.mrf.mxu0
  %484 = vmatprep.mubr.f32.mxu0 %v205
  %485 = vmatmul.mubr.f32.gmra.mxu0 %v38
  %v486 = vpop.f32.mrf.mxu0
  %v487 = vadd.f32 %v165, %v486
  %v488 = vpop.f32.mrf.mxu0
  %489 = vmatprep.mubr.f32.mxu0 %v208
  %490 = vmatmul.mubr.f32.gmra.mxu0 %v40
  %v491 = vpop.f32.mrf.mxu0
  %v492 = vadd.f32 %v165, %v491
  %v493 = vpop.f32.mrf.mxu0
  %494 = vmatprep.mubr.f32.mxu0 %v211
  %495 = vmatmul.mubr.f32.gmra.mxu0 %v42
  %v496 = vpop.f32.mrf.mxu0
  %v497 = vadd.f32 %v165, %v496
  %v498 = vpop.f32.mrf.mxu0
  %499 = vmatprep.mubr.f32.mxu0 %v214
  %500 = vmatmul.mubr.f32.gmra.mxu0 %v44
  %v501 = vpop.f32.mrf.mxu0
  %v502 = vadd.f32 %v165, %v501
  %v503 = vpop.f32.mrf.mxu0
  %504 = vmatprep.mubr.f32.mxu0 %v217
  %505 = vmatmul.mubr.f32.gmra.mxu0 %v46
  %v506 = vpop.f32.mrf.mxu0
  %v507 = vadd.f32 %v165, %v506
  %v508 = vpop.f32.mrf.mxu0
  %509 = vmatprep.mubr.f32.mxu0 %v220
  %510 = vmatmul.mubr.f32.gmra.mxu0 %v48
  %v511 = vpop.f32.mrf.mxu0
  %v512 = vadd.f32 %v165, %v511
  %v513 = vpop.f32.mrf.mxu0
  %514 = vmatprep.mubr.f32.mxu0 %v223
  %515 = vmatmul.mubr.f32.gmra.mxu0 %v50
  %v516 = vpop.f32.mrf.mxu0
  %v517 = vadd.f32 %v165, %v516
  %v518 = vpop.f32.mrf.mxu0
  %519 = vmatprep.mubr.f32.mxu0 %v226
  %520 = vmatmul.mubr.f32.gmra.mxu0 %v52
  %v521 = vpop.f32.mrf.mxu0
  %v522 = vadd.f32 %v165, %v521
  %v523 = vpop.f32.mrf.mxu0
  %524 = vmatprep.mubr.f32.mxu0 %v229
  %525 = vmatmul.mubr.f32.gmra.mxu0 %v54
  %v526 = vpop.f32.mrf.mxu0
  %v527 = vadd.f32 %v165, %v526
  %v528 = vpop.f32.mrf.mxu0
  %529 = vmatprep.mubr.f32.mxu0 %v232
  %530 = vmatmul.mubr.f32.gmra.mxu0 %v56
  %v531 = vpop.f32.mrf.mxu0
  %v532 = vadd.f32 %v165, %v531
  %v533 = vpop.f32.mrf.mxu0
  %534 = vmatprep.mubr.f32.mxu0 %v235
  %535 = vmatmul.mubr.f32.gmra.mxu0 %v58
  %v536 = vpop.f32.mrf.mxu0
  %v537 = vadd.f32 %v165, %v536
  %v538 = vpop.f32.mrf.mxu0
  %539 = vmatprep.mubr.f32.mxu0 %v238
  %540 = vmatmul.mubr.f32.gmra.mxu0 %v60
  %v541 = vpop.f32.mrf.mxu0
  %v542 = vadd.f32 %v165, %v541
  %v543 = vpop.f32.mrf.mxu0
  %544 = vmatprep.mubr.f32.mxu0 %v241
  %545 = vmatmul.mubr.f32.gmra.mxu0 %v62
  %v546 = vpop.f32.mrf.mxu0
  %v547 = vadd.f32 %v165, %v546
  %v548 = vpop.f32.mrf.mxu0
  %549 = vmatprep.mubr.f32.mxu0 %v244
  %550 = vmatmul.mubr.f32.gmra.mxu0 %v64
  %v551 = vpop.f32.mrf.mxu0
  %v552 = vadd.f32 %v165, %v551
  %v553 = vpop.f32.mrf.mxu0
  %554 = vmatprep.mubr.f32.mxu0 %v247
  %555 = vmatmul.mubr.f32.gmra.mxu0 %v66
  %v556 = vpop.f32.mrf.mxu0
  %v557 = vadd.f32 %v165, %v556
  %v558 = vpop.f32.mrf.mxu0
  %559 = vmatprep.mubr.f32.mxu0 %v250
  %560 = vmatmul.mubr.f32.gmra.mxu0 %v68
  %v561 = vpop.f32.mrf.mxu0
  %v562 = vadd.f32 %v165, %v561
  %v563 = vpop.f32.mrf.mxu0
  %564 = vmatprep.mubr.f32.mxu0 %v253
  %565 = vmatmul.mubr.f32.gmra.mxu0 %v70
  %v566 = vpop.f32.mrf.mxu0
  %v567 = vadd.f32 %v165, %v566
  %v568 = vpop.f32.mrf.mxu0
  %569 = vmatprep.mubr.f32.mxu0 %v256
  %570 = vmatmul.mubr.f32.gmra.mxu0 %v72
  %v571 = vpop.f32.mrf.mxu0
  %v572 = vadd.f32 %v165, %v571
  %v573 = vpop.f32.mrf.mxu0
  %574 = vmatprep.mubr.f32.mxu0 %v259
  %575 = vmatmul.mubr.f32.gmra.mxu0 %v74
  %v576 = vpop.f32.mrf.mxu0
  %v577 = vadd.f32 %v165, %v576
  %v578 = vpop.f32.mrf.mxu0
  %579 = vmatprep.mubr.f32.mxu0 %v262
  %580 = vmatmul.mubr.f32.gmra.mxu0 %v76
  %v581 = vpop.f32.mrf.mxu0
  %v582 = vadd.f32 %v165, %v581
  %v583 = vpop.f32.mrf.mxu0
  %584 = vmatprep.mubr.f32.mxu0 %v265
  %585 = vmatmul.mubr.f32.gmra.mxu0 %v78
  %v586 = vpop.f32.mrf.mxu0
  %v587 = vadd.f32 %v165, %v586
  %v588 = vpop.f32.mrf.mxu0
  %589 = vmatprep.mubr.f32.mxu0 %v268
  %590 = vmatmul.mubr.f32.gmra.mxu0 %v80
  %v591 = vpop.f32.mrf.mxu0
  %v592 = vadd.f32 %v165, %v591
  %v593 = vpop.f32.mrf.mxu0
  %594 = vmatprep.mubr.f32.mxu0 %v271
  %595 = vmatmul.mubr.f32.gmra.mxu0 %v82
  %v596 = vpop.f32.mrf.mxu0
  %v597 = vadd.f32 %v165, %v596
  %v598 = vpop.f32.mrf.mxu0
  %599 = vmatprep.mubr.f32.mxu0 %v274
  %600 = vmatmul.mubr.f32.gmra.mxu0 %v84
  %v601 = vpop.f32.mrf.mxu0
  %v602 = vadd.f32 %v165, %v601
  %v603 = vpop.f32.mrf.mxu0
  %604 = vmatprep.mubr.f32.mxu0 %v277
  %605 = vmatmul.mubr.f32.gmra.mxu0 %v86
  %v606 = vpop.f32.mrf.mxu0
  %v607 = vadd.f32 %v165, %v606
  %v608 = vpop.f32.mrf.mxu0
  %609 = vmatprep.mubr.f32.mxu0 %v280
  %610 = vmatmul.mubr.f32.gmra.mxu0 %v88
  %v611 = vpop.f32.mrf.mxu0
  %v612 = vadd.f32 %v165, %v611
  %v613 = vpop.f32.mrf.mxu0
  %614 = vmatprep.mubr.f32.mxu0 %v283
  %615 = vmatmul.mubr.f32.gmra.mxu0 %v90
  %v616 = vpop.f32.mrf.mxu0
  %v617 = vadd.f32 %v165, %v616
  %v618 = vpop.f32.mrf.mxu0
  %619 = vmatprep.mubr.f32.mxu0 %v286
  %620 = vmatmul.mubr.f32.gmra.mxu0 %v92
  %v621 = vpop.f32.mrf.mxu0
  %v622 = vadd.f32 %v165, %v621
  %v623 = vpop.f32.mrf.mxu0
  %624 = vmatprep.mubr.f32.mxu0 %v289
  %625 = vmatmul.mubr.f32.gmra.mxu0 %v94
  %v626 = vpop.f32.mrf.mxu0
  %v627 = vadd.f32 %v165, %v626
  %v628 = vpop.f32.mrf.mxu0
  %629 = vmatprep.mubr.f32.mxu0 %v292
  %630 = vmatmul.mubr.f32.gmra.mxu0 %v96
  %v631 = vpop.f32.mrf.mxu0
  %v632 = vadd.f32 %v165, %v631
  %v633 = vpop.f32.mrf.mxu0
  %634 = vmatprep.mubr.f32.mxu0 %v295
  %635 = vmatmul.mubr.f32.gmra.mxu0 %v98
  %v636 = vpop.f32.mrf.mxu0
  %v637 = vadd.f32 %v165, %v636
  %v638 = vpop.f32.mrf.mxu0
  %639 = vmatprep.mubr.f32.mxu0 %v298
  %640 = vmatmul.mubr.f32.gmra.mxu0 %v100
  %v641 = vpop.f32.mrf.mxu0
  %v642 = vadd.f32 %v165, %v641
  %v643 = vpop.f32.mrf.mxu0
  %644 = vmatprep.mubr.f32.mxu0 %v301
  %645 = vmatmul.mubr.f32.gmra.mxu0 %v102
  %v646 = vpop.f32.mrf.mxu0
  %v647 = vadd.f32 %v165, %v646
  %v648 = vpop.f32.mrf.mxu0
  %649 = vmatprep.mubr.f32.mxu0 %v304
  %650 = vmatmul.mubr.f32.gmra.mxu0 %v104
  %v651 = vpop.f32.mrf.mxu0
  %v652 = vadd.f32 %v165, %v651
  %v653 = vpop.f32.mrf.mxu0
  %654 = vmatprep.mubr.f32.mxu0 %v307
  %655 = vmatmul.mubr.f32.gmra.mxu0 %v106
  %v656 = vpop.f32.mrf.mxu0
  %v657 = vadd.f32 %v165, %v656
  %v658 = vpop.f32.mrf.mxu0
  %659 = vmatprep.mubr.f32.mxu0 %v310
  %660 = vmatmul.mubr.f32.gmra.mxu0 %v108
  %v661 = vpop.f32.mrf.mxu0
  %v662 = vadd.f32 %v165, %v661
  %v663 = vpop.f32.mrf.mxu0
  %664 = vmatprep.mubr.f32.mxu0 %v313
  %665 = vmatmul.mubr.f32.gmra.mxu0 %v110
  %v666 = vpop.f32.mrf.mxu0
  %v667 = vadd.f32 %v165, %v666
  %v668 = vpop.f32.mrf.mxu0
  %669 = vmatprep.mubr.f32.mxu0 %v316
  %670 = vmatmul.mubr.f32.gmra.mxu0 %v112
  %v671 = vpop.f32.mrf.mxu0
  %v672 = vadd.f32 %v165, %v671
  %v673 = vpop.f32.mrf.mxu0
  %674 = vmatprep.mubr.f32.mxu0 %v319
  %675 = vmatmul.mubr.f32.gmra.mxu0 %v114
  %v676 = vpop.f32.mrf.mxu0
  %v677 = vadd.f32 %v165, %v676
  %v678 = vpop.f32.mrf.mxu0
  %679 = vmatprep.mubr.f32.mxu0 %v322
  %680 = vmatmul.mubr.f32.gmra.mxu0 %v116
  %v681 = vpop.f32.mrf.mxu0
  %v682 = vadd.f32 %v165, %v681
  %v683 = vpop.f32.mrf.mxu0
  %684 = vmatprep.mubr.f32.mxu0 %v325
  %685 = vmatmul.mubr.f32.gmra.mxu0 %v118
  %v686 = vpop.f32.mrf.mxu0
  %v687 = vadd.f32 %v165, %v686
  %v688 = vpop.f32.mrf.mxu0
  %689 = vmatprep.mubr.f32.mxu0 %v328
  %690 = vmatmul.mubr.f32.gmra.mxu0 %v120
  %v691 = vpop.f32.mrf.mxu0
  %v692 = vadd.f32 %v165, %v691
  %v693 = vpop.f32.mrf.mxu0
  %694 = vmatprep.mubr.f32.mxu0 %v331
  %695 = vmatmul.mubr.f32.gmra.mxu0 %v122
  %v696 = vpop.f32.mrf.mxu0
  %v697 = vadd.f32 %v165, %v696
  %v698 = vpop.f32.mrf.mxu0
  %699 = vmatprep.mubr.f32.mxu0 %v334
  %700 = vmatmul.mubr.f32.gmra.mxu0 %v124
  %v701 = vpop.f32.mrf.mxu0
  %v702 = vadd.f32 %v165, %v701
  %v703 = vpop.f32.mrf.mxu0
  %704 = vmatprep.mubr.f32.mxu0 %v337
  %705 = vmatmul.mubr.f32.gmra.mxu0 %v126
  %v706 = vpop.f32.mrf.mxu0
  %v707 = vadd.f32 %v165, %v706
  %v708 = vpop.f32.mrf.mxu0
  %709 = vmatprep.mubr.f32.mxu0 %v340
  %710 = vmatmul.mubr.f32.gmra.mxu0 %v128
  %v711 = vpop.f32.mrf.mxu0
  %v712 = vadd.f32 %v165, %v711
  %v713 = vpop.f32.mrf.mxu0
  %714 = vmatprep.mubr.f32.mxu0 %v343
  %715 = vmatmul.mubr.f32.gmra.mxu0 %v130
  %v716 = vpop.f32.mrf.mxu0
  %v717 = vadd.f32 %v165, %v716
  %v718 = vpop.f32.mrf.mxu0
  %719 = vmatprep.mubr.f32.mxu0 %v346
  %720 = vmatmul.mubr.f32.gmra.mxu0 %v132
  %v721 = vpop.f32.mrf.mxu0
  %v722 = vadd.f32 %v165, %v721
  %v723 = vpop.f32.mrf.mxu0
  %724 = vmatprep.mubr.f32.mxu0 %v349
  %725 = vmatmul.mubr.f32.gmra.mxu0 %v134
  %v726 = vpop.f32.mrf.mxu0
  %v727 = vadd.f32 %v165, %v726
  %v728 = vpop.f32.mrf.mxu0
  %729 = vmatprep.mubr.f32.mxu0 %v352
  %730 = vmatmul.mubr.f32.gmra.mxu0 %v136
  %v731 = vpop.f32.mrf.mxu0
  %v732 = vadd.f32 %v165, %v731
  %v733 = vpop.f32.mrf.mxu0
  %734 = vmatprep.mubr.f32.mxu0 %v355
  %735 = vmatmul.mubr.f32.gmra.mxu0 %v138
  %v736 = vpop.f32.mrf.mxu0
  %v737 = vadd.f32 %v165, %v736
  %v738 = vpop.f32.mrf.mxu0
  %739 = vmatprep.mubr.f32.mxu0 %v358
  %740 = vmatmul.mubr.f32.gmra.mxu0 %v140
  %v741 = vpop.f32.mrf.mxu0
  %v742 = vadd.f32 %v165, %v741
  %v743 = vpop.f32.mrf.mxu0
  %744 = vdwg.mxu0
  %v745 = vmax.f32 %v427, 0.0
  %v746 = vmax.f32 %v432, 0.0
  %v747 = vmax.f32 %v437, 0.0
  %v748 = vmax.f32 %v442, 0.0
  %v749 = vmax.f32 %v447, 0.0
  %v750 = vmax.f32 %v452, 0.0
  %v751 = vmax.f32 %v457, 0.0
  %v752 = vmax.f32 %v462, 0.0
  %v753 = vmax.f32 %v467, 0.0
  %v754 = vmax.f32 %v472, 0.0
  %v755 = vmax.f32 %v477, 0.0
  %v756 = vmax.f32 %v482, 0.0
  %v757 = vmax.f32 %v487, 0.0
  %v758 = vmax.f32 %v492, 0.0
  %v759 = vmax.f32 %v497, 0.0
  %v760 = vmax.f32 %v502, 0.0
  %v761 = vmax.f32 %v507, 0.0
  %v762 = vmax.f32 %v512, 0.0
  %v763 = vmax.f32 %v517, 0.0
  %v764 = vmax.f32 %v522, 0.0
  %v765 = vmax.f32 %v527, 0.0
  %v766 = vmax.f32 %v532, 0.0
  %v767 = vmax.f32 %v537, 0.0
  %v768 = vmax.f32 %v542, 0.0
  %v769 = vmax.f32 %v547, 0.0
  %v770 = vmax.f32 %v552, 0.0
  %v771 = vmax.f32 %v557, 0.0
  %v772 = vmax.f32 %v562, 0.0
  %v773 = vmax.f32 %v567, 0.0
  %v774 = vmax.f32 %v572, 0.0
  %v775 = vmax.f32 %v577, 0.0
  %v776 = vmax.f32 %v582, 0.0
  %v777 = vmax.f32 %v587, 0.0
  %v778 = vmax.f32 %v592, 0.0
  %v779 = vmax.f32 %v597, 0.0
  %v780 = vmax.f32 %v602, 0.0
  %v781 = vmax.f32 %v607, 0.0
  %v782 = vmax.f32 %v612, 0.0
  %v783 = vmax.f32 %v617, 0.0
  %v784 = vmax.f32 %v622, 0.0
  %v785 = vmax.f32 %v627, 0.0
  %v786 = vmax.f32 %v632, 0.0
  %v787 = vmax.f32 %v637, 0.0
  %v788 = vmax.f32 %v642, 0.0
  %v789 = vmax.f32 %v647, 0.0
  %v790 = vmax.f32 %v652, 0.0
  %v791 = vmax.f32 %v657, 0.0
  %v792 = vmax.f32 %v662, 0.0
  %v793 = vmax.f32 %v667, 0.0
  %v794 = vmax.f32 %v672, 0.0
  %v795 = vmax.f32 %v677, 0.0
  %v796 = vmax.f32 %v682, 0.0
  %v797 = vmax.f32 %v687, 0.0
  %v798 = vmax.f32 %v692, 0.0
  %v799 = vmax.f32 %v697, 0.0
  %v800 = vmax.f32 %v702, 0.0
  %v801 = vmax.f32 %v707, 0.0
  %v802 = vmax.f32 %v712, 0.0
  %v803 = vmax.f32 %v717, 0.0
  %v804 = vmax.f32 %v722, 0.0
  %v805 = vmax.f32 %v727, 0.0
  %v806 = vmax.f32 %v732, 0.0
  %v807 = vmax.f32 %v737, 0.0
  %v808 = vmax.f32 %v742, 0.0
  %v809 = vmax.f32 %v745, %v747
  %v810 = vmax.f32 %v746, %v748
  %v811 = vmax.f32 %v749, %v751
  %v812 = vmax.f32 %v750, %v752
  %v813 = vmax.f32 %v809, %v811
  %v814 = vmax.f32 %v810, %v812
  %vm815 = vcmask 261120
  %816 = vst.msk [vmem:[%s3] sm:$0xff] %vm815, %v813
  %817 = vst.msk [vmem:[%s3 + $0x8] sm:$0xff] %vm815, %v814
  %v818 = vmax.f32 %v753, %v755
  %v819 = vmax.f32 %v754, %v756
  %v820 = vmax.f32 %v757, %v759
  %v821 = vmax.f32 %v758, %v760
  %v822 = vmax.f32 %v818, %v820
  %v823 = vmax.f32 %v819, %v821
  %824 = vst.msk [vmem:[%s3 + $0x10] sm:$0xff] %vm815, %v822
  %825 = vst.msk [vmem:[%s3 + $0x18] sm:$0xff] %vm815, %v823
  %v826 = vmax.f32 %v761, %v763
  %v827 = vmax.f32 %v762, %v764
  %v828 = vmax.f32 %v765, %v767
  %v829 = vmax.f32 %v766, %v768
  %v830 = vmax.f32 %v826, %v828
  %v831 = vmax.f32 %v827, %v829
  %832 = vst.msk [vmem:[%s3 + $0x20] sm:$0xff] %vm815, %v830
  %833 = vst.msk [vmem:[%s3 + $0x28] sm:$0xff] %vm815, %v831
  %v834 = vmax.f32 %v769, %v771
  %v835 = vmax.f32 %v770, %v772
  %v836 = vmax.f32 %v773, %v775
  %v837 = vmax.f32 %v774, %v776
  %v838 = vmax.f32 %v834, %v836
  %v839 = vmax.f32 %v835, %v837
  %840 = vst.msk [vmem:[%s3 + $0x30] sm:$0xff] %vm815, %v838
  %841 = vst.msk [vmem:[%s3 + $0x38] sm:$0xff] %vm815, %v839
  %v842 = vmax.f32 %v777, %v779
  %v843 = vmax.f32 %v778, %v780
  %v844 = vmax.f32 %v781, %v783
  %v845 = vmax.f32 %v782, %v784
  %v846 = vmax.f32 %v842, %v844
  %v847 = vmax.f32 %v843, %v845
  %848 = vst.msk [vmem:[%s3 + $0x40] sm:$0xff] %vm815, %v846
  %849 = vst.msk [vmem:[%s3 + $0x48] sm:$0xff] %vm815, %v847
  %v850 = vmax.f32 %v785, %v787
  %v851 = vmax.f32 %v786, %v788
  %v852 = vmax.f32 %v789, %v791
  %v853 = vmax.f32 %v790, %v792
  %v854 = vmax.f32 %v850, %v852
  %v855 = vmax.f32 %v851, %v853
  %856 = vst.msk [vmem:[%s3 + $0x50] sm:$0xff] %vm815, %v854
  %857 = vst.msk [vmem:[%s3 + $0x58] sm:$0xff] %vm815, %v855
  %v858 = vmax.f32 %v793, %v795
  %v859 = vmax.f32 %v794, %v796
  %v860 = vmax.f32 %v797, %v799
  %v861 = vmax.f32 %v798, %v800
  %v862 = vmax.f32 %v858, %v860
  %v863 = vmax.f32 %v859, %v861
  %864 = vst.msk [vmem:[%s3 + $0x60] sm:$0xff] %vm815, %v862
  %865 = vst.msk [vmem:[%s3 + $0x68] sm:$0xff] %vm815, %v863
  %v866 = vmax.f32 %v801, %v803
  %v867 = vmax.f32 %v802, %v804
  %v868 = vmax.f32 %v805, %v807
  %v869 = vmax.f32 %v806, %v808
  %v870 = vmax.f32 %v866, %v868
  %v871 = vmax.f32 %v867, %v869
  %872 = vst.msk [vmem:[%s3 + $0x70] sm:$0xff] %vm815, %v870
  %873 = vst.msk [vmem:[%s3 + $0x78] sm:$0xff] %vm815, %v871
  // Predicated region
  $region14: #{lstm_scratch_forward.5} parent=0 // pred_check
    _
  $region15: #{lstm_scratch_forward.5} parent=0 // pred_check_branch
    %875 = sbr.rel (0) target = $region17
  $region16: #{lstm_scratch_forward.5} parent=0 // pred_region
    _
  $region17: #{lstm_scratch_forward.5} parent=0 // pred_fallthru
    _
  // Predicated region
  $region18: #{lstm_scratch_forward.5} parent=0 // pred_check
    _
  $region19: #{lstm_scratch_forward.5} parent=0 // pred_check_branch
    %877 = sbr.rel (0) target = $region21
  $region20: #{lstm_scratch_forward.5} parent=0 // pred_region
    _
  $region21: #{lstm_scratch_forward.5} parent=0 // pred_fallthru
    _

// kernel: lstm_scratch_forward.6
$region0: #{lstm_scratch_forward.6}
  #allocation0 [shape = 'u32[]', space=smem, size = 0x4, offset = 0x4, fixed_abs, tag = 'smem constant byte address 0x4 - core index']
  #allocation1 [shape = 'u32[144,128]{1,0:T(1,128)}', space=vmem, size = 0x12000, scoped, tag = 'internal scratch']
  %s0 = inlined_call_operand.vmem [shape: f32[128,288], index: 0, kind: input, shape index: {}]
  %s1 = inlined_call_operand.vmem [shape: f32[288,32], index: 1, kind: input, shape index: {}]
  %s2 = inlined_call_operand.vmem [shape: f32[1,32], index: 2, kind: input, shape index: {}]
  %s3 = inlined_call_operand.vmem [shape: f32[8,32], index: 3, kind: output, shape index: {}]
  %s4 = sld [smem:[#allocation0]]
  $region22: #{lstm_scratch_forward.6} parent=0
    _
  %s6 = ssub.s32 1, %s4
  %s7 = scalar_select 0, %s6, %s4
  // Predicated region
  $region2: #{lstm_scratch_forward.6} parent=0 // pred_check
    _
  $region3: #{lstm_scratch_forward.6} parent=0 // pred_check_branch
    %9 = sbr.rel (0) target = $region5
  $region4: #{lstm_scratch_forward.6} parent=0 // pred_region
    _
  $region5: #{lstm_scratch_forward.6} parent=0 // pred_fallthru
    _
  // Predicated region
  $region6: #{lstm_scratch_forward.6} parent=0 // pred_check
    _
  $region7: #{lstm_scratch_forward.6} parent=0 // pred_check_branch
    %11 = sbr.rel (0) target = $region9
  $region8: #{lstm_scratch_forward.6} parent=0 // pred_region
    _
  $region9: #{lstm_scratch_forward.6} parent=0 // pred_fallthru
    _
  // Predicated region
  $region10: #{lstm_scratch_forward.6} parent=0 // pred_check
    _
  $region11: #{lstm_scratch_forward.6} parent=0 // pred_check_branch
    %13 = sbr.rel (0) target = $region13
  $region12: #{lstm_scratch_forward.6} parent=0 // pred_region
    _
  $region13: #{lstm_scratch_forward.6} parent=0 // pred_fallthru
    _
  %v14 = vld [vmem:[%s0] sm:$0xff]
  %v15 = vld [vmem:[%s0 + $0x8] sm:$0xff]
  %v16 = vld [vmem:[%s0 + $0x10] sm:$0xff]
  %v17 = vld [vmem:[%s0 + $0x18] sm:$0xff]
  %v18 = vld [vmem:[%s0 + $0x20] sm:$0xff]
  %v19 = vld [vmem:[%s0 + $0x28] sm:$0xff]
  %v20 = vld [vmem:[%s0 + $0x30] sm:$0xff]
  %v21 = vld [vmem:[%s0 + $0x38] sm:$0xff]
  %v22 = vld [vmem:[%s0 + $0x40] sm:$0xff]
  %v23 = vld [vmem:[%s0 + $0x48] sm:$0xff]
  %v24 = vld [vmem:[%s0 + $0x50] sm:$0xff]
  %v25 = vld [vmem:[%s0 + $0x58] sm:$0xff]
  %v26 = vld [vmem:[%s0 + $0x60] sm:$0xff]
  %v27 = vld [vmem:[%s0 + $0x68] sm:$0xff]
  %v28 = vld [vmem:[%s0 + $0x70] sm:$0xff]
  %v29 = vld [vmem:[%s0 + $0x78] sm:$0xff]
  %v30 = vld [vmem:[%s0 + $0x80] sm:$0xff]
  %v31 = vld [vmem:[%s0 + $0x88] sm:$0xff]
  %v32 = vld [vmem:[%s0 + $0x90] sm:$0xff]
  %v33 = vld [vmem:[%s0 + $0x98] sm:$0xff]
  %v34 = vld [vmem:[%s0 + $0xa0] sm:$0xff]
  %v35 = vld [vmem:[%s0 + $0xa8] sm:$0xff]
  %v36 = vld [vmem:[%s0 + $0xb0] sm:$0xff]
  %v37 = vld [vmem:[%s0 + $0xb8] sm:$0xff]
  %v38 = vld [vmem:[%s0 + $0xc0] sm:$0xff]
  %v39 = vld [vmem:[%s0 + $0xc8] sm:$0xff]
  %v40 = vld [vmem:[%s0 + $0xd0] sm:$0xff]
  %v41 = vld [vmem:[%s0 + $0xd8] sm:$0xff]
  %v42 = vld [vmem:[%s0 + $0xe0] sm:$0xff]
  %v43 = vld [vmem:[%s0 + $0xe8] sm:$0xff]
  %v44 = vld [vmem:[%s0 + $0xf0] sm:$0xff]
  %v45 = vld [vmem:[%s0 + $0xf8] sm:$0xff]
  %v46 = vld [vmem:[%s0 + $0x100] sm:$0xff]
  %v47 = vld [vmem:[%s0 + $0x108] sm:$0xff]
  %v48 = vld [vmem:[%s0 + $0x110] sm:$0xff]
  %v49 = vld [vmem:[%s0 + $0x118] sm:$0xff]
  %v50 = vld [vmem:[%s0 + $0x120] sm:$0xff]
  %v51 = vld [vmem:[%s0 + $0x128] sm:$0xff]
  %v52 = vld [vmem:[%s0 + $0x130] sm:$0xff]
  %v53 = vld [vmem:[%s0 + $0x138] sm:$0xff]
  %v54 = vld [vmem:[%s0 + $0x140] sm:$0xff]
  %v55 = vld [vmem:[%s0 + $0x148] sm:$0xff]
  %v56 = vld [vmem:[%s0 + $0x150] sm:$0xff]
  %v57 = vld [vmem:[%s0 + $0x158] sm:$0xff]
  %v58 = vld [vmem:[%s0 + $0x160] sm:$0xff]
  %v59 = vld [vmem:[%s0 + $0x168] sm:$0xff]
  %v60 = vld [vmem:[%s0 + $0x170] sm:$0xff]
  %v61 = vld [vmem:[%s0 + $0x178] sm:$0xff]
  %v62 = vld [vmem:[%s1] sm:$0xff]
  %v63 = vld [vmem:[%s1 + $0x8] sm:$0xff]
  %v64 = vld [vmem:[%s1 + $0x10] sm:$0xff]
  %v65 = vld [vmem:[%s1 + $0x18] sm:$0xff]
  %v66 = vld [vmem:[%s1 + $0x20] sm:$0xff]
  %v67 = vld [vmem:[%s1 + $0x28] sm:$0xff]
  %v68 = vld [vmem:[%s1 + $0x30] sm:$0xff]
  %v69 = vld [vmem:[%s1 + $0x38] sm:$0xff]
  %v70 = vld [vmem:[%s1 + $0x40] sm:$0xff]
  %v71 = vld [vmem:[%s1 + $0x48] sm:$0xff]
  %v72 = vld [vmem:[%s1 + $0x50] sm:$0xff]
  %v73 = vld [vmem:[%s1 + $0x58] sm:$0xff]
  %v74 = vld [vmem:[%s1 + $0x60] sm:$0xff]
  %v75 = vld [vmem:[%s1 + $0x68] sm:$0xff]
  %v76 = vld [vmem:[%s1 + $0x70] sm:$0xff]
  %v77 = vld [vmem:[%s1 + $0x78] sm:$0xff]
  %v78 = vld [vmem:[%s1 + $0x80] sm:$0xff]
  %v79 = vld [vmem:[%s1 + $0x88] sm:$0xff]
  %v80 = vld [vmem:[%s1 + $0x90] sm:$0xff]
  %v81 = vld [vmem:[%s1 + $0x98] sm:$0xff]
  %v82 = vld [vmem:[%s1 + $0xa0] sm:$0xff]
  %v83 = vld [vmem:[%s1 + $0xa8] sm:$0xff]
  %v84 = vld [vmem:[%s1 + $0xb0] sm:$0xff]
  %v85 = vld [vmem:[%s1 + $0xb8] sm:$0xff]
  %v86 = vld [vmem:[%s1 + $0xc0] sm:$0xff]
  %v87 = vld [vmem:[%s1 + $0xc8] sm:$0xff]
  %v88 = vld [vmem:[%s1 + $0xd0] sm:$0xff]
  %v89 = vld [vmem:[%s1 + $0xd8] sm:$0xff]
  %v90 = vld [vmem:[%s1 + $0xe0] sm:$0xff]
  %v91 = vld [vmem:[%s1 + $0xe8] sm:$0xff]
  %v92 = vld [vmem:[%s1 + $0xf0] sm:$0xff]
  %v93 = vld [vmem:[%s1 + $0xf8] sm:$0xff]
  %v94 = vld [vmem:[%s1 + $0x100] sm:$0xff]
  %v95 = vld [vmem:[%s1 + $0x108] sm:$0xff]
  %v96 = vld [vmem:[%s1 + $0x110] sm:$0xff]
  %v97 = vld [vmem:[%s1 + $0x118] sm:$0xff]
  %v98 = vld [vmem:[%s2] sm:$0x1]
  %v100 = vlaneseq
  %v101 = vshrl.u32 %v100, 7
  %v102 = vsub.s32 0, %v101
  %v103 = vrot.slane %v98, %v102
  %vm105 = vcmask 261120
  %v107 = vsel %vm105, %v16, 0
  %v110 = vsel %vm105, %v19, 0
  %v113 = vsel %vm105, %v22, 0
  %v116 = vsel %vm105, %v25, 0
  %v119 = vsel %vm105, %v28, 0
  %v122 = vsel %vm105, %v31, 0
  %v125 = vsel %vm105, %v34, 0
  %v128 = vsel %vm105, %v37, 0
  %v131 = vsel %vm105, %v40, 0
  %v134 = vsel %vm105, %v43, 0
  %v137 = vsel %vm105, %v46, 0
  %v140 = vsel %vm105, %v49, 0
  %v143 = vsel %vm105, %v52, 0
  %v146 = vsel %vm105, %v55, 0
  %v149 = vsel %vm105, %v58, 0
  %v152 = vsel %vm105, %v61, 0
  %154 = vmatprep.subr.mxu0 0.0
  %155 = vmatpush1.msra.mxu0 %v77
  %156 = vmatprep.subr.mxu0 0.0
  %157 = vmatpush1.msra.mxu0 %v76
  %158 = vmatprep.subr.mxu0 0.0
  %159 = vmatpush1.msra.mxu0 %v75
  %160 = vmatprep.subr.mxu0 0.0
  %161 = vmatpush1.msra.mxu0 %v74
  %162 = vmatprep.subr.mxu0 0.0
  %163 = vmatpush1.msra.mxu0 %v73
  %164 = vmatprep.subr.mxu0 0.0
  %165 = vmatpush1.msra.mxu0 %v72
  %166 = vmatprep.subr.mxu0 0.0
  %167 = vmatpush1.msra.mxu0 %v71
  %168 = vmatprep.subr.mxu0 0.0
  %169 = vmatpush1.msra.mxu0 %v70
  %170 = vmatprep.subr.mxu0 0.0
  %171 = vmatpush1.msra.mxu0 %v69
  %172 = vmatprep.subr.mxu0 0.0
  %173 = vmatpush1.msra.mxu0 %v68
  %174 = vmatprep.subr.mxu0 0.0
  %175 = vmatpush1.msra.mxu0 %v67
  %176 = vmatprep.subr.mxu0 0.0
  %177 = vmatpush1.msra.mxu0 %v66
  %178 = vmatprep.subr.mxu0 0.0
  %179 = vmatpush1.msra.mxu0 %v65
  %180 = vmatprep.subr.mxu0 0.0
  %181 = vmatpush1.msra.mxu0 %v64
  %182 = vmatprep.subr.mxu0 0.0
  %183 = vmatpush1.msra.mxu0 %v63
  %184 = vmatprep.subr.mxu0 0.0
  %185 = vmatpush1.msra.mxu0 %v62
  %186 = vmatprep.subr.mxu0 0.0
  %187 = vmatpush2.msra.mxu0 %v93
  %188 = vmatprep.subr.mxu0 0.0
  %189 = vmatpush2.msra.mxu0 %v92
  %190 = vmatprep.subr.mxu0 0.0
  %191 = vmatpush2.msra.mxu0 %v91
  %192 = vmatprep.subr.mxu0 0.0
  %193 = vmatpush2.msra.mxu0 %v90
  %194 = vmatprep.subr.mxu0 0.0
  %195 = vmatpush2.msra.mxu0 %v89
  %196 = vmatprep.subr.mxu0 0.0
  %197 = vmatpush2.msra.mxu0 %v88
  %198 = vmatprep.subr.mxu0 0.0
  %199 = vmatpush2.msra.mxu0 %v87
  %200 = vmatprep.subr.mxu0 0.0
  %201 = vmatpush2.msra.mxu0 %v86
  %202 = vmatprep.subr.mxu0 0.0
  %203 = vmatpush2.msra.mxu0 %v85
  %204 = vmatprep.subr.mxu0 0.0
  %205 = vmatpush2.msra.mxu0 %v84
  %206 = vmatprep.subr.mxu0 0.0
  %207 = vmatpush2.msra.mxu0 %v83
  %208 = vmatprep.subr.mxu0 0.0
  %209 = vmatpush2.msra.mxu0 %v82
  %210 = vmatprep.subr.mxu0 0.0
  %211 = vmatpush2.msra.mxu0 %v81
  %212 = vmatprep.subr.mxu0 0.0
  %213 = vmatpush2.msra.mxu0 %v80
  %214 = vmatprep.subr.mxu0 0.0
  %215 = vmatpush2.msra.mxu0 %v79
  %216 = vmatprep.subr.mxu0 0.0
  %217 = vmatpush2.msra.mxu0 %v78
  %218 = vmatprep.mubr.f32.mxu0 %v15
  %219 = vmatmul.mubr.f32.gmra.mxu0 %v14
  %v220 = vpop.f32.mrf.mxu0
  %v221 = vadd.f32 %v103, %v220
  %v222 = vpop.f32.mrf.mxu0
  %223 = vmatprep.mubr.f32.mxu0 %v18
  %224 = vmatmul.mubr.f32.gmra.mxu0 %v17
  %v225 = vpop.f32.mrf.mxu0
  %v226 = vadd.f32 %v103, %v225
  %v227 = vpop.f32.mrf.mxu0
  %228 = vmatprep.mubr.f32.mxu0 %v21
  %229 = vmatmul.mubr.f32.gmra.mxu0 %v20
  %v230 = vpop.f32.mrf.mxu0
  %v231 = vadd.f32 %v103, %v230
  %v232 = vpop.f32.mrf.mxu0
  %233 = vmatprep.mubr.f32.mxu0 %v24
  %234 = vmatmul.mubr.f32.gmra.mxu0 %v23
  %v235 = vpop.f32.mrf.mxu0
  %v236 = vadd.f32 %v103, %v235
  %v237 = vpop.f32.mrf.mxu0
  %238 = vmatprep.mubr.f32.mxu0 %v27
  %239 = vmatmul.mubr.f32.gmra.mxu0 %v26
  %v240 = vpop.f32.mrf.mxu0
  %v241 = vadd.f32 %v103, %v240
  %v242 = vpop.f32.mrf.mxu0
  %243 = vmatprep.mubr.f32.mxu0 %v30
  %244 = vmatmul.mubr.f32.gmra.mxu0 %v29
  %v245 = vpop.f32.mrf.mxu0
  %v246 = vadd.f32 %v103, %v245
  %v247 = vpop.f32.mrf.mxu0
  %248 = vmatprep.mubr.f32.mxu0 %v33
  %249 = vmatmul.mubr.f32.gmra.mxu0 %v32
  %v250 = vpop.f32.mrf.mxu0
  %v251 = vadd.f32 %v103, %v250
  %v252 = vpop.f32.mrf.mxu0
  %253 = vmatprep.mubr.f32.mxu0 %v36
  %254 = vmatmul.mubr.f32.gmra.mxu0 %v35
  %v255 = vpop.f32.mrf.mxu0
  %v256 = vadd.f32 %v103, %v255
  %v257 = vpop.f32.mrf.mxu0
  %258 = vmatprep.mubr.f32.mxu0 %v39
  %259 = vmatmul.mubr.f32.gmra.mxu0 %v38
  %v260 = vpop.f32.mrf.mxu0
  %v261 = vadd.f32 %v103, %v260
  %v262 = vpop.f32.mrf.mxu0
  %263 = vmatprep.mubr.f32.mxu0 %v42
  %264 = vmatmul.mubr.f32.gmra.mxu0 %v41
  %v265 = vpop.f32.mrf.mxu0
  %v266 = vadd.f32 %v103, %v265
  %v267 = vpop.f32.mrf.mxu0
  %268 = vmatprep.mubr.f32.mxu0 %v45
  %269 = vmatmul.mubr.f32.gmra.mxu0 %v44
  %v270 = vpop.f32.mrf.mxu0
  %v271 = vadd.f32 %v103, %v270
  %v272 = vpop.f32.mrf.mxu0
  %273 = vmatprep.mubr.f32.mxu0 %v48
  %274 = vmatmul.mubr.f32.gmra.mxu0 %v47
  %v275 = vpop.f32.mrf.mxu0
  %v276 = vadd.f32 %v103, %v275
  %v277 = vpop.f32.mrf.mxu0
  %278 = vmatprep.mubr.f32.mxu0 %v51
  %279 = vmatmul.mubr.f32.gmra.mxu0 %v50
  %v280 = vpop.f32.mrf.mxu0
  %v281 = vadd.f32 %v103, %v280
  %v282 = vpop.f32.mrf.mxu0
  %283 = vmatprep.mubr.f32.mxu0 %v54
  %284 = vmatmul.mubr.f32.gmra.mxu0 %v53
  %v285 = vpop.f32.mrf.mxu0
  %v286 = vadd.f32 %v103, %v285
  %v287 = vpop.f32.mrf.mxu0
  %288 = vmatprep.mubr.f32.mxu0 %v57
  %289 = vmatmul.mubr.f32.gmra.mxu0 %v56
  %v290 = vpop.f32.mrf.mxu0
  %v291 = vadd.f32 %v103, %v290
  %v292 = vpop.f32.mrf.mxu0
  %293 = vmatprep.mubr.f32.mxu0 %v60
  %294 = vmatmul.mubr.f32.gmra.mxu0 %v59
  %v295 = vpop.f32.mrf.mxu0
  %v296 = vadd.f32 %v103, %v295
  %v297 = vpop.f32.mrf.mxu0
  %298 = vdwg.mxu0
  %299 = vmatprep.subr.mxu0 0.0
  %300 = vmatpush1.msra.mxu0 0.0
  %301 = vmatprep.subr.mxu0 0.0
  %302 = vmatpush1.msra.mxu0 0.0
  %303 = vmatprep.subr.mxu0 0.0
  %304 = vmatpush1.msra.mxu0 0.0
  %305 = vmatprep.subr.mxu0 0.0
  %306 = vmatpush1.msra.mxu0 0.0
  %307 = vmatprep.subr.mxu0 0.0
  %308 = vmatpush1.msra.mxu0 0.0
  %309 = vmatprep.subr.mxu0 0.0
  %310 = vmatpush1.msra.mxu0 0.0
  %311 = vmatprep.subr.mxu0 0.0
  %312 = vmatpush1.msra.mxu0 0.0
  %313 = vmatprep.subr.mxu0 0.0
  %314 = vmatpush1.msra.mxu0 0.0
  %315 = vmatprep.subr.mxu0 0.0
  %316 = vmatpush1.msra.mxu0 0.0
  %317 = vmatprep.subr.mxu0 0.0
  %318 = vmatpush1.msra.mxu0 0.0
  %319 = vmatprep.subr.mxu0 0.0
  %320 = vmatpush1.msra.mxu0 0.0
  %321 = vmatprep.subr.mxu0 0.0
  %322 = vmatpush1.msra.mxu0 0.0
  %323 = vmatprep.subr.mxu0 0.0
  %324 = vmatpush1.msra.mxu0 %v97
  %325 = vmatprep.subr.mxu0 0.0
  %326 = vmatpush1.msra.mxu0 %v96
  %327 = vmatprep.subr.mxu0 0.0
  %328 = vmatpush1.msra.mxu0 %v95
  %329 = vmatprep.subr.mxu0 0.0
  %330 = vmatpush1.msra.mxu0 %v94
  %331 = vmatprep.subr.mxu0 0.0
  %332 = vmatpush2.msra.mxu0 0.0
  %333 = vmatprep.subr.mxu0 0.0
  %334 = vmatpush2.msra.mxu0 0.0
  %335 = vmatprep.subr.mxu0 0.0
  %336 = vmatpush2.msra.mxu0 0.0
  %337 = vmatprep.subr.mxu0 0.0
  %338 = vmatpush2.msra.mxu0 0.0
  %339 = vmatprep.subr.mxu0 0.0
  %340 = vmatpush2.msra.mxu0 0.0
  %341 = vmatprep.subr.mxu0 0.0
  %342 = vmatpush2.msra.mxu0 0.0
  %343 = vmatprep.subr.mxu0 0.0
  %344 = vmatpush2.msra.mxu0 0.0
  %345 = vmatprep.subr.mxu0 0.0
  %346 = vmatpush2.msra.mxu0 0.0
  %347 = vmatprep.subr.mxu0 0.0
  %348 = vmatpush2.msra.mxu0 0.0
  %349 = vmatprep.subr.mxu0 0.0
  %350 = vmatpush2.msra.mxu0 0.0
  %351 = vmatprep.subr.mxu0 0.0
  %352 = vmatpush2.msra.mxu0 0.0
  %353 = vmatprep.subr.mxu0 0.0
  %354 = vmatpush2.msra.mxu0 0.0
  %355 = vmatprep.subr.mxu0 0.0
  %356 = vmatpush2.msra.mxu0 0.0
  %357 = vmatprep.subr.mxu0 0.0
  %358 = vmatpush2.msra.mxu0 0.0
  %359 = vmatprep.subr.mxu0 0.0
  %360 = vmatpush2.msra.mxu0 0.0
  %361 = vmatprep.subr.mxu0 0.0
  %362 = vmatpush2.msra.mxu0 0.0
  %363 = vmatprep.mubr.f32.mxu0 0.0
  %364 = vmatmul.mubr.f32.gmra.mxu0 %v107
  %v365 = vpop.f32.mrf.mxu0
  %v366 = vadd.f32 %v221, %v365
  %v367 = vpop.f32.mrf.mxu0
  %368 = vmatprep.mubr.f32.mxu0 0.0
  %369 = vmatmul.mubr.f32.gmra.mxu0 %v110
  %v370 = vpop.f32.mrf.mxu0
  %v371 = vadd.f32 %v226, %v370
  %v372 = vpop.f32.mrf.mxu0
  %373 = vmatprep.mubr.f32.mxu0 0.0
  %374 = vmatmul.mubr.f32.gmra.mxu0 %v113
  %v375 = vpop.f32.mrf.mxu0
  %v376 = vadd.f32 %v231, %v375
  %v377 = vpop.f32.mrf.mxu0
  %378 = vmatprep.mubr.f32.mxu0 0.0
  %379 = vmatmul.mubr.f32.gmra.mxu0 %v116
  %v380 = vpop.f32.mrf.mxu0
  %v381 = vadd.f32 %v236, %v380
  %v382 = vpop.f32.mrf.mxu0
  %383 = vmatprep.mubr.f32.mxu0 0.0
  %384 = vmatmul.mubr.f32.gmra.mxu0 %v119
  %v385 = vpop.f32.mrf.mxu0
  %v386 = vadd.f32 %v241, %v385
  %v387 = vpop.f32.mrf.mxu0
  %388 = vmatprep.mubr.f32.mxu0 0.0
  %389 = vmatmul.mubr.f32.gmra.mxu0 %v122
  %v390 = vpop.f32.mrf.mxu0
  %v391 = vadd.f32 %v246, %v390
  %v392 = vpop.f32.mrf.mxu0
  %393 = vmatprep.mubr.f32.mxu0 0.0
  %394 = vmatmul.mubr.f32.gmra.mxu0 %v125
  %v395 = vpop.f32.mrf.mxu0
  %v396 = vadd.f32 %v251, %v395
  %v397 = vpop.f32.mrf.mxu0
  %398 = vmatprep.mubr.f32.mxu0 0.0
  %399 = vmatmul.mubr.f32.gmra.mxu0 %v128
  %v400 = vpop.f32.mrf.mxu0
  %v401 = vadd.f32 %v256, %v400
  %v402 = vpop.f32.mrf.mxu0
  %403 = vmatprep.mubr.f32.mxu0 0.0
  %404 = vmatmul.mubr.f32.gmra.mxu0 %v131
  %v405 = vpop.f32.mrf.mxu0
  %v406 = vadd.f32 %v261, %v405
  %v407 = vpop.f32.mrf.mxu0
  %408 = vmatprep.mubr.f32.mxu0 0.0
  %409 = vmatmul.mubr.f32.gmra.mxu0 %v134
  %v410 = vpop.f32.mrf.mxu0
  %v411 = vadd.f32 %v266, %v410
  %v412 = vpop.f32.mrf.mxu0
  %413 = vmatprep.mubr.f32.mxu0 0.0
  %414 = vmatmul.mubr.f32.gmra.mxu0 %v137
  %v415 = vpop.f32.mrf.mxu0
  %v416 = vadd.f32 %v271, %v415
  %v417 = vpop.f32.mrf.mxu0
  %418 = vmatprep.mubr.f32.mxu0 0.0
  %419 = vmatmul.mubr.f32.gmra.mxu0 %v140
  %v420 = vpop.f32.mrf.mxu0
  %v421 = vadd.f32 %v276, %v420
  %v422 = vpop.f32.mrf.mxu0
  %423 = vmatprep.mubr.f32.mxu0 0.0
  %424 = vmatmul.mubr.f32.gmra.mxu0 %v143
  %v425 = vpop.f32.mrf.mxu0
  %v426 = vadd.f32 %v281, %v425
  %v427 = vpop.f32.mrf.mxu0
  %428 = vmatprep.mubr.f32.mxu0 0.0
  %429 = vmatmul.mubr.f32.gmra.mxu0 %v146
  %v430 = vpop.f32.mrf.mxu0
  %v431 = vadd.f32 %v286, %v430
  %v432 = vpop.f32.mrf.mxu0
  %433 = vmatprep.mubr.f32.mxu0 0.0
  %434 = vmatmul.mubr.f32.gmra.mxu0 %v149
  %v435 = vpop.f32.mrf.mxu0
  %v436 = vadd.f32 %v291, %v435
  %v437 = vpop.f32.mrf.mxu0
  %438 = vmatprep.mubr.f32.mxu0 0.0
  %439 = vmatmul.mubr.f32.gmra.mxu0 %v152
  %v440 = vpop.f32.mrf.mxu0
  %v441 = vadd.f32 %v296, %v440
  %v442 = vpop.f32.mrf.mxu0
  %443 = vdwg.mxu0
  %v444 = vmax.f32 %v366, 0.0
  %v445 = vmax.f32 %v371, 0.0
  %v446 = vmax.f32 %v376, 0.0
  %v447 = vmax.f32 %v381, 0.0
  %v448 = vmax.f32 %v386, 0.0
  %v449 = vmax.f32 %v391, 0.0
  %v450 = vmax.f32 %v396, 0.0
  %v451 = vmax.f32 %v401, 0.0
  %v452 = vmax.f32 %v406, 0.0
  %v453 = vmax.f32 %v411, 0.0
  %v454 = vmax.f32 %v416, 0.0
  %v455 = vmax.f32 %v421, 0.0
  %v456 = vmax.f32 %v426, 0.0
  %v457 = vmax.f32 %v431, 0.0
  %v458 = vmax.f32 %v436, 0.0
  %v459 = vmax.f32 %v441, 0.0
  %v460 = vsel %vm105, %v444, 0.0
  %v461 = vsel %vm105, %v445, 0.0
  %v462 = vadd.f32 %v460, %v461
  %v463 = vrot.slane %v462, 4
  %v464 = vadd.f32 %v462, %v463
  %v465 = vrot.slane %v464, 2
  %v466 = vadd.f32 %v464, %v465
  %v467 = vrot.slane %v466, 1
  %v468 = vadd.f32 %v466, %v467
  %v469 = vsel %vm105, %v446, 0.0
  %v470 = vsel %vm105, %v447, 0.0
  %v471 = vadd.f32 %v469, %v470
  %v472 = vrot.slane %v471, 4
  %v473 = vadd.f32 %v471, %v472
  %v474 = vrot.slane %v473, 2
  %v475 = vadd.f32 %v473, %v474
  %v476 = vrot.slane %v475, 1
  %v477 = vadd.f32 %v475, %v476
  %v478 = vsel %vm105, %v448, 0.0
  %v479 = vsel %vm105, %v449, 0.0
  %v480 = vadd.f32 %v478, %v479
  %v481 = vrot.slane %v480, 4
  %v482 = vadd.f32 %v480, %v481
  %v483 = vrot.slane %v482, 2
  %v484 = vadd.f32 %v482, %v483
  %v485 = vrot.slane %v484, 1
  %v486 = vadd.f32 %v484, %v485
  %v487 = vsel %vm105, %v450, 0.0
  %v488 = vsel %vm105, %v451, 0.0
  %v489 = vadd.f32 %v487, %v488
  %v490 = vrot.slane %v489, 4
  %v491 = vadd.f32 %v489, %v490
  %v492 = vrot.slane %v491, 2
  %v493 = vadd.f32 %v491, %v492
  %v494 = vrot.slane %v493, 1
  %v495 = vadd.f32 %v493, %v494
  %v496 = vsel %vm105, %v452, 0.0
  %v497 = vsel %vm105, %v453, 0.0
  %v498 = vadd.f32 %v496, %v497
  %v499 = vrot.slane %v498, 4
  %v500 = vadd.f32 %v498, %v499
  %v501 = vrot.slane %v500, 2
  %v502 = vadd.f32 %v500, %v501
  %v503 = vrot.slane %v502, 1
  %v504 = vadd.f32 %v502, %v503
  %v505 = vsel %vm105, %v454, 0.0
  %v506 = vsel %vm105, %v455, 0.0
  %v507 = vadd.f32 %v505, %v506
  %v508 = vrot.slane %v507, 4
  %v509 = vadd.f32 %v507, %v508
  %v510 = vrot.slane %v509, 2
  %v511 = vadd.f32 %v509, %v510
  %v512 = vrot.slane %v511, 1
  %v513 = vadd.f32 %v511, %v512
  %v514 = vsel %vm105, %v456, 0.0
  %v515 = vsel %vm105, %v457, 0.0
  %v516 = vadd.f32 %v514, %v515
  %v517 = vrot.slane %v516, 4
  %v518 = vadd.f32 %v516, %v517
  %v519 = vrot.slane %v518, 2
  %v520 = vadd.f32 %v518, %v519
  %v521 = vrot.slane %v520, 1
  %v522 = vadd.f32 %v520, %v521
  %v523 = vsel %vm105, %v458, 0.0
  %v524 = vsel %vm105, %v459, 0.0
  %v525 = vadd.f32 %v523, %v524
  %v526 = vrot.slane %v525, 4
  %v527 = vadd.f32 %v525, %v526
  %v528 = vrot.slane %v527, 2
  %v529 = vadd.f32 %v527, %v528
  %v530 = vrot.slane %v529, 1
  %v531 = vadd.f32 %v529, %v530
  %v532 = vrcp.pop 16.0
  %v533 = vmul.f32 %v468, %v532
  %v534 = vmul.f32 %v477, %v532
  %v535 = vmul.f32 %v486, %v532
  %v536 = vmul.f32 %v495, %v532
  %v537 = vmul.f32 %v504, %v532
  %v538 = vmul.f32 %v513, %v532
  %v539 = vmul.f32 %v522, %v532
  %v540 = vmul.f32 %v531, %v532
  %vm549 = vcmask 1041409
  %v550 = vsel %vm549, %v534, %v533
  %vm551 = vcmask 1042434
  %v552 = vsel %vm551, %v535, %v550
  %vm553 = vcmask 1043459
  %v554 = vsel %vm553, %v536, %v552
  %vm555 = vcmask 1044484
  %v556 = vsel %vm555, %v537, %v554
  %vm557 = vcmask 1045509
  %v558 = vsel %vm557, %v538, %v556
  %vm559 = vcmask 1046534
  %v560 = vsel %vm559, %v539, %v558
  %vm561 = vcmask 1047559
  %v562 = vsel %vm561, %v540, %v560
  %564 = vst.msk [vmem:[%s3] sm:$0xff] %vm105, %v562
  // Predicated region
  $region14: #{lstm_scratch_forward.6} parent=0 // pred_check
    _
  $region15: #{lstm_scratch_forward.6} parent=0 // pred_check_branch
    %566 = sbr.rel (0) target = $region17
  $region16: #{lstm_scratch_forward.6} parent=0 // pred_region
    _
  $region17: #{lstm_scratch_forward.6} parent=0 // pred_fallthru
    _
  // Predicated region
  $region18: #{lstm_scratch_forward.6} parent=0 // pred_check
    _
  $region19: #{lstm_scratch_forward.6} parent=0 // pred_check_branch
    %568 = sbr.rel (0) target = $region21
  $region20: #{lstm_scratch_forward.6} parent=0 // pred_region
    _
  $region21: #{lstm_scratch_forward.6} parent=0 // pred_fallthru
    _

// kernel: lstm_scratch_forward.7
$region0: #{lstm_scratch_forward.7}
  #allocation0 [shape = 'u32[]', space=smem, size = 0x4, offset = 0x4, fixed_abs, tag = 'smem constant byte address 0x4 - core index']
  #allocation1 [shape = 'u32[144,128]{1,0:T(1,128)}', space=vmem, size = 0x12000, scoped, tag = 'internal scratch']
  %s0 = inlined_call_operand.vmem [shape: f32[4,8,32], index: 0, kind: input, shape index: {}]
  %s1 = inlined_call_operand.vmem [shape: f32[64,128], index: 1, kind: input, shape index: {}]
  %s2 = inlined_call_operand.vmem [shape: f32[1,128], index: 2, kind: input, shape index: {}]
  %s3 = inlined_call_operand.vmem [shape: f32[64,128], index: 3, kind: input, shape index: {}]
  %s4 = inlined_call_operand.vmem [shape: f32[1,128], index: 4, kind: input, shape index: {}]
  %s5 = inlined_call_operand.vmem [shape: f32[32,6], index: 5, kind: input, shape index: {}]
  %s6 = inlined_call_operand.vmem [shape: f32[1,6], index: 6, kind: input, shape index: {}]
  %s7 = inlined_call_operand.vmem [shape: f32[8,6], index: 7, kind: output, shape index: {}]
  %s8 = sld [smem:[#allocation0]]
  $region38: #{lstm_scratch_forward.7} parent=0
    _
  %s10 = ssub.s32 1, %s8
  %s11 = scalar_select 0, %s10, %s8
  // Predicated region
  $region2: #{lstm_scratch_forward.7} parent=0 // pred_check
    _
  $region3: #{lstm_scratch_forward.7} parent=0 // pred_check_branch
    %13 = sbr.rel (0) target = $region5
  $region4: #{lstm_scratch_forward.7} parent=0 // pred_region
    _
  $region5: #{lstm_scratch_forward.7} parent=0 // pred_fallthru
    _
  // Predicated region
  $region6: #{lstm_scratch_forward.7} parent=0 // pred_check
    _
  $region7: #{lstm_scratch_forward.7} parent=0 // pred_check_branch
    %15 = sbr.rel (0) target = $region9
  $region8: #{lstm_scratch_forward.7} parent=0 // pred_region
    _
  $region9: #{lstm_scratch_forward.7} parent=0 // pred_fallthru
    _
  // Predicated region
  $region10: #{lstm_scratch_forward.7} parent=0 // pred_check
    _
  $region11: #{lstm_scratch_forward.7} parent=0 // pred_check_branch
    %17 = sbr.rel (0) target = $region13
  $region12: #{lstm_scratch_forward.7} parent=0 // pred_region
    _
  $region13: #{lstm_scratch_forward.7} parent=0 // pred_fallthru
    _
  // Predicated region
  $region14: #{lstm_scratch_forward.7} parent=0 // pred_check
    _
  $region15: #{lstm_scratch_forward.7} parent=0 // pred_check_branch
    %19 = sbr.rel (0) target = $region17
  $region16: #{lstm_scratch_forward.7} parent=0 // pred_region
    _
  $region17: #{lstm_scratch_forward.7} parent=0 // pred_fallthru
    _
  // Predicated region
  $region18: #{lstm_scratch_forward.7} parent=0 // pred_check
    _
  $region19: #{lstm_scratch_forward.7} parent=0 // pred_check_branch
    %21 = sbr.rel (0) target = $region21
  $region20: #{lstm_scratch_forward.7} parent=0 // pred_region
    _
  $region21: #{lstm_scratch_forward.7} parent=0 // pred_fallthru
    _
  // Predicated region
  $region22: #{lstm_scratch_forward.7} parent=0 // pred_check
    _
  $region23: #{lstm_scratch_forward.7} parent=0 // pred_check_branch
    %23 = sbr.rel (0) target = $region25
  $region24: #{lstm_scratch_forward.7} parent=0 // pred_region
    _
  $region25: #{lstm_scratch_forward.7} parent=0 // pred_fallthru
    _
  // Predicated region
  $region26: #{lstm_scratch_forward.7} parent=0 // pred_check
    _
  $region27: #{lstm_scratch_forward.7} parent=0 // pred_check_branch
    %25 = sbr.rel (0) target = $region29
  $region28: #{lstm_scratch_forward.7} parent=0 // pred_region
    _
  $region29: #{lstm_scratch_forward.7} parent=0 // pred_fallthru
    _
  %v26 = vld [vmem:[%s0] sm:$0xff]
  %vm27 = vcmask 261120
  %v28 = vsel %vm27, %v26, 0.0
  %v29 = vld [vmem:[%s1] sm:$0xff]
  %v30 = vld [vmem:[%s1 + $0x8] sm:$0xff]
  %v31 = vld [vmem:[%s1 + $0x10] sm:$0xff]
  %v32 = vld [vmem:[%s1 + $0x18] sm:$0xff]
  %v33 = vld [vmem:[%s1 + $0x20] sm:$0xff]
  %v34 = vld [vmem:[%s1 + $0x28] sm:$0xff]
  %v35 = vld [vmem:[%s1 + $0x30] sm:$0xff]
  %v36 = vld [vmem:[%s1 + $0x38] sm:$0xff]
  %v37 = vld [vmem:[%s2] sm:$0x1]
  %v39 = vlaneseq
  %v40 = vshrl.u32 %v39, 7
  %v41 = vsub.s32 0, %v40
  %v42 = vrot.slane %v37, %v41
  %vm44 = vcmask 523264
  %v46 = vsel %vm44, %v28, 0
  %48 = vmatprep.subr.mxu0 0.0
  %49 = vmatpush1.msra.mxu0 0.0
  %50 = vmatprep.subr.mxu0 0.0
  %51 = vmatpush1.msra.mxu0 0.0
  %52 = vmatprep.subr.mxu0 0.0
  %53 = vmatpush1.msra.mxu0 0.0
  %54 = vmatprep.subr.mxu0 0.0
  %55 = vmatpush1.msra.mxu0 0.0
  %56 = vmatprep.subr.mxu0 0.0
  %57 = vmatpush1.msra.mxu0 0.0
  %58 = vmatprep.subr.mxu0 0.0
  %59 = vmatpush1.msra.mxu0 0.0
  %60 = vmatprep.subr.mxu0 0.0
  %61 = vmatpush1.msra.mxu0 0.0
  %62 = vmatprep.subr.mxu0 0.0
  %63 = vmatpush1.msra.mxu0 0.0
  %64 = vmatprep.subr.mxu0 0.0
  %65 = vmatpush1.msra.mxu0 %v36
  %66 = vmatprep.subr.mxu0 0.0
  %67 = vmatpush1.msra.mxu0 %v35
  %68 = vmatprep.subr.mxu0 0.0
  %69 = vmatpush1.msra.mxu0 %v34
  %70 = vmatprep.subr.mxu0 0.0
  %71 = vmatpush1.msra.mxu0 %v33
  %72 = vmatprep.subr.mxu0 0.0
  %73 = vmatpush1.msra.mxu0 %v32
  %74 = vmatprep.subr.mxu0 0.0
  %75 = vmatpush1.msra.mxu0 %v31
  %76 = vmatprep.subr.mxu0 0.0
  %77 = vmatpush1.msra.mxu0 %v30
  %78 = vmatprep.subr.mxu0 0.0
  %79 = vmatpush1.msra.mxu0 %v29
  %80 = vmatprep.subr.mxu0 0.0
  %81 = vmatpush2.msra.mxu0 0.0
  %82 = vmatprep.subr.mxu0 0.0
  %83 = vmatpush2.msra.mxu0 0.0
  %84 = vmatprep.subr.mxu0 0.0
  %85 = vmatpush2.msra.mxu0 0.0
  %86 = vmatprep.subr.mxu0 0.0
  %87 = vmatpush2.msra.mxu0 0.0
  %88 = vmatprep.subr.mxu0 0.0
  %89 = vmatpush2.msra.mxu0 0.0
  %90 = vmatprep.subr.mxu0 0.0
  %91 = vmatpush2.msra.mxu0 0.0
  %92 = vmatprep.subr.mxu0 0.0
  %93 = vmatpush2.msra.mxu0 0.0
  %94 = vmatprep.subr.mxu0 0.0
  %95 = vmatpush2.msra.mxu0 0.0
  %96 = vmatprep.subr.mxu0 0.0
  %97 = vmatpush2.msra.mxu0 0.0
  %98 = vmatprep.subr.mxu0 0.0
  %99 = vmatpush2.msra.mxu0 0.0
  %100 = vmatprep.subr.mxu0 0.0
  %101 = vmatpush2.msra.mxu0 0.0
  %102 = vmatprep.subr.mxu0 0.0
  %103 = vmatpush2.msra.mxu0 0.0
  %104 = vmatprep.subr.mxu0 0.0
  %105 = vmatpush2.msra.mxu0 0.0
  %106 = vmatprep.subr.mxu0 0.0
  %107 = vmatpush2.msra.mxu0 0.0
  %108 = vmatprep.subr.mxu0 0.0
  %109 = vmatpush2.msra.mxu0 0.0
  %110 = vmatprep.subr.mxu0 0.0
  %111 = vmatpush2.msra.mxu0 0.0
  %112 = vmatprep.mubr.f32.mxu0 0.0
  %113 = vmatmul.mubr.f32.gmra.mxu0 %v46
  %v114 = vpop.f32.mrf.mxu0
  %v115 = vadd.f32 %v42, %v114
  %v116 = vpop.f32.mrf.mxu0
  %117 = vdwg.mxu0
  %v118 = vxor.u32 %v115, 2147483648
  %v119 = vmul.f32 %v118, 1.442695
  %v120 = vpow.pop %v119
  %v121 = vadd.f32 %v120, 1.0
  %v122 = vrcp.pop %v121
  %v123 = vmul.f32 1.0, %v122
  %v124 = vtanh.pop %v115
  %v125 = vmul.f32 %v123, 0.0
  %127 = vrot.lane.b32.xlu0 %v124, 96
  %v128 = vpop.permute.xlu0 %127
  %v130 = vmul.f32 %v123, %v128
  %132 = vrot.lane.b32.xlu0 %v130, 96
  %v133 = vpop.permute.xlu0 %132
  %v135 = vadd.f32 %v125, %v133
  %v136 = vtanh.pop %v135
  %138 = vrot.lane.b32.xlu0 %v136, 96
  %v139 = vpop.permute.xlu0 %138
  %v141 = vmul.f32 %v123, %v139
  %143 = vrot.lane.b32.xlu0 %v141, 32
  %v144 = vpop.permute.xlu0 %143
  %v146 = vsel %vm27, %v144, 0.0
  %v147 = vld [vmem:[%s3] sm:$0xff]
  %v148 = vld [vmem:[%s3 + $0x8] sm:$0xff]
  %v149 = vld [vmem:[%s3 + $0x10] sm:$0xff]
  %v150 = vld [vmem:[%s3 + $0x18] sm:$0xff]
  %v151 = vld [vmem:[%s3 + $0x20] sm:$0xff]
  %v152 = vld [vmem:[%s3 + $0x28] sm:$0xff]
  %v153 = vld [vmem:[%s3 + $0x30] sm:$0xff]
  %v154 = vld [vmem:[%s3 + $0x38] sm:$0xff]
  %v155 = vld [vmem:[%s4] sm:$0x1]
  %v157 = vlaneseq
  %v158 = vshrl.u32 %v157, 7
  %v159 = vsub.s32 0, %v158
  %v160 = vrot.slane %v155, %v159
  %v163 = vsel %vm44, %v146, 0
  %165 = vmatprep.subr.mxu0 0.0
  %166 = vmatpush1.msra.mxu0 0.0
  %167 = vmatprep.subr.mxu0 0.0
  %168 = vmatpush1.msra.mxu0 0.0
  %169 = vmatprep.subr.mxu0 0.0
  %170 = vmatpush1.msra.mxu0 0.0
  %171 = vmatprep.subr.mxu0 0.0
  %172 = vmatpush1.msra.mxu0 0.0
  %173 = vmatprep.subr.mxu0 0.0
  %174 = vmatpush1.msra.mxu0 0.0
  %175 = vmatprep.subr.mxu0 0.0
  %176 = vmatpush1.msra.mxu0 0.0
  %177 = vmatprep.subr.mxu0 0.0
  %178 = vmatpush1.msra.mxu0 0.0
  %179 = vmatprep.subr.mxu0 0.0
  %180 = vmatpush1.msra.mxu0 0.0
  %181 = vmatprep.subr.mxu0 0.0
  %182 = vmatpush1.msra.mxu0 %v154
  %183 = vmatprep.subr.mxu0 0.0
  %184 = vmatpush1.msra.mxu0 %v153
  %185 = vmatprep.subr.mxu0 0.0
  %186 = vmatpush1.msra.mxu0 %v152
  %187 = vmatprep.subr.mxu0 0.0
  %188 = vmatpush1.msra.mxu0 %v151
  %189 = vmatprep.subr.mxu0 0.0
  %190 = vmatpush1.msra.mxu0 %v150
  %191 = vmatprep.subr.mxu0 0.0
  %192 = vmatpush1.msra.mxu0 %v149
  %193 = vmatprep.subr.mxu0 0.0
  %194 = vmatpush1.msra.mxu0 %v148
  %195 = vmatprep.subr.mxu0 0.0
  %196 = vmatpush1.msra.mxu0 %v147
  %197 = vmatprep.subr.mxu0 0.0
  %198 = vmatpush2.msra.mxu0 0.0
  %199 = vmatprep.subr.mxu0 0.0
  %200 = vmatpush2.msra.mxu0 0.0
  %201 = vmatprep.subr.mxu0 0.0
  %202 = vmatpush2.msra.mxu0 0.0
  %203 = vmatprep.subr.mxu0 0.0
  %204 = vmatpush2.msra.mxu0 0.0
  %205 = vmatprep.subr.mxu0 0.0
  %206 = vmatpush2.msra.mxu0 0.0
  %207 = vmatprep.subr.mxu0 0.0
  %208 = vmatpush2.msra.mxu0 0.0
  %209 = vmatprep.subr.mxu0 0.0
  %210 = vmatpush2.msra.mxu0 0.0
  %211 = vmatprep.subr.mxu0 0.0
  %212 = vmatpush2.msra.mxu0 0.0
  %213 = vmatprep.subr.mxu0 0.0
  %214 = vmatpush2.msra.mxu0 0.0
  %215 = vmatprep.subr.mxu0 0.0
  %216 = vmatpush2.msra.mxu0 0.0
  %217 = vmatprep.subr.mxu0 0.0
  %218 = vmatpush2.msra.mxu0 0.0
  %219 = vmatprep.subr.mxu0 0.0
  %220 = vmatpush2.msra.mxu0 0.0
  %221 = vmatprep.subr.mxu0 0.0
  %222 = vmatpush2.msra.mxu0 0.0
  %223 = vmatprep.subr.mxu0 0.0
  %224 = vmatpush2.msra.mxu0 0.0
  %225 = vmatprep.subr.mxu0 0.0
  %226 = vmatpush2.msra.mxu0 0.0
  %227 = vmatprep.subr.mxu0 0.0
  %228 = vmatpush2.msra.mxu0 0.0
  %229 = vmatprep.mubr.f32.mxu0 0.0
  %230 = vmatmul.mubr.f32.gmra.mxu0 %v163
  %v231 = vpop.f32.mrf.mxu0
  %v232 = vadd.f32 %v160, %v231
  %v233 = vpop.f32.mrf.mxu0
  %234 = vdwg.mxu0
  %v235 = vxor.u32 %v232, 2147483648
  %v236 = vmul.f32 %v235, 1.442695
  %v237 = vpow.pop %v236
  %v238 = vadd.f32 %v237, 1.0
  %v239 = vrcp.pop %v238
  %v240 = vmul.f32 1.0, %v239
  %v241 = vtanh.pop %v232
  %v242 = vmul.f32 %v240, 0.0
  %244 = vrot.lane.b32.xlu0 %v241, 96
  %v245 = vpop.permute.xlu0 %244
  %v247 = vmul.f32 %v240, %v245
  %249 = vrot.lane.b32.xlu0 %v247, 96
  %v250 = vpop.permute.xlu0 %249
  %v252 = vadd.f32 %v242, %v250
  %v253 = vtanh.pop %v252
  %255 = vrot.lane.b32.xlu0 %v253, 96
  %v256 = vpop.permute.xlu0 %255
  %v258 = vmul.f32 %v240, %v256
  %s259 = scalar_lea.vmem %s0, 8
  %v260 = vld [vmem:[%s259] sm:$0xff]
  %261 = vrot.lane.b32.xlu0 %v141, 64
  %v262 = vpop.permute.xlu0 %261
  %v264 = vsel %vm27, %v260, %v262
  %v266 = vsel %vm44, %v264, 0
  %268 = vmatprep.subr.mxu0 0.0
  %269 = vmatpush1.msra.mxu0 0.0
  %270 = vmatprep.subr.mxu0 0.0
  %271 = vmatpush1.msra.mxu0 0.0
  %272 = vmatprep.subr.mxu0 0.0
  %273 = vmatpush1.msra.mxu0 0.0
  %274 = vmatprep.subr.mxu0 0.0
  %275 = vmatpush1.msra.mxu0 0.0
  %276 = vmatprep.subr.mxu0 0.0
  %277 = vmatpush1.msra.mxu0 0.0
  %278 = vmatprep.subr.mxu0 0.0
  %279 = vmatpush1.msra.mxu0 0.0
  %280 = vmatprep.subr.mxu0 0.0
  %281 = vmatpush1.msra.mxu0 0.0
  %282 = vmatprep.subr.mxu0 0.0
  %283 = vmatpush1.msra.mxu0 0.0
  %284 = vmatprep.subr.mxu0 0.0
  %285 = vmatpush1.msra.mxu0 %v36
  %286 = vmatprep.subr.mxu0 0.0
  %287 = vmatpush1.msra.mxu0 %v35
  %288 = vmatprep.subr.mxu0 0.0
  %289 = vmatpush1.msra.mxu0 %v34
  %290 = vmatprep.subr.mxu0 0.0
  %291 = vmatpush1.msra.mxu0 %v33
  %292 = vmatprep.subr.mxu0 0.0
  %293 = vmatpush1.msra.mxu0 %v32
  %294 = vmatprep.subr.mxu0 0.0
  %295 = vmatpush1.msra.mxu0 %v31
  %296 = vmatprep.subr.mxu0 0.0
  %297 = vmatpush1.msra.mxu0 %v30
  %298 = vmatprep.subr.mxu0 0.0
  %299 = vmatpush1.msra.mxu0 %v29
  %300 = vmatprep.subr.mxu0 0.0
  %301 = vmatpush2.msra.mxu0 0.0
  %302 = vmatprep.subr.mxu0 0.0
  %303 = vmatpush2.msra.mxu0 0.0
  %304 = vmatprep.subr.mxu0 0.0
  %305 = vmatpush2.msra.mxu0 0.0
  %306 = vmatprep.subr.mxu0 0.0
  %307 = vmatpush2.msra.mxu0 0.0
  %308 = vmatprep.subr.mxu0 0.0
  %309 = vmatpush2.msra.mxu0 0.0
  %310 = vmatprep.subr.mxu0 0.0
  %311 = vmatpush2.msra.mxu0 0.0
  %312 = vmatprep.subr.mxu0 0.0
  %313 = vmatpush2.msra.mxu0 0.0
  %314 = vmatprep.subr.mxu0 0.0
  %315 = vmatpush2.msra.mxu0 0.0
  %316 = vmatprep.subr.mxu0 0.0
  %317 = vmatpush2.msra.mxu0 0.0
  %318 = vmatprep.subr.mxu0 0.0
  %319 = vmatpush2.msra.mxu0 0.0
  %320 = vmatprep.subr.mxu0 0.0
  %321 = vmatpush2.msra.mxu0 0.0
  %322 = vmatprep.subr.mxu0 0.0
  %323 = vmatpush2.msra.mxu0 0.0
  %324 = vmatprep.subr.mxu0 0.0
  %325 = vmatpush2.msra.mxu0 0.0
  %326 = vmatprep.subr.mxu0 0.0
  %327 = vmatpush2.msra.mxu0 0.0
  %328 = vmatprep.subr.mxu0 0.0
  %329 = vmatpush2.msra.mxu0 0.0
  %330 = vmatprep.subr.mxu0 0.0
  %331 = vmatpush2.msra.mxu0 0.0
  %332 = vmatprep.mubr.f32.mxu0 0.0
  %333 = vmatmul.mubr.f32.gmra.mxu0 %v266
  %v334 = vpop.f32.mrf.mxu0
  %v335 = vadd.f32 %v42, %v334
  %v336 = vpop.f32.mrf.mxu0
  %337 = vdwg.mxu0
  %v338 = vxor.u32 %v335, 2147483648
  %v339 = vmul.f32 %v338, 1.442695
  %v340 = vpow.pop %v339
  %v341 = vadd.f32 %v340, 1.0
  %v342 = vrcp.pop %v341
  %v343 = vmul.f32 1.0, %v342
  %v344 = vtanh.pop %v335
  %v345 = vmul.f32 %v343, %v135
  %347 = vrot.lane.b32.xlu0 %v344, 96
  %v348 = vpop.permute.xlu0 %347
  %v350 = vmul.f32 %v343, %v348
  %352 = vrot.lane.b32.xlu0 %v350, 96
  %v353 = vpop.permute.xlu0 %352
  %v355 = vadd.f32 %v345, %v353
  %v356 = vtanh.pop %v355
  %358 = vrot.lane.b32.xlu0 %v356, 96
  %v359 = vpop.permute.xlu0 %358
  %v361 = vmul.f32 %v343, %v359
  %363 = vrot.lane.b32.xlu0 %v361, 32
  %v364 = vpop.permute.xlu0 %363
  %367 = vrot.lane.b32.xlu0 %v258, 64
  %v368 = vpop.permute.xlu0 %367
  %v370 = vsel %vm27, %v364, %v368
  %v372 = vsel %vm44, %v370, 0
  %374 = vmatprep.subr.mxu0 0.0
  %375 = vmatpush1.msra.mxu0 0.0
  %376 = vmatprep.subr.mxu0 0.0
  %377 = vmatpush1.msra.mxu0 0.0
  %378 = vmatprep.subr.mxu0 0.0
  %379 = vmatpush1.msra.mxu0 0.0
  %380 = vmatprep.subr.mxu0 0.0
  %381 = vmatpush1.msra.mxu0 0.0
  %382 = vmatprep.subr.mxu0 0.0
  %383 = vmatpush1.msra.mxu0 0.0
  %384 = vmatprep.subr.mxu0 0.0
  %385 = vmatpush1.msra.mxu0 0.0
  %386 = vmatprep.subr.mxu0 0.0
  %387 = vmatpush1.msra.mxu0 0.0
  %388 = vmatprep.subr.mxu0 0.0
  %389 = vmatpush1.msra.mxu0 0.0
  %390 = vmatprep.subr.mxu0 0.0
  %391 = vmatpush1.msra.mxu0 %v154
  %392 = vmatprep.subr.mxu0 0.0
  %393 = vmatpush1.msra.mxu0 %v153
  %394 = vmatprep.subr.mxu0 0.0
  %395 = vmatpush1.msra.mxu0 %v152
  %396 = vmatprep.subr.mxu0 0.0
  %397 = vmatpush1.msra.mxu0 %v151
  %398 = vmatprep.subr.mxu0 0.0
  %399 = vmatpush1.msra.mxu0 %v150
  %400 = vmatprep.subr.mxu0 0.0
  %401 = vmatpush1.msra.mxu0 %v149
  %402 = vmatprep.subr.mxu0 0.0
  %403 = vmatpush1.msra.mxu0 %v148
  %404 = vmatprep.subr.mxu0 0.0
  %405 = vmatpush1.msra.mxu0 %v147
  %406 = vmatprep.subr.mxu0 0.0
  %407 = vmatpush2.msra.mxu0 0.0
  %408 = vmatprep.subr.mxu0 0.0
  %409 = vmatpush2.msra.mxu0 0.0
  %410 = vmatprep.subr.mxu0 0.0
  %411 = vmatpush2.msra.mxu0 0.0
  %412 = vmatprep.subr.mxu0 0.0
  %413 = vmatpush2.msra.mxu0 0.0
  %414 = vmatprep.subr.mxu0 0.0
  %415 = vmatpush2.msra.mxu0 0.0
  %416 = vmatprep.subr.mxu0 0.0
  %417 = vmatpush2.msra.mxu0 0.0
  %418 = vmatprep.subr.mxu0 0.0
  %419 = vmatpush2.msra.mxu0 0.0
  %420 = vmatprep.subr.mxu0 0.0
  %421 = vmatpush2.msra.mxu0 0.0
  %422 = vmatprep.subr.mxu0 0.0
  %423 = vmatpush2.msra.mxu0 0.0
  %424 = vmatprep.subr.mxu0 0.0
  %425 = vmatpush2.msra.mxu0 0.0
  %426 = vmatprep.subr.mxu0 0.0
  %427 = vmatpush2.msra.mxu0 0.0
  %428 = vmatprep.subr.mxu0 0.0
  %429 = vmatpush2.msra.mxu0 0.0
  %430 = vmatprep.subr.mxu0 0.0
  %431 = vmatpush2.msra.mxu0 0.0
  %432 = vmatprep.subr.mxu0 0.0
  %433 = vmatpush2.msra.mxu0 0.0
  %434 = vmatprep.subr.mxu0 0.0
  %435 = vmatpush2.msra.mxu0 0.0
  %436 = vmatprep.subr.mxu0 0.0
  %437 = vmatpush2.msra.mxu0 0.0
  %438 = vmatprep.mubr.f32.mxu0 0.0
  %439 = vmatmul.mubr.f32.gmra.mxu0 %v372
  %v440 = vpop.f32.mrf.mxu0
  %v441 = vadd.f32 %v160, %v440
  %v442 = vpop.f32.mrf.mxu0
  %443 = vdwg.mxu0
  %v444 = vxor.u32 %v441, 2147483648
  %v445 = vmul.f32 %v444, 1.442695
  %v446 = vpow.pop %v445
  %v447 = vadd.f32 %v446, 1.0
  %v448 = vrcp.pop %v447
  %v449 = vmul.f32 1.0, %v448
  %v450 = vtanh.pop %v441
  %v451 = vmul.f32 %v449, %v252
  %453 = vrot.lane.b32.xlu0 %v450, 96
  %v454 = vpop.permute.xlu0 %453
  %v456 = vmul.f32 %v449, %v454
  %458 = vrot.lane.b32.xlu0 %v456, 96
  %v459 = vpop.permute.xlu0 %458
  %v461 = vadd.f32 %v451, %v459
  %v462 = vtanh.pop %v461
  %464 = vrot.lane.b32.xlu0 %v462, 96
  %v465 = vpop.permute.xlu0 %464
  %v467 = vmul.f32 %v449, %v465
  %s468 = scalar_lea.vmem %s0, 16
  %v469 = vld [vmem:[%s468] sm:$0xff]
  %470 = vrot.lane.b32.xlu0 %v361, 64
  %v471 = vpop.permute.xlu0 %470
  %v473 = vsel %vm27, %v469, %v471
  %v475 = vsel %vm44, %v473, 0
  %477 = vmatprep.subr.mxu0 0.0
  %478 = vmatpush1.msra.mxu0 0.0
  %479 = vmatprep.subr.mxu0 0.0
  %480 = vmatpush1.msra.mxu0 0.0
  %481 = vmatprep.subr.mxu0 0.0
  %482 = vmatpush1.msra.mxu0 0.0
  %483 = vmatprep.subr.mxu0 0.0
  %484 = vmatpush1.msra.mxu0 0.0
  %485 = vmatprep.subr.mxu0 0.0
  %486 = vmatpush1.msra.mxu0 0.0
  %487 = vmatprep.subr.mxu0 0.0
  %488 = vmatpush1.msra.mxu0 0.0
  %489 = vmatprep.subr.mxu0 0.0
  %490 = vmatpush1.msra.mxu0 0.0
  %491 = vmatprep.subr.mxu0 0.0
  %492 = vmatpush1.msra.mxu0 0.0
  %493 = vmatprep.subr.mxu0 0.0
  %494 = vmatpush1.msra.mxu0 %v36
  %495 = vmatprep.subr.mxu0 0.0
  %496 = vmatpush1.msra.mxu0 %v35
  %497 = vmatprep.subr.mxu0 0.0
  %498 = vmatpush1.msra.mxu0 %v34
  %499 = vmatprep.subr.mxu0 0.0
  %500 = vmatpush1.msra.mxu0 %v33
  %501 = vmatprep.subr.mxu0 0.0
  %502 = vmatpush1.msra.mxu0 %v32
  %503 = vmatprep.subr.mxu0 0.0
  %504 = vmatpush1.msra.mxu0 %v31
  %505 = vmatprep.subr.mxu0 0.0
  %506 = vmatpush1.msra.mxu0 %v30
  %507 = vmatprep.subr.mxu0 0.0
  %508 = vmatpush1.msra.mxu0 %v29
  %509 = vmatprep.subr.mxu0 0.0
  %510 = vmatpush2.msra.mxu0 0.0
  %511 = vmatprep.subr.mxu0 0.0
  %512 = vmatpush2.msra.mxu0 0.0
  %513 = vmatprep.subr.mxu0 0.0
  %514 = vmatpush2.msra.mxu0 0.0
  %515 = vmatprep.subr.mxu0 0.0
  %516 = vmatpush2.msra.mxu0 0.0
  %517 = vmatprep.subr.mxu0 0.0
  %518 = vmatpush2.msra.mxu0 0.0
  %519 = vmatprep.subr.mxu0 0.0
  %520 = vmatpush2.msra.mxu0 0.0
  %521 = vmatprep.subr.mxu0 0.0
  %522 = vmatpush2.msra.mxu0 0.0
  %523 = vmatprep.subr.mxu0 0.0
  %524 = vmatpush2.msra.mxu0 0.0
  %525 = vmatprep.subr.mxu0 0.0
  %526 = vmatpush2.msra.mxu0 0.0
  %527 = vmatprep.subr.mxu0 0.0
  %528 = vmatpush2.msra.mxu0 0.0
  %529 = vmatprep.subr.mxu0 0.0
  %530 = vmatpush2.msra.mxu0 0.0
  %531 = vmatprep.subr.mxu0 0.0
  %532 = vmatpush2.msra.mxu0 0.0
  %533 = vmatprep.subr.mxu0 0.0
  %534 = vmatpush2.msra.mxu0 0.0
  %535 = vmatprep.subr.mxu0 0.0
  %536 = vmatpush2.msra.mxu0 0.0
  %537 = vmatprep.subr.mxu0 0.0
  %538 = vmatpush2.msra.mxu0 0.0
  %539 = vmatprep.subr.mxu0 0.0
  %540 = vmatpush2.msra.mxu0 0.0
  %541 = vmatprep.mubr.f32.mxu0 0.0
  %542 = vmatmul.mubr.f32.gmra.mxu0 %v475
  %v543 = vpop.f32.mrf.mxu0
  %v544 = vadd.f32 %v42, %v543
  %v545 = vpop.f32.mrf.mxu0
  %546 = vdwg.mxu0
  %v547 = vxor.u32 %v544, 2147483648
  %v548 = vmul.f32 %v547, 1.442695
  %v549 = vpow.pop %v548
  %v550 = vadd.f32 %v549, 1.0
  %v551 = vrcp.pop %v550
  %v552 = vmul.f32 1.0, %v551
  %v553 = vtanh.pop %v544
  %v554 = vmul.f32 %v552, %v355
  %556 = vrot.lane.b32.xlu0 %v553, 96
  %v557 = vpop.permute.xlu0 %556
  %v559 = vmul.f32 %v552, %v557
  %561 = vrot.lane.b32.xlu0 %v559, 96
  %v562 = vpop.permute.xlu0 %561
  %v564 = vadd.f32 %v554, %v562
  %v565 = vtanh.pop %v564
  %567 = vrot.lane.b32.xlu0 %v565, 96
  %v568 = vpop.permute.xlu0 %567
  %v570 = vmul.f32 %v552, %v568
  %572 = vrot.lane.b32.xlu0 %v570, 32
  %v573 = vpop.permute.xlu0 %572
  %576 = vrot.lane.b32.xlu0 %v467, 64
  %v577 = vpop.permute.xlu0 %576
  %v579 = vsel %vm27, %v573, %v577
  %v581 = vsel %vm44, %v579, 0
  %583 = vmatprep.subr.mxu0 0.0
  %584 = vmatpush1.msra.mxu0 0.0
  %585 = vmatprep.subr.mxu0 0.0
  %586 = vmatpush1.msra.mxu0 0.0
  %587 = vmatprep.subr.mxu0 0.0
  %588 = vmatpush1.msra.mxu0 0.0
  %589 = vmatprep.subr.mxu0 0.0
  %590 = vmatpush1.msra.mxu0 0.0
  %591 = vmatprep.subr.mxu0 0.0
  %592 = vmatpush1.msra.mxu0 0.0
  %593 = vmatprep.subr.mxu0 0.0
  %594 = vmatpush1.msra.mxu0 0.0
  %595 = vmatprep.subr.mxu0 0.0
  %596 = vmatpush1.msra.mxu0 0.0
  %597 = vmatprep.subr.mxu0 0.0
  %598 = vmatpush1.msra.mxu0 0.0
  %599 = vmatprep.subr.mxu0 0.0
  %600 = vmatpush1.msra.mxu0 %v154
  %601 = vmatprep.subr.mxu0 0.0
  %602 = vmatpush1.msra.mxu0 %v153
  %603 = vmatprep.subr.mxu0 0.0
  %604 = vmatpush1.msra.mxu0 %v152
  %605 = vmatprep.subr.mxu0 0.0
  %606 = vmatpush1.msra.mxu0 %v151
  %607 = vmatprep.subr.mxu0 0.0
  %608 = vmatpush1.msra.mxu0 %v150
  %609 = vmatprep.subr.mxu0 0.0
  %610 = vmatpush1.msra.mxu0 %v149
  %611 = vmatprep.subr.mxu0 0.0
  %612 = vmatpush1.msra.mxu0 %v148
  %613 = vmatprep.subr.mxu0 0.0
  %614 = vmatpush1.msra.mxu0 %v147
  %615 = vmatprep.subr.mxu0 0.0
  %616 = vmatpush2.msra.mxu0 0.0
  %617 = vmatprep.subr.mxu0 0.0
  %618 = vmatpush2.msra.mxu0 0.0
  %619 = vmatprep.subr.mxu0 0.0
  %620 = vmatpush2.msra.mxu0 0.0
  %621 = vmatprep.subr.mxu0 0.0
  %622 = vmatpush2.msra.mxu0 0.0
  %623 = vmatprep.subr.mxu0 0.0
  %624 = vmatpush2.msra.mxu0 0.0
  %625 = vmatprep.subr.mxu0 0.0
  %626 = vmatpush2.msra.mxu0 0.0
  %627 = vmatprep.subr.mxu0 0.0
  %628 = vmatpush2.msra.mxu0 0.0
  %629 = vmatprep.subr.mxu0 0.0
  %630 = vmatpush2.msra.mxu0 0.0
  %631 = vmatprep.subr.mxu0 0.0
  %632 = vmatpush2.msra.mxu0 0.0
  %633 = vmatprep.subr.mxu0 0.0
  %634 = vmatpush2.msra.mxu0 0.0
  %635 = vmatprep.subr.mxu0 0.0
  %636 = vmatpush2.msra.mxu0 0.0
  %637 = vmatprep.subr.mxu0 0.0
  %638 = vmatpush2.msra.mxu0 0.0
  %639 = vmatprep.subr.mxu0 0.0
  %640 = vmatpush2.msra.mxu0 0.0
  %641 = vmatprep.subr.mxu0 0.0
  %642 = vmatpush2.msra.mxu0 0.0
  %643 = vmatprep.subr.mxu0 0.0
  %644 = vmatpush2.msra.mxu0 0.0
  %645 = vmatprep.subr.mxu0 0.0
  %646 = vmatpush2.msra.mxu0 0.0
  %647 = vmatprep.mubr.f32.mxu0 0.0
  %648 = vmatmul.mubr.f32.gmra.mxu0 %v581
  %v649 = vpop.f32.mrf.mxu0
  %v650 = vadd.f32 %v160, %v649
  %v651 = vpop.f32.mrf.mxu0
  %652 = vdwg.mxu0
  %v653 = vxor.u32 %v650, 2147483648
  %v654 = vmul.f32 %v653, 1.442695
  %v655 = vpow.pop %v654
  %v656 = vadd.f32 %v655, 1.0
  %v657 = vrcp.pop %v656
  %v658 = vmul.f32 1.0, %v657
  %v659 = vtanh.pop %v650
  %v660 = vmul.f32 %v658, %v461
  %662 = vrot.lane.b32.xlu0 %v659, 96
  %v663 = vpop.permute.xlu0 %662
  %v665 = vmul.f32 %v658, %v663
  %667 = vrot.lane.b32.xlu0 %v665, 96
  %v668 = vpop.permute.xlu0 %667
  %v670 = vadd.f32 %v660, %v668
  %v671 = vtanh.pop %v670
  %673 = vrot.lane.b32.xlu0 %v671, 96
  %v674 = vpop.permute.xlu0 %673
  %v676 = vmul.f32 %v658, %v674
  %s677 = scalar_lea.vmem %s0, 24
  %v678 = vld [vmem:[%s677] sm:$0xff]
  %679 = vrot.lane.b32.xlu0 %v570, 64
  %v680 = vpop.permute.xlu0 %679
  %v682 = vsel %vm27, %v678, %v680
  %v684 = vsel %vm44, %v682, 0
  %686 = vmatprep.subr.mxu0 0.0
  %687 = vmatpush1.msra.mxu0 0.0
  %688 = vmatprep.subr.mxu0 0.0
  %689 = vmatpush1.msra.mxu0 0.0
  %690 = vmatprep.subr.mxu0 0.0
  %691 = vmatpush1.msra.mxu0 0.0
  %692 = vmatprep.subr.mxu0 0.0
  %693 = vmatpush1.msra.mxu0 0.0
  %694 = vmatprep.subr.mxu0 0.0
  %695 = vmatpush1.msra.mxu0 0.0
  %696 = vmatprep.subr.mxu0 0.0
  %697 = vmatpush1.msra.mxu0 0.0
  %698 = vmatprep.subr.mxu0 0.0
  %699 = vmatpush1.msra.mxu0 0.0
  %700 = vmatprep.subr.mxu0 0.0
  %701 = vmatpush1.msra.mxu0 0.0
  %702 = vmatprep.subr.mxu0 0.0
  %703 = vmatpush1.msra.mxu0 %v36
  %704 = vmatprep.subr.mxu0 0.0
  %705 = vmatpush1.msra.mxu0 %v35
  %706 = vmatprep.subr.mxu0 0.0
  %707 = vmatpush1.msra.mxu0 %v34
  %708 = vmatprep.subr.mxu0 0.0
  %709 = vmatpush1.msra.mxu0 %v33
  %710 = vmatprep.subr.mxu0 0.0
  %711 = vmatpush1.msra.mxu0 %v32
  %712 = vmatprep.subr.mxu0 0.0
  %713 = vmatpush1.msra.mxu0 %v31
  %714 = vmatprep.subr.mxu0 0.0
  %715 = vmatpush1.msra.mxu0 %v30
  %716 = vmatprep.subr.mxu0 0.0
  %717 = vmatpush1.msra.mxu0 %v29
  %718 = vmatprep.subr.mxu0 0.0
  %719 = vmatpush2.msra.mxu0 0.0
  %720 = vmatprep.subr.mxu0 0.0
  %721 = vmatpush2.msra.mxu0 0.0
  %722 = vmatprep.subr.mxu0 0.0
  %723 = vmatpush2.msra.mxu0 0.0
  %724 = vmatprep.subr.mxu0 0.0
  %725 = vmatpush2.msra.mxu0 0.0
  %726 = vmatprep.subr.mxu0 0.0
  %727 = vmatpush2.msra.mxu0 0.0
  %728 = vmatprep.subr.mxu0 0.0
  %729 = vmatpush2.msra.mxu0 0.0
  %730 = vmatprep.subr.mxu0 0.0
  %731 = vmatpush2.msra.mxu0 0.0
  %732 = vmatprep.subr.mxu0 0.0
  %733 = vmatpush2.msra.mxu0 0.0
  %734 = vmatprep.subr.mxu0 0.0
  %735 = vmatpush2.msra.mxu0 0.0
  %736 = vmatprep.subr.mxu0 0.0
  %737 = vmatpush2.msra.mxu0 0.0
  %738 = vmatprep.subr.mxu0 0.0
  %739 = vmatpush2.msra.mxu0 0.0
  %740 = vmatprep.subr.mxu0 0.0
  %741 = vmatpush2.msra.mxu0 0.0
  %742 = vmatprep.subr.mxu0 0.0
  %743 = vmatpush2.msra.mxu0 0.0
  %744 = vmatprep.subr.mxu0 0.0
  %745 = vmatpush2.msra.mxu0 0.0
  %746 = vmatprep.subr.mxu0 0.0
  %747 = vmatpush2.msra.mxu0 0.0
  %748 = vmatprep.subr.mxu0 0.0
  %749 = vmatpush2.msra.mxu0 0.0
  %750 = vmatprep.mubr.f32.mxu0 0.0
  %751 = vmatmul.mubr.f32.gmra.mxu0 %v684
  %v752 = vpop.f32.mrf.mxu0
  %v753 = vadd.f32 %v42, %v752
  %v754 = vpop.f32.mrf.mxu0
  %755 = vdwg.mxu0
  %v756 = vxor.u32 %v753, 2147483648
  %v757 = vmul.f32 %v756, 1.442695
  %v758 = vpow.pop %v757
  %v759 = vadd.f32 %v758, 1.0
  %v760 = vrcp.pop %v759
  %v761 = vmul.f32 1.0, %v760
  %v762 = vtanh.pop %v753
  %v763 = vmul.f32 %v761, %v564
  %765 = vrot.lane.b32.xlu0 %v762, 96
  %v766 = vpop.permute.xlu0 %765
  %v768 = vmul.f32 %v761, %v766
  %770 = vrot.lane.b32.xlu0 %v768, 96
  %v771 = vpop.permute.xlu0 %770
  %v773 = vadd.f32 %v763, %v771
  %v774 = vtanh.pop %v773
  %776 = vrot.lane.b32.xlu0 %v774, 96
  %v777 = vpop.permute.xlu0 %776
  %v779 = vmul.f32 %v761, %v777
  %781 = vrot.lane.b32.xlu0 %v779, 32
  %v782 = vpop.permute.xlu0 %781
  %785 = vrot.lane.b32.xlu0 %v676, 64
  %v786 = vpop.permute.xlu0 %785
  %v788 = vsel %vm27, %v782, %v786
  %v790 = vsel %vm44, %v788, 0
  %792 = vmatprep.subr.mxu0 0.0
  %793 = vmatpush1.msra.mxu0 0.0
  %794 = vmatprep.subr.mxu0 0.0
  %795 = vmatpush1.msra.mxu0 0.0
  %796 = vmatprep.subr.mxu0 0.0
  %797 = vmatpush1.msra.mxu0 0.0
  %798 = vmatprep.subr.mxu0 0.0
  %799 = vmatpush1.msra.mxu0 0.0
  %800 = vmatprep.subr.mxu0 0.0
  %801 = vmatpush1.msra.mxu0 0.0
  %802 = vmatprep.subr.mxu0 0.0
  %803 = vmatpush1.msra.mxu0 0.0
  %804 = vmatprep.subr.mxu0 0.0
  %805 = vmatpush1.msra.mxu0 0.0
  %806 = vmatprep.subr.mxu0 0.0
  %807 = vmatpush1.msra.mxu0 0.0
  %808 = vmatprep.subr.mxu0 0.0
  %809 = vmatpush1.msra.mxu0 %v154
  %810 = vmatprep.subr.mxu0 0.0
  %811 = vmatpush1.msra.mxu0 %v153
  %812 = vmatprep.subr.mxu0 0.0
  %813 = vmatpush1.msra.mxu0 %v152
  %814 = vmatprep.subr.mxu0 0.0
  %815 = vmatpush1.msra.mxu0 %v151
  %816 = vmatprep.subr.mxu0 0.0
  %817 = vmatpush1.msra.mxu0 %v150
  %818 = vmatprep.subr.mxu0 0.0
  %819 = vmatpush1.msra.mxu0 %v149
  %820 = vmatprep.subr.mxu0 0.0
  %821 = vmatpush1.msra.mxu0 %v148
  %822 = vmatprep.subr.mxu0 0.0
  %823 = vmatpush1.msra.mxu0 %v147
  %824 = vmatprep.subr.mxu0 0.0
  %825 = vmatpush2.msra.mxu0 0.0
  %826 = vmatprep.subr.mxu0 0.0
  %827 = vmatpush2.msra.mxu0 0.0
  %828 = vmatprep.subr.mxu0 0.0
  %829 = vmatpush2.msra.mxu0 0.0
  %830 = vmatprep.subr.mxu0 0.0
  %831 = vmatpush2.msra.mxu0 0.0
  %832 = vmatprep.subr.mxu0 0.0
  %833 = vmatpush2.msra.mxu0 0.0
  %834 = vmatprep.subr.mxu0 0.0
  %835 = vmatpush2.msra.mxu0 0.0
  %836 = vmatprep.subr.mxu0 0.0
  %837 = vmatpush2.msra.mxu0 0.0
  %838 = vmatprep.subr.mxu0 0.0
  %839 = vmatpush2.msra.mxu0 0.0
  %840 = vmatprep.subr.mxu0 0.0
  %841 = vmatpush2.msra.mxu0 0.0
  %842 = vmatprep.subr.mxu0 0.0
  %843 = vmatpush2.msra.mxu0 0.0
  %844 = vmatprep.subr.mxu0 0.0
  %845 = vmatpush2.msra.mxu0 0.0
  %846 = vmatprep.subr.mxu0 0.0
  %847 = vmatpush2.msra.mxu0 0.0
  %848 = vmatprep.subr.mxu0 0.0
  %849 = vmatpush2.msra.mxu0 0.0
  %850 = vmatprep.subr.mxu0 0.0
  %851 = vmatpush2.msra.mxu0 0.0
  %852 = vmatprep.subr.mxu0 0.0
  %853 = vmatpush2.msra.mxu0 0.0
  %854 = vmatprep.subr.mxu0 0.0
  %855 = vmatpush2.msra.mxu0 0.0
  %856 = vmatprep.mubr.f32.mxu0 0.0
  %857 = vmatmul.mubr.f32.gmra.mxu0 %v790
  %v858 = vpop.f32.mrf.mxu0
  %v859 = vadd.f32 %v160, %v858
  %v860 = vpop.f32.mrf.mxu0
  %861 = vdwg.mxu0
  %v862 = vxor.u32 %v859, 2147483648
  %v863 = vmul.f32 %v862, 1.442695
  %v864 = vpow.pop %v863
  %v865 = vadd.f32 %v864, 1.0
  %v866 = vrcp.pop %v865
  %v867 = vmul.f32 1.0, %v866
  %v868 = vtanh.pop %v859
  %v869 = vmul.f32 %v867, %v670
  %871 = vrot.lane.b32.xlu0 %v868, 96
  %v872 = vpop.permute.xlu0 %871
  %v874 = vmul.f32 %v867, %v872
  %876 = vrot.lane.b32.xlu0 %v874, 96
  %v877 = vpop.permute.xlu0 %876
  %v879 = vadd.f32 %v869, %v877
  %v880 = vtanh.pop %v879
  %882 = vrot.lane.b32.xlu0 %v880, 96
  %v883 = vpop.permute.xlu0 %882
  %v885 = vmul.f32 %v867, %v883
  %v886 = vld [vmem:[%s5] sm:$0xff]
  %v887 = vld [vmem:[%s5 + $0x8] sm:$0xff]
  %v888 = vld [vmem:[%s5 + $0x10] sm:$0xff]
  %v889 = vld [vmem:[%s5 + $0x18] sm:$0xff]
  %v890 = vld [vmem:[%s6] sm:$0x1]
  %v892 = vlaneseq
  %v893 = vshrl.u32 %v892, 7
  %v894 = vsub.s32 0, %v893
  %v895 = vrot.slane %v890, %v894
  %898 = vrot.lane.b32.xlu0 %v885, 32
  %v899 = vpop.permute.xlu0 %898
  %v900 = vsel %vm27, %v899, 0
  %902 = vmatprep.subr.mxu0 0.0
  %903 = vmatpush1.msra.mxu0 0.0
  %904 = vmatprep.subr.mxu0 0.0
  %905 = vmatpush1.msra.mxu0 0.0
  %906 = vmatprep.subr.mxu0 0.0
  %907 = vmatpush1.msra.mxu0 0.0
  %908 = vmatprep.subr.mxu0 0.0
  %909 = vmatpush1.msra.mxu0 0.0
  %910 = vmatprep.subr.mxu0 0.0
  %911 = vmatpush1.msra.mxu0 0.0
  %912 = vmatprep.subr.mxu0 0.0
  %913 = vmatpush1.msra.mxu0 0.0
  %914 = vmatprep.subr.mxu0 0.0
  %915 = vmatpush1.msra.mxu0 0.0
  %916 = vmatprep.subr.mxu0 0.0
  %917 = vmatpush1.msra.mxu0 0.0
  %918 = vmatprep.subr.mxu0 0.0
  %919 = vmatpush1.msra.mxu0 0.0
  %920 = vmatprep.subr.mxu0 0.0
  %921 = vmatpush1.msra.mxu0 0.0
  %922 = vmatprep.subr.mxu0 0.0
  %923 = vmatpush1.msra.mxu0 0.0
  %924 = vmatprep.subr.mxu0 0.0
  %925 = vmatpush1.msra.mxu0 0.0
  %926 = vmatprep.subr.mxu0 0.0
  %927 = vmatpush1.msra.mxu0 %v889
  %928 = vmatprep.subr.mxu0 0.0
  %929 = vmatpush1.msra.mxu0 %v888
  %930 = vmatprep.subr.mxu0 0.0
  %931 = vmatpush1.msra.mxu0 %v887
  %932 = vmatprep.subr.mxu0 0.0
  %933 = vmatpush1.msra.mxu0 %v886
  %934 = vmatprep.subr.mxu0 0.0
  %935 = vmatpush2.msra.mxu0 0.0
  %936 = vmatprep.subr.mxu0 0.0
  %937 = vmatpush2.msra.mxu0 0.0
  %938 = vmatprep.subr.mxu0 0.0
  %939 = vmatpush2.msra.mxu0 0.0
  %940 = vmatprep.subr.mxu0 0.0
  %941 = vmatpush2.msra.mxu0 0.0
  %942 = vmatprep.subr.mxu0 0.0
  %943 = vmatpush2.msra.mxu0 0.0
  %944 = vmatprep.subr.mxu0 0.0
  %945 = vmatpush2.msra.mxu0 0.0
  %946 = vmatprep.subr.mxu0 0.0
  %947 = vmatpush2.msra.mxu0 0.0
  %948 = vmatprep.subr.mxu0 0.0
  %949 = vmatpush2.msra.mxu0 0.0
  %950 = vmatprep.subr.mxu0 0.0
  %951 = vmatpush2.msra.mxu0 0.0
  %952 = vmatprep.subr.mxu0 0.0
  %953 = vmatpush2.msra.mxu0 0.0
  %954 = vmatprep.subr.mxu0 0.0
  %955 = vmatpush2.msra.mxu0 0.0
  %956 = vmatprep.subr.mxu0 0.0
  %957 = vmatpush2.msra.mxu0 0.0
  %958 = vmatprep.subr.mxu0 0.0
  %959 = vmatpush2.msra.mxu0 0.0
  %960 = vmatprep.subr.mxu0 0.0
  %961 = vmatpush2.msra.mxu0 0.0
  %962 = vmatprep.subr.mxu0 0.0
  %963 = vmatpush2.msra.mxu0 0.0
  %964 = vmatprep.subr.mxu0 0.0
  %965 = vmatpush2.msra.mxu0 0.0
  %966 = vmatprep.mubr.f32.mxu0 0.0
  %967 = vmatmul.mubr.f32.gmra.mxu0 %v900
  %v968 = vpop.f32.mrf.mxu0
  %v969 = vadd.f32 %v895, %v968
  %v970 = vpop.f32.mrf.mxu0
  %971 = vdwg.mxu0
  %vm972 = vcmask 48128
  %973 = vst.msk [vmem:[%s7] sm:$0xff] %vm972, %v969
  // Predicated region
  $region30: #{lstm_scratch_forward.7} parent=0 // pred_check
    _
  $region31: #{lstm_scratch_forward.7} parent=0 // pred_check_branch
    %975 = sbr.rel (0) target = $region33
  $region32: #{lstm_scratch_forward.7} parent=0 // pred_region
    _
  $region33: #{lstm_scratch_forward.7} parent=0 // pred_fallthru
    _
  // Predicated region
  $region34: #{lstm_scratch_forward.7} parent=0 // pred_check
    _
  $region35: #{lstm_scratch_forward.7} parent=0 // pred_check_branch
    %977 = sbr.rel (0) target = $region37
  $region36: #{lstm_scratch_forward.7} parent=0 // pred_region
    _
  $region37: #{lstm_scratch_forward.7} parent=0 // pred_fallthru
    _

</llo_original>
